<compile_context>
chip_gen: v6e
topology: v6e:2x2x1
jax: 0.10.0
libtpu: 0.0.40
codegen_flags: <defaults>
</compile_context>

<pallas_src>
import functools

import jax
import jax.numpy as jnp
from jax import lax
from jax.experimental import pallas as pl
from jax.experimental.pallas import tpu as pltpu


def _double_conv_kernel(x_ref, w1_ref, b1_ref, w2_ref, b2_ref, o_ref,
                        xs_ref, hs_ref, *, D, C, HW):
    # x_ref : (1, D*C, HW)  one batch element, rows ordered d-major / c-minor
    # w*_ref: (C, 3*C)      tap-fused weights, W[co, k*C + ci]
    # b*_ref: (C, 1)
    # o_ref : (1, D*C, HW)
    # xs_ref / hs_ref: ((D+2)*C, HW) f32 VMEM scratch with a C-row zero halo on each side.
    zero = jnp.zeros((C, HW), jnp.float32)

    xs_ref[0:C, :] = zero                               # halo (d = -1)
    xs_ref[(D + 1) * C:(D + 2) * C, :] = zero           # halo (d = D)
    xs_ref[C:(D + 1) * C, :] = x_ref[0].astype(jnp.float32)

    hs_ref[0:C, :] = zero
    hs_ref[(D + 1) * C:(D + 2) * C, :] = zero

    # ---- conv1 + ReLU: intermediate activation never leaves VMEM ----
    w1 = w1_ref[...]
    b1 = jnp.broadcast_to(b1_ref[...], (C, HW))         # hoisted out of the loop
    for d in range(D):                                   # static unrolled loop (D is small)
        win = xs_ref[d * C:(d + 3) * C, :]               # (3C, HW) = [x[d-1]; x[d]; x[d+1]]
        acc = jnp.dot(w1, win, preferred_element_type=jnp.float32) + b1
        hs_ref[(d + 1) * C:(d + 2) * C, :] = jnp.maximum(acc, 0.0)

    # ---- conv2 ----
    w2 = w2_ref[...]
    b2 = jnp.broadcast_to(b2_ref[...], (C, HW))
    for d in range(D):
        win = hs_ref[d * C:(d + 3) * C, :]
        acc = jnp.dot(w2, win, preferred_element_type=jnp.float32) + b2
        o_ref[0, d * C:(d + 1) * C, :] = acc.astype(o_ref.dtype)


def double_conv3d_channel_dim(x_ncdhw, w1, b1, w2, b2):
    """x_ncdhw: (N, n_feats, channels, H, W). w*: (Co, Ci, 3) torch-style, b*: (Co,)."""
    N, C, D, H, W = x_ncdhw.shape
    HW = H * W

    # relayout to (N, D*C, HW): d-major rows, HW lane-dense.
    # TODO(synk): in a full model keep activations in this layout across adjacent ops so these
    # two XLA transpose passes (in/out) disappear as well.
    x_r = jnp.transpose(x_ncdhw, (0, 2, 1, 3, 4)).reshape(N, D * C, HW)
    w1f = jnp.transpose(w1, (0, 2, 1)).reshape(C, 3 * C)     # W[co, k*C + ci]
    w2f = jnp.transpose(w2, (0, 2, 1)).reshape(C, 3 * C)

    out = pl.pallas_call(
        functools.partial(_double_conv_kernel, D=D, C=C, HW=HW),
        out_shape=jax.ShapeDtypeStruct((N, D * C, HW), x_ncdhw.dtype),
        grid_spec=pltpu.PrefetchScalarGridSpec(
            num_scalar_prefetch=0,
            grid=(N,),
            in_specs=[
                pl.BlockSpec((1, D * C, HW), lambda n: (n, 0, 0)),   # whole-D slab per batch
                pl.BlockSpec((C, 3 * C), lambda n: (0, 0)),          # conv1 weights (tap-fused)
                pl.BlockSpec((C, 1), lambda n: (0, 0)),              # conv1 bias
                pl.BlockSpec((C, 3 * C), lambda n: (0, 0)),          # conv2 weights
                pl.BlockSpec((C, 1), lambda n: (0, 0)),              # conv2 bias
            ],
            out_specs=pl.BlockSpec((1, D * C, HW), lambda n: (n, 0, 0)),
            scratch_shapes=[
                pltpu.VMEM(((D + 2) * C, HW), jnp.float32),          # padded input
                pltpu.VMEM(((D + 2) * C, HW), jnp.float32),          # padded intermediate h
            ],
        ),
        compiler_params=pltpu.CompilerParams(dimension_semantics=("parallel",)),
    )(x_r, w1f, b1.reshape(C, 1), w2f, b2.reshape(C, 1))

    return jnp.transpose(out.reshape(N, D, C, H, W), (0, 2, 1, 3, 4))


if __name__ == "__main__":
    # small shapes: batch=2, n_feats=32 (conv channels), channels=8 (spectral D), spatial 16x16
    N, n_feats, D, H, W = 2, 32, 8, 16, 16

    key = jax.random.PRNGKey(0)
    kx, kw1, kb1, kw2, kb2 = jax.random.split(key, 5)
    x = jax.random.normal(kx, (N, n_feats, D, H, W), jnp.float32)

    bound = 1.0 / (n_feats * 3) ** 0.5  # PyTorch default conv init bound (fan_in = Ci*3*1*1)
    w1 = jax.random.uniform(kw1, (n_feats, n_feats, 3), jnp.float32, -bound, bound)
    b1 = jax.random.uniform(kb1, (n_feats,), jnp.float32, -bound, bound)
    w2 = jax.random.uniform(kw2, (n_feats, n_feats, 3), jnp.float32, -bound, bound)
    b2 = jax.random.uniform(kb2, (n_feats,), jnp.float32, -bound, bound)

    out = jax.block_until_ready(double_conv3d_channel_dim(x, w1, b1, w2, b2))

    # pure-JAX reference (same semantics as the two nn.Conv3d + ReLU)
    def ref_conv(xi, w, b):
        y = lax.conv_general_dilated(
            xi, w[:, :, :, None, None], (1, 1, 1),
            ((1, 1), (0, 0), (0, 0)),
            dimension_numbers=("NCDHW", "OIDHW", "NCDHW"))
        return y + b[None, :, None, None, None]

    ref = ref_conv(jnp.maximum(ref_conv(x, w1, b1), 0.0), w2, b2)
    assert out.shape == (N, n_feats, D, H, W)
    assert jnp.allclose(out, ref, rtol=2e-2, atol=2e-2), float(jnp.max(jnp.abs(out - ref)))
    print("KERNEL_OK")
</pallas_src>

<mosaic_0001>
module attributes {stable_mosaic.version = 11 : i64} {
  func.func @_double_conv_kernel(%arg0: i32, %arg1: memref<1x256x256xf32, #tpu.memory_space<vmem>>, %arg2: memref<32x96xf32, #tpu.memory_space<vmem>>, %arg3: memref<32x1xf32, #tpu.memory_space<vmem>>, %arg4: memref<32x96xf32, #tpu.memory_space<vmem>>, %arg5: memref<32x1xf32, #tpu.memory_space<vmem>>, %arg6: memref<1x256x256xf32, #tpu.memory_space<vmem>>, %arg7: memref<320x256xf32, #tpu.memory_space<vmem>>, %arg8: memref<320x256xf32, #tpu.memory_space<vmem>>) attributes {dimension_semantics = [#tpu.dimension_semantics<parallel>], iteration_bounds = array<i64: 2>, scalar_prefetch = 0 : i64, scratch_operands = 2 : i64, tpu.core_type = #tpu.core_type<tc>, window_params = [{transform_indices = @transform_0, window_bounds = array<i64: 1, 256, 256>}, {pipeline_mode = #tpu.pipeline_mode<synchronous>, transform_indices = @transform_1, window_bounds = array<i64: 32, 96>}, {pipeline_mode = #tpu.pipeline_mode<synchronous>, transform_indices = @transform_2, window_bounds = array<i64: 32, 1>}, {pipeline_mode = #tpu.pipeline_mode<synchronous>, transform_indices = @transform_3, window_bounds = array<i64: 32, 96>}, {pipeline_mode = #tpu.pipeline_mode<synchronous>, transform_indices = @transform_4, window_bounds = array<i64: 32, 1>}, {transform_indices = @transform_5, window_bounds = array<i64: 1, 256, 256>}]} {
    %cst = arith.constant 0.000000e+00 : f32
    %0 = vector.broadcast %cst : f32 to vector<32x256xf32>
    %c0 = arith.constant 0 : index
    %c0_0 = arith.constant 0 : index
    %1 = vector.load %arg7[%c0, %c0_0] : memref<320x256xf32, #tpu.memory_space<vmem>>, vector<32x256xf32>
    tpu.vector_store %arg7[%c0, %c0_0], %0 {strides = array<i32>} : memref<320x256xf32, #tpu.memory_space<vmem>>, vector<32x256xf32>,
    %c288 = arith.constant 288 : index
    %c0_1 = arith.constant 0 : index
    %2 = vector.load %arg7[%c288, %c0_1] : memref<320x256xf32, #tpu.memory_space<vmem>>, vector<32x256xf32>
    tpu.vector_store %arg7[%c288, %c0_1], %0 {strides = array<i32>} : memref<320x256xf32, #tpu.memory_space<vmem>>, vector<32x256xf32>,
    %c0_2 = arith.constant 0 : index
    %c0_3 = arith.constant 0 : index
    %c0_4 = arith.constant 0 : index
    %3 = vector.load %arg1[%c0_2, %c0_3, %c0_4] : memref<1x256x256xf32, #tpu.memory_space<vmem>>, vector<1x256x256xf32>
    %4 = vector.shape_cast %3 : vector<1x256x256xf32> to vector<256x256xf32>
    %c32 = arith.constant 32 : index
    %c0_5 = arith.constant 0 : index
    %5 = vector.load %arg7[%c32, %c0_5] : memref<320x256xf32, #tpu.memory_space<vmem>>, vector<256x256xf32>
    tpu.vector_store %arg7[%c32, %c0_5], %4 {strides = array<i32>} : memref<320x256xf32, #tpu.memory_space<vmem>>, vector<256x256xf32>,
    %c0_6 = arith.constant 0 : index
    %c0_7 = arith.constant 0 : index
    %6 = vector.load %arg8[%c0_6, %c0_7] : memref<320x256xf32, #tpu.memory_space<vmem>>, vector<32x256xf32>
    tpu.vector_store %arg8[%c0_6, %c0_7], %0 {strides = array<i32>} : memref<320x256xf32, #tpu.memory_space<vmem>>, vector<32x256xf32>,
    %c288_8 = arith.constant 288 : index
    %c0_9 = arith.constant 0 : index
    %7 = vector.load %arg8[%c288_8, %c0_9] : memref<320x256xf32, #tpu.memory_space<vmem>>, vector<32x256xf32>
    tpu.vector_store %arg8[%c288_8, %c0_9], %0 {strides = array<i32>} : memref<320x256xf32, #tpu.memory_space<vmem>>, vector<32x256xf32>,
    %c0_10 = arith.constant 0 : index
    %c0_11 = arith.constant 0 : index
    %8 = vector.load %arg2[%c0_10, %c0_11] : memref<32x96xf32, #tpu.memory_space<vmem>>, vector<32x96xf32>
    %c0_12 = arith.constant 0 : index
    %c0_13 = arith.constant 0 : index
    %9 = vector.load %arg3[%c0_12, %c0_13] : memref<32x1xf32, #tpu.memory_space<vmem>>, vector<32x1xf32>
    %10 = vector.shape_cast %9 : vector<32x1xf32> to vector<32x1xf32>
    %11 = vector.broadcast %10 : vector<32x1xf32> to vector<32x256xf32>
    %c0_14 = arith.constant 0 : index
    %c0_15 = arith.constant 0 : index
    %12 = vector.load %arg7[%c0_14, %c0_15] : memref<320x256xf32, #tpu.memory_space<vmem>>, vector<96x256xf32>
    %cst_16 = arith.constant dense<0.000000e+00> : vector<32x256xf32>
    %13 = tpu.matmul %8, %12, %cst_16 {dimension_numbers = #tpu.dot_dimension_numbers<[1], [0], [0], [1], [0, 0, 1, 1], [], []>} : vector<32x96xf32>, vector<96x256xf32>, vector<32x256xf32> -> vector<32x256xf32>
    %14 = arith.addf %13, %11 : vector<32x256xf32>
    %cst_17 = arith.constant 0.000000e+00 : f32
    %15 = vector.broadcast %cst_17 : f32 to vector<32x256xf32>
    %16 = arith.maximumf %14, %15 : vector<32x256xf32>
    %c32_18 = arith.constant 32 : index
    %c0_19 = arith.constant 0 : index
    %17 = vector.load %arg8[%c32_18, %c0_19] : memref<320x256xf32, #tpu.memory_space<vmem>>, vector<32x256xf32>
    tpu.vector_store %arg8[%c32_18, %c0_19], %16 {strides = array<i32>} : memref<320x256xf32, #tpu.memory_space<vmem>>, vector<32x256xf32>,
    %c32_20 = arith.constant 32 : index
    %c0_21 = arith.constant 0 : index
    %18 = vector.load %arg7[%c32_20, %c0_21] : memref<320x256xf32, #tpu.memory_space<vmem>>, vector<96x256xf32>
    %cst_22 = arith.constant dense<0.000000e+00> : vector<32x256xf32>
    %19 = tpu.matmul %8, %18, %cst_22 {dimension_numbers = #tpu.dot_dimension_numbers<[1], [0], [0], [1], [0, 0, 1, 1], [], []>} : vector<32x96xf32>, vector<96x256xf32>, vector<32x256xf32> -> vector<32x256xf32>
    %20 = arith.addf %19, %11 : vector<32x256xf32>
    %cst_23 = arith.constant 0.000000e+00 : f32
    %21 = vector.broadcast %cst_23 : f32 to vector<32x256xf32>
    %22 = arith.maximumf %20, %21 : vector<32x256xf32>
    %c64 = arith.constant 64 : index
    %c0_24 = arith.constant 0 : index
    %23 = vector.load %arg8[%c64, %c0_24] : memref<320x256xf32, #tpu.memory_space<vmem>>, vector<32x256xf32>
    tpu.vector_store %arg8[%c64, %c0_24], %22 {strides = array<i32>} : memref<320x256xf32, #tpu.memory_space<vmem>>, vector<32x256xf32>,
    %c64_25 = arith.constant 64 : index
    %c0_26 = arith.constant 0 : index
    %24 = vector.load %arg7[%c64_25, %c0_26] : memref<320x256xf32, #tpu.memory_space<vmem>>, vector<96x256xf32>
    %cst_27 = arith.constant dense<0.000000e+00> : vector<32x256xf32>
    %25 = tpu.matmul %8, %24, %cst_27 {dimension_numbers = #tpu.dot_dimension_numbers<[1], [0], [0], [1], [0, 0, 1, 1], [], []>} : vector<32x96xf32>, vector<96x256xf32>, vector<32x256xf32> -> vector<32x256xf32>
    %26 = arith.addf %25, %11 : vector<32x256xf32>
    %cst_28 = arith.constant 0.000000e+00 : f32
    %27 = vector.broadcast %cst_28 : f32 to vector<32x256xf32>
    %28 = arith.maximumf %26, %27 : vector<32x256xf32>
    %c96 = arith.constant 96 : index
    %c0_29 = arith.constant 0 : index
    %29 = vector.load %arg8[%c96, %c0_29] : memref<320x256xf32, #tpu.memory_space<vmem>>, vector<32x256xf32>
    tpu.vector_store %arg8[%c96, %c0_29], %28 {strides = array<i32>} : memref<320x256xf32, #tpu.memory_space<vmem>>, vector<32x256xf32>,
    %c96_30 = arith.constant 96 : index
    %c0_31 = arith.constant 0 : index
    %30 = vector.load %arg7[%c96_30, %c0_31] : memref<320x256xf32, #tpu.memory_space<vmem>>, vector<96x256xf32>
    %cst_32 = arith.constant dense<0.000000e+00> : vector<32x256xf32>
    %31 = tpu.matmul %8, %30, %cst_32 {dimension_numbers = #tpu.dot_dimension_numbers<[1], [0], [0], [1], [0, 0, 1, 1], [], []>} : vector<32x96xf32>, vector<96x256xf32>, vector<32x256xf32> -> vector<32x256xf32>
    %32 = arith.addf %31, %11 : vector<32x256xf32>
    %cst_33 = arith.constant 0.000000e+00 : f32
    %33 = vector.broadcast %cst_33 : f32 to vector<32x256xf32>
    %34 = arith.maximumf %32, %33 : vector<32x256xf32>
    %c128 = arith.constant 128 : index
    %c0_34 = arith.constant 0 : index
    %35 = vector.load %arg8[%c128, %c0_34] : memref<320x256xf32, #tpu.memory_space<vmem>>, vector<32x256xf32>
    tpu.vector_store %arg8[%c128, %c0_34], %34 {strides = array<i32>} : memref<320x256xf32, #tpu.memory_space<vmem>>, vector<32x256xf32>,
    %c128_35 = arith.constant 128 : index
    %c0_36 = arith.constant 0 : index
    %36 = vector.load %arg7[%c128_35, %c0_36] : memref<320x256xf32, #tpu.memory_space<vmem>>, vector<96x256xf32>
    %cst_37 = arith.constant dense<0.000000e+00> : vector<32x256xf32>
    %37 = tpu.matmul %8, %36, %cst_37 {dimension_numbers = #tpu.dot_dimension_numbers<[1], [0], [0], [1], [0, 0, 1, 1], [], []>} : vector<32x96xf32>, vector<96x256xf32>, vector<32x256xf32> -> vector<32x256xf32>
    %38 = arith.addf %37, %11 : vector<32x256xf32>
    %cst_38 = arith.constant 0.000000e+00 : f32
    %39 = vector.broadcast %cst_38 : f32 to vector<32x256xf32>
    %40 = arith.maximumf %38, %39 : vector<32x256xf32>
    %c160 = arith.constant 160 : index
    %c0_39 = arith.constant 0 : index
    %41 = vector.load %arg8[%c160, %c0_39] : memref<320x256xf32, #tpu.memory_space<vmem>>, vector<32x256xf32>
    tpu.vector_store %arg8[%c160, %c0_39], %40 {strides = array<i32>} : memref<320x256xf32, #tpu.memory_space<vmem>>, vector<32x256xf32>,
    %c160_40 = arith.constant 160 : index
    %c0_41 = arith.constant 0 : index
    %42 = vector.load %arg7[%c160_40, %c0_41] : memref<320x256xf32, #tpu.memory_space<vmem>>, vector<96x256xf32>
    %cst_42 = arith.constant dense<0.000000e+00> : vector<32x256xf32>
    %43 = tpu.matmul %8, %42, %cst_42 {dimension_numbers = #tpu.dot_dimension_numbers<[1], [0], [0], [1], [0, 0, 1, 1], [], []>} : vector<32x96xf32>, vector<96x256xf32>, vector<32x256xf32> -> vector<32x256xf32>
    %44 = arith.addf %43, %11 : vector<32x256xf32>
    %cst_43 = arith.constant 0.000000e+00 : f32
    %45 = vector.broadcast %cst_43 : f32 to vector<32x256xf32>
    %46 = arith.maximumf %44, %45 : vector<32x256xf32>
    %c192 = arith.constant 192 : index
    %c0_44 = arith.constant 0 : index
    %47 = vector.load %arg8[%c192, %c0_44] : memref<320x256xf32, #tpu.memory_space<vmem>>, vector<32x256xf32>
    tpu.vector_store %arg8[%c192, %c0_44], %46 {strides = array<i32>} : memref<320x256xf32, #tpu.memory_space<vmem>>, vector<32x256xf32>,
    %c192_45 = arith.constant 192 : index
    %c0_46 = arith.constant 0 : index
    %48 = vector.load %arg7[%c192_45, %c0_46] : memref<320x256xf32, #tpu.memory_space<vmem>>, vector<96x256xf32>
    %cst_47 = arith.constant dense<0.000000e+00> : vector<32x256xf32>
    %49 = tpu.matmul %8, %48, %cst_47 {dimension_numbers = #tpu.dot_dimension_numbers<[1], [0], [0], [1], [0, 0, 1, 1], [], []>} : vector<32x96xf32>, vector<96x256xf32>, vector<32x256xf32> -> vector<32x256xf32>
    %50 = arith.addf %49, %11 : vector<32x256xf32>
    %cst_48 = arith.constant 0.000000e+00 : f32
    %51 = vector.broadcast %cst_48 : f32 to vector<32x256xf32>
    %52 = arith.maximumf %50, %51 : vector<32x256xf32>
    %c224 = arith.constant 224 : index
    %c0_49 = arith.constant 0 : index
    %53 = vector.load %arg8[%c224, %c0_49] : memref<320x256xf32, #tpu.memory_space<vmem>>, vector<32x256xf32>
    tpu.vector_store %arg8[%c224, %c0_49], %52 {strides = array<i32>} : memref<320x256xf32, #tpu.memory_space<vmem>>, vector<32x256xf32>,
    %c224_50 = arith.constant 224 : index
    %c0_51 = arith.constant 0 : index
    %54 = vector.load %arg7[%c224_50, %c0_51] : memref<320x256xf32, #tpu.memory_space<vmem>>, vector<96x256xf32>
    %cst_52 = arith.constant dense<0.000000e+00> : vector<32x256xf32>
    %55 = tpu.matmul %8, %54, %cst_52 {dimension_numbers = #tpu.dot_dimension_numbers<[1], [0], [0], [1], [0, 0, 1, 1], [], []>} : vector<32x96xf32>, vector<96x256xf32>, vector<32x256xf32> -> vector<32x256xf32>
    %56 = arith.addf %55, %11 : vector<32x256xf32>
    %cst_53 = arith.constant 0.000000e+00 : f32
    %57 = vector.broadcast %cst_53 : f32 to vector<32x256xf32>
    %58 = arith.maximumf %56, %57 : vector<32x256xf32>
    %c256 = arith.constant 256 : index
    %c0_54 = arith.constant 0 : index
    %59 = vector.load %arg8[%c256, %c0_54] : memref<320x256xf32, #tpu.memory_space<vmem>>, vector<32x256xf32>
    tpu.vector_store %arg8[%c256, %c0_54], %58 {strides = array<i32>} : memref<320x256xf32, #tpu.memory_space<vmem>>, vector<32x256xf32>,
    %c0_55 = arith.constant 0 : index
    %c0_56 = arith.constant 0 : index
    %60 = vector.load %arg4[%c0_55, %c0_56] : memref<32x96xf32, #tpu.memory_space<vmem>>, vector<32x96xf32>
    %c0_57 = arith.constant 0 : index
    %c0_58 = arith.constant 0 : index
    %61 = vector.load %arg5[%c0_57, %c0_58] : memref<32x1xf32, #tpu.memory_space<vmem>>, vector<32x1xf32>
    %62 = vector.shape_cast %61 : vector<32x1xf32> to vector<32x1xf32>
    %63 = vector.broadcast %62 : vector<32x1xf32> to vector<32x256xf32>
    %c0_59 = arith.constant 0 : index
    %c0_60 = arith.constant 0 : index
    %64 = vector.load %arg8[%c0_59, %c0_60] : memref<320x256xf32, #tpu.memory_space<vmem>>, vector<96x256xf32>
    %cst_61 = arith.constant dense<0.000000e+00> : vector<32x256xf32>
    %65 = tpu.matmul %60, %64, %cst_61 {dimension_numbers = #tpu.dot_dimension_numbers<[1], [0], [0], [1], [0, 0, 1, 1], [], []>} : vector<32x96xf32>, vector<96x256xf32>, vector<32x256xf32> -> vector<32x256xf32>
    %66 = arith.addf %65, %63 : vector<32x256xf32>
    %c0_62 = arith.constant 0 : index
    %c0_63 = arith.constant 0 : index
    %c0_64 = arith.constant 0 : index
    %67 = vector.load %arg6[%c0_62, %c0_63, %c0_64] : memref<1x256x256xf32, #tpu.memory_space<vmem>>, vector<1x32x256xf32>
    %68 = vector.shape_cast %67 : vector<1x32x256xf32> to vector<32x256xf32>
    %69 = vector.shape_cast %66 : vector<32x256xf32> to vector<1x32x256xf32>
    tpu.vector_store %arg6[%c0_62, %c0_63, %c0_64], %69 {strides = array<i32>} : memref<1x256x256xf32, #tpu.memory_space<vmem>>, vector<1x32x256xf32>,
    %c32_65 = arith.constant 32 : index
    %c0_66 = arith.constant 0 : index
    %70 = vector.load %arg8[%c32_65, %c0_66] : memref<320x256xf32, #tpu.memory_space<vmem>>, vector<96x256xf32>
    %cst_67 = arith.constant dense<0.000000e+00> : vector<32x256xf32>
    %71 = tpu.matmul %60, %70, %cst_67 {dimension_numbers = #tpu.dot_dimension_numbers<[1], [0], [0], [1], [0, 0, 1, 1], [], []>} : vector<32x96xf32>, vector<96x256xf32>, vector<32x256xf32> -> vector<32x256xf32>
    %72 = arith.addf %71, %63 : vector<32x256xf32>
    %c0_68 = arith.constant 0 : index
    %c32_69 = arith.constant 32 : index
    %c0_70 = arith.constant 0 : index
    %73 = vector.load %arg6[%c0_68, %c32_69, %c0_70] : memref<1x256x256xf32, #tpu.memory_space<vmem>>, vector<1x32x256xf32>
    %74 = vector.shape_cast %73 : vector<1x32x256xf32> to vector<32x256xf32>
    %75 = vector.shape_cast %72 : vector<32x256xf32> to vector<1x32x256xf32>
    tpu.vector_store %arg6[%c0_68, %c32_69, %c0_70], %75 {strides = array<i32>} : memref<1x256x256xf32, #tpu.memory_space<vmem>>, vector<1x32x256xf32>,
    %c64_71 = arith.constant 64 : index
    %c0_72 = arith.constant 0 : index
    %76 = vector.load %arg8[%c64_71, %c0_72] : memref<320x256xf32, #tpu.memory_space<vmem>>, vector<96x256xf32>
    %cst_73 = arith.constant dense<0.000000e+00> : vector<32x256xf32>
    %77 = tpu.matmul %60, %76, %cst_73 {dimension_numbers = #tpu.dot_dimension_numbers<[1], [0], [0], [1], [0, 0, 1, 1], [], []>} : vector<32x96xf32>, vector<96x256xf32>, vector<32x256xf32> -> vector<32x256xf32>
    %78 = arith.addf %77, %63 : vector<32x256xf32>
    %c0_74 = arith.constant 0 : index
    %c64_75 = arith.constant 64 : index
    %c0_76 = arith.constant 0 : index
    %79 = vector.load %arg6[%c0_74, %c64_75, %c0_76] : memref<1x256x256xf32, #tpu.memory_space<vmem>>, vector<1x32x256xf32>
    %80 = vector.shape_cast %79 : vector<1x32x256xf32> to vector<32x256xf32>
    %81 = vector.shape_cast %78 : vector<32x256xf32> to vector<1x32x256xf32>
    tpu.vector_store %arg6[%c0_74, %c64_75, %c0_76], %81 {strides = array<i32>} : memref<1x256x256xf32, #tpu.memory_space<vmem>>, vector<1x32x256xf32>,
    %c96_77 = arith.constant 96 : index
    %c0_78 = arith.constant 0 : index
    %82 = vector.load %arg8[%c96_77, %c0_78] : memref<320x256xf32, #tpu.memory_space<vmem>>, vector<96x256xf32>
    %cst_79 = arith.constant dense<0.000000e+00> : vector<32x256xf32>
    %83 = tpu.matmul %60, %82, %cst_79 {dimension_numbers = #tpu.dot_dimension_numbers<[1], [0], [0], [1], [0, 0, 1, 1], [], []>} : vector<32x96xf32>, vector<96x256xf32>, vector<32x256xf32> -> vector<32x256xf32>
    %84 = arith.addf %83, %63 : vector<32x256xf32>
    %c0_80 = arith.constant 0 : index
    %c96_81 = arith.constant 96 : index
    %c0_82 = arith.constant 0 : index
    %85 = vector.load %arg6[%c0_80, %c96_81, %c0_82] : memref<1x256x256xf32, #tpu.memory_space<vmem>>, vector<1x32x256xf32>
    %86 = vector.shape_cast %85 : vector<1x32x256xf32> to vector<32x256xf32>
    %87 = vector.shape_cast %84 : vector<32x256xf32> to vector<1x32x256xf32>
    tpu.vector_store %arg6[%c0_80, %c96_81, %c0_82], %87 {strides = array<i32>} : memref<1x256x256xf32, #tpu.memory_space<vmem>>, vector<1x32x256xf32>,
    %c128_83 = arith.constant 128 : index
    %c0_84 = arith.constant 0 : index
    %88 = vector.load %arg8[%c128_83, %c0_84] : memref<320x256xf32, #tpu.memory_space<vmem>>, vector<96x256xf32>
    %cst_85 = arith.constant dense<0.000000e+00> : vector<32x256xf32>
    %89 = tpu.matmul %60, %88, %cst_85 {dimension_numbers = #tpu.dot_dimension_numbers<[1], [0], [0], [1], [0, 0, 1, 1], [], []>} : vector<32x96xf32>, vector<96x256xf32>, vector<32x256xf32> -> vector<32x256xf32>
    %90 = arith.addf %89, %63 : vector<32x256xf32>
    %c0_86 = arith.constant 0 : index
    %c128_87 = arith.constant 128 : index
    %c0_88 = arith.constant 0 : index
    %91 = vector.load %arg6[%c0_86, %c128_87, %c0_88] : memref<1x256x256xf32, #tpu.memory_space<vmem>>, vector<1x32x256xf32>
    %92 = vector.shape_cast %91 : vector<1x32x256xf32> to vector<32x256xf32>
    %93 = vector.shape_cast %90 : vector<32x256xf32> to vector<1x32x256xf32>
    tpu.vector_store %arg6[%c0_86, %c128_87, %c0_88], %93 {strides = array<i32>} : memref<1x256x256xf32, #tpu.memory_space<vmem>>, vector<1x32x256xf32>,
    %c160_89 = arith.constant 160 : index
    %c0_90 = arith.constant 0 : index
    %94 = vector.load %arg8[%c160_89, %c0_90] : memref<320x256xf32, #tpu.memory_space<vmem>>, vector<96x256xf32>
    %cst_91 = arith.constant dense<0.000000e+00> : vector<32x256xf32>
    %95 = tpu.matmul %60, %94, %cst_91 {dimension_numbers = #tpu.dot_dimension_numbers<[1], [0], [0], [1], [0, 0, 1, 1], [], []>} : vector<32x96xf32>, vector<96x256xf32>, vector<32x256xf32> -> vector<32x256xf32>
    %96 = arith.addf %95, %63 : vector<32x256xf32>
    %c0_92 = arith.constant 0 : index
    %c160_93 = arith.constant 160 : index
    %c0_94 = arith.constant 0 : index
    %97 = vector.load %arg6[%c0_92, %c160_93, %c0_94] : memref<1x256x256xf32, #tpu.memory_space<vmem>>, vector<1x32x256xf32>
    %98 = vector.shape_cast %97 : vector<1x32x256xf32> to vector<32x256xf32>
    %99 = vector.shape_cast %96 : vector<32x256xf32> to vector<1x32x256xf32>
    tpu.vector_store %arg6[%c0_92, %c160_93, %c0_94], %99 {strides = array<i32>} : memref<1x256x256xf32, #tpu.memory_space<vmem>>, vector<1x32x256xf32>,
    %c192_95 = arith.constant 192 : index
    %c0_96 = arith.constant 0 : index
    %100 = vector.load %arg8[%c192_95, %c0_96] : memref<320x256xf32, #tpu.memory_space<vmem>>, vector<96x256xf32>
    %cst_97 = arith.constant dense<0.000000e+00> : vector<32x256xf32>
    %101 = tpu.matmul %60, %100, %cst_97 {dimension_numbers = #tpu.dot_dimension_numbers<[1], [0], [0], [1], [0, 0, 1, 1], [], []>} : vector<32x96xf32>, vector<96x256xf32>, vector<32x256xf32> -> vector<32x256xf32>
    %102 = arith.addf %101, %63 : vector<32x256xf32>
    %c0_98 = arith.constant 0 : index
    %c192_99 = arith.constant 192 : index
    %c0_100 = arith.constant 0 : index
    %103 = vector.load %arg6[%c0_98, %c192_99, %c0_100] : memref<1x256x256xf32, #tpu.memory_space<vmem>>, vector<1x32x256xf32>
    %104 = vector.shape_cast %103 : vector<1x32x256xf32> to vector<32x256xf32>
    %105 = vector.shape_cast %102 : vector<32x256xf32> to vector<1x32x256xf32>
    tpu.vector_store %arg6[%c0_98, %c192_99, %c0_100], %105 {strides = array<i32>} : memref<1x256x256xf32, #tpu.memory_space<vmem>>, vector<1x32x256xf32>,
    %c224_101 = arith.constant 224 : index
    %c0_102 = arith.constant 0 : index
    %106 = vector.load %arg8[%c224_101, %c0_102] : memref<320x256xf32, #tpu.memory_space<vmem>>, vector<96x256xf32>
    %cst_103 = arith.constant dense<0.000000e+00> : vector<32x256xf32>
    %107 = tpu.matmul %60, %106, %cst_103 {dimension_numbers = #tpu.dot_dimension_numbers<[1], [0], [0], [1], [0, 0, 1, 1], [], []>} : vector<32x96xf32>, vector<96x256xf32>, vector<32x256xf32> -> vector<32x256xf32>
    %108 = arith.addf %107, %63 : vector<32x256xf32>
    %c0_104 = arith.constant 0 : index
    %c224_105 = arith.constant 224 : index
    %c0_106 = arith.constant 0 : index
    %109 = vector.load %arg6[%c0_104, %c224_105, %c0_106] : memref<1x256x256xf32, #tpu.memory_space<vmem>>, vector<1x32x256xf32>
    %110 = vector.shape_cast %109 : vector<1x32x256xf32> to vector<32x256xf32>
    %111 = vector.shape_cast %108 : vector<32x256xf32> to vector<1x32x256xf32>
    tpu.vector_store %arg6[%c0_104, %c224_105, %c0_106], %111 {strides = array<i32>} : memref<1x256x256xf32, #tpu.memory_space<vmem>>, vector<1x32x256xf32>,
    return
  }
  func.func @transform_0(%arg0: i32) -> (i32, i32, i32) {
    %c0_i32 = arith.constant 0 : i32
    %c0_i32_0 = arith.constant 0 : i32
    %c0_i32_1 = arith.constant 0 : i32
    return %arg0, %c0_i32, %c0_i32_0 : i32, i32, i32
  }
  func.func @transform_1(%arg0: i32) -> (i32, i32) {
    %c0_i32 = arith.constant 0 : i32
    %c0_i32_0 = arith.constant 0 : i32
    %c0_i32_1 = arith.constant 0 : i32
    return %c0_i32, %c0_i32_0 : i32, i32
  }
  func.func @transform_2(%arg0: i32) -> (i32, i32) {
    %c0_i32 = arith.constant 0 : i32
    %c0_i32_0 = arith.constant 0 : i32
    %c0_i32_1 = arith.constant 0 : i32
    return %c0_i32, %c0_i32_0 : i32, i32
  }
  func.func @transform_3(%arg0: i32) -> (i32, i32) {
    %c0_i32 = arith.constant 0 : i32
    %c0_i32_0 = arith.constant 0 : i32
    %c0_i32_1 = arith.constant 0 : i32
    return %c0_i32, %c0_i32_0 : i32, i32
  }
  func.func @transform_4(%arg0: i32) -> (i32, i32) {
    %c0_i32 = arith.constant 0 : i32
    %c0_i32_0 = arith.constant 0 : i32
    %c0_i32_1 = arith.constant 0 : i32
    return %c0_i32, %c0_i32_0 : i32, i32
  }
  func.func @transform_5(%arg0: i32) -> (i32, i32, i32) {
    %c0_i32 = arith.constant 0 : i32
    %c0_i32_0 = arith.constant 0 : i32
    %c0_i32_1 = arith.constant 0 : i32
    return %arg0, %c0_i32, %c0_i32_0 : i32, i32, i32
  }
}

</mosaic_0001>

<llo_original>
// kernel: tpu_custom_call.1
$region0: #{tpu_custom_call.1}
  #allocation0 [shape = 'u32[]', space=smem, size = 0x4, offset = 0x4, fixed_abs, tag = 'smem constant byte address 0x4 - core index']
  #allocation1 [shape = 'u32[144,128]{1,0:T(1,128)}', space=vmem, size = 0x12000, scoped, tag = 'internal scratch']
  #allocation2 [shape = 'f32[320,256]{1,0:T(8,128)}', space=vmem, size = 0x50000, scoped, tag = 'scratch operand']
  #allocation3 [shape = 'f32[320,256]{1,0:T(8,128)}', space=vmem, size = 0x50000, scoped, tag = 'scratch operand']
  %s0 = inlined_call_operand.hbm [shape: f32[2,256,256], index: 0, kind: input, shape index: {}]
  %s1 = inlined_call_operand.vmem [shape: f32[32,96], index: 1, kind: input, shape index: {}]
  %s2 = inlined_call_operand.vmem [shape: f32[32,1], index: 2, kind: input, shape index: {}]
  %s3 = inlined_call_operand.vmem [shape: f32[32,96], index: 3, kind: input, shape index: {}]
  %s4 = inlined_call_operand.vmem [shape: f32[32,1], index: 4, kind: input, shape index: {}]
  %s5 = inlined_call_operand.hbm [shape: f32[2,256,256], index: 5, kind: output, shape index: {}]
  %s6 = sld [smem:[#allocation0]]
  $region57: #{tpu_custom_call.1} parent=0
    _
  %s8 = ssub.s32 1, %s6
  %s9 = scalar_select 0, %s8, %s6
  $region1: #{tpu_custom_call.1} parent=0
    #allocation4 [shape = 'u8[524288]{0}', space=vmem, size = 0x80000, scoped, tag = 'input window, operand 0']
    #allocation5 [shape = 's32[2]{0}', space=sflag, size = 0x8, scoped, tag = 'scoped memory for tpu_custom_call.1']
    #allocation6 [shape = 's32[2]{0}', space=sflag, size = 0x8, scoped, tag = 'scoped memory for tpu_custom_call.1']
    #allocation7 [shape = 'u8[524288]{0}', space=vmem, size = 0x80000, scoped, tag = 'output window, operand 0']
    %10 = vsyncpa [#allocation5], 0
    %s11 = scalar_lea.sflag [#allocation5], 1
    %12 = vsyncpa %s11, 0
    %13 = vsyncpa [#allocation6], 0
    %s14 = scalar_lea.sflag [#allocation6], 1
    %15 = vsyncpa %s14, 0
    loop: start=0, step=1, limit=4
    $region2: #{tpu_custom_call.1} parent=1 // loop_pre_header
      _
    $region3: #{tpu_custom_call.1} parent=1 // loop_header
      %s17 = sphi 0, %s21
      %p18 = scmp.ge.s32.totalorder %s17, 4
      %s27 = sphi 0, %s29
      %s30 = sphi 0, %s27
      %s31 = sphi 0, %s30
      %s47 = sphi 0, %s31
      %s51 = sphi 0, %s51
      %s53 = sphi 0, %s51
      %s54 = sphi 0, %s53
      %s68 = sphi 0, %s54
      %s72 = sphi 0, %s72
      %s74 = sphi 0, %s72
      %s75 = sphi 0, %s74
      %s89 = sphi 0, %s75
      %s93 = sphi 0, %s93
      %s95 = sphi 0, %s93
      %s96 = sphi 0, %s95
      %s110 = sphi 0, %s96
      %s114 = sphi 0, %s114
      %s116 = sphi 0, %s114
      %s117 = sphi 0, %s116
      %s131 = sphi 0, %s117
      %s137 = sphi 0, %s139
      %s140 = sphi 0, %s137
      %s141 = sphi 0, %s140
      %s157 = sphi 0, %s141
    $region4: #{tpu_custom_call.1} parent=1 // loop_header_branch
      %20 = sbr.rel (%p18) target = $region8
    $region5: #{tpu_custom_call.1} parent=1 // loop_body
      %s22 = ssub.s32 %s17, 1
      %s23 = ssub.s32 %s17, 2
      %s24 = sadd.s32 %s17, 1
      %s25 = ssub.s32 %s17, %s24
      %p26 = scmp.eq.s32.totalorder %s25, 0
      %s28 = sadd.s32 %s27, 1
      %s29 = scalar_select %p26, %s27, %s28
      %p32 = pneg %p26
      %p33 = scmp.eq.s32.totalorder %s17, 1
      %p34 = por %p32, %p33
      %p35 = scmp.ne.s32.totalorder %s27, %s30
      %p36 = scmp.eq.s32.totalorder %s17, 0
      %p37 = por %p35, %p36
      %p38 = scmp.ne.s32.totalorder %s27, %s30
      %p39 = scmp.eq.s32.totalorder %s22, 1
      %p40 = por %p38, %p39
      %p41 = scmp.ne.s32.totalorder %s30, %s31
      %p42 = scmp.eq.s32.totalorder %s22, 0
      %p43 = por %p41, %p42
      %p44 = scmp.ne.s32.totalorder %s30, %s31
      %p45 = scmp.eq.s32.totalorder %s23, 1
      %p46 = por %p44, %p45
      %p48 = scmp.ne.s32.totalorder %s31, %s47
      %p49 = scmp.eq.s32.totalorder %s23, 0
      %p50 = por %p48, %p49
      %s52 = sadd.s32 %s51, 1
      %p55 = scmp.eq.s32.totalorder %s17, 1
      %p56 = scmp.ne.s32.totalorder %s51, %s53
      %p57 = scmp.eq.s32.totalorder %s17, 0
      %p58 = por %p56, %p57
      %p59 = scmp.ne.s32.totalorder %s51, %s53
      %p60 = scmp.eq.s32.totalorder %s22, 1
      %p61 = por %p59, %p60
      %p62 = scmp.ne.s32.totalorder %s53, %s54
      %p63 = scmp.eq.s32.totalorder %s22, 0
      %p64 = por %p62, %p63
      %p65 = scmp.ne.s32.totalorder %s53, %s54
      %p66 = scmp.eq.s32.totalorder %s23, 1
      %p67 = por %p65, %p66
      %p69 = scmp.ne.s32.totalorder %s54, %s68
      %p70 = scmp.eq.s32.totalorder %s23, 0
      %p71 = por %p69, %p70
      %s73 = sadd.s32 %s72, 1
      %p76 = scmp.eq.s32.totalorder %s17, 1
      %p77 = scmp.ne.s32.totalorder %s72, %s74
      %p78 = scmp.eq.s32.totalorder %s17, 0
      %p79 = por %p77, %p78
      %p80 = scmp.ne.s32.totalorder %s72, %s74
      %p81 = scmp.eq.s32.totalorder %s22, 1
      %p82 = por %p80, %p81
      %p83 = scmp.ne.s32.totalorder %s74, %s75
      %p84 = scmp.eq.s32.totalorder %s22, 0
      %p85 = por %p83, %p84
      %p86 = scmp.ne.s32.totalorder %s74, %s75
      %p87 = scmp.eq.s32.totalorder %s23, 1
      %p88 = por %p86, %p87
      %p90 = scmp.ne.s32.totalorder %s75, %s89
      %p91 = scmp.eq.s32.totalorder %s23, 0
      %p92 = por %p90, %p91
      %s94 = sadd.s32 %s93, 1
      %p97 = scmp.eq.s32.totalorder %s17, 1
      %p98 = scmp.ne.s32.totalorder %s93, %s95
      %p99 = scmp.eq.s32.totalorder %s17, 0
      %p100 = por %p98, %p99
      %p101 = scmp.ne.s32.totalorder %s93, %s95
      %p102 = scmp.eq.s32.totalorder %s22, 1
      %p103 = por %p101, %p102
      %p104 = scmp.ne.s32.totalorder %s95, %s96
      %p105 = scmp.eq.s32.totalorder %s22, 0
      %p106 = por %p104, %p105
      %p107 = scmp.ne.s32.totalorder %s95, %s96
      %p108 = scmp.eq.s32.totalorder %s23, 1
      %p109 = por %p107, %p108
      %p111 = scmp.ne.s32.totalorder %s96, %s110
      %p112 = scmp.eq.s32.totalorder %s23, 0
      %p113 = por %p111, %p112
      %s115 = sadd.s32 %s114, 1
      %p118 = scmp.eq.s32.totalorder %s17, 1
      %p119 = scmp.ne.s32.totalorder %s114, %s116
      %p120 = scmp.eq.s32.totalorder %s17, 0
      %p121 = por %p119, %p120
      %p122 = scmp.ne.s32.totalorder %s114, %s116
      %p123 = scmp.eq.s32.totalorder %s22, 1
      %p124 = por %p122, %p123
      %p125 = scmp.ne.s32.totalorder %s116, %s117
      %p126 = scmp.eq.s32.totalorder %s22, 0
      %p127 = por %p125, %p126
      %p128 = scmp.ne.s32.totalorder %s116, %s117
      %p129 = scmp.eq.s32.totalorder %s23, 1
      %p130 = por %p128, %p129
      %p132 = scmp.ne.s32.totalorder %s117, %s131
      %p133 = scmp.eq.s32.totalorder %s23, 0
      %p134 = por %p132, %p133
      %s135 = ssub.s32 %s17, %s24
      %p136 = scmp.eq.s32.totalorder %s135, 0
      %s138 = sadd.s32 %s137, 1
      %s139 = scalar_select %p136, %s137, %s138
      %p142 = pneg %p136
      %p143 = scmp.eq.s32.totalorder %s17, 1
      %p144 = por %p142, %p143
      %p145 = scmp.ne.s32.totalorder %s137, %s140
      %p146 = scmp.eq.s32.totalorder %s17, 0
      %p147 = por %p145, %p146
      %p148 = scmp.ne.s32.totalorder %s137, %s140
      %p149 = scmp.eq.s32.totalorder %s22, 1
      %p150 = por %p148, %p149
      %p151 = scmp.ne.s32.totalorder %s140, %s141
      %p152 = scmp.eq.s32.totalorder %s22, 0
      %p153 = por %p151, %p152
      %p154 = scmp.ne.s32.totalorder %s140, %s141
      %p155 = scmp.eq.s32.totalorder %s23, 1
      %p156 = por %p154, %p155
      %p158 = scmp.ne.s32.totalorder %s141, %s157
      %p159 = scmp.eq.s32.totalorder %s23, 0
      %p160 = por %p158, %p159
      %p161 = scmp.le.s32.totalorder 1, %s17
      %p162 = scmp.lt.s32.totalorder %s17, 3
      %p163 = pnand %p161, %p162
      %p164 = pneg %p163
      // Predicated region
      $region9: #{tpu_custom_call.1} parent=5 // pred_check
        _
      $region10: #{tpu_custom_call.1} parent=5 // pred_check_branch
        %166 = sbr.rel (%p163) target = $region12
      $region11: #{tpu_custom_call.1} parent=5 // pred_region
        %s167 = ssub.s32 %s17, 1
        // Predicated region
        $region13: #{tpu_custom_call.1} parent=11 // pred_check
          %p168 = pneg %p64
        $region14: #{tpu_custom_call.1} parent=11 // pred_check_branch
          %170 = sbr.rel (%p168) target = $region16
        $region15: #{tpu_custom_call.1} parent=11 // pred_region
          _
        $region16: #{tpu_custom_call.1} parent=11 // pred_fallthru
          _
        // Predicated region
        $region17: #{tpu_custom_call.1} parent=11 // pred_check
          %p171 = pneg %p85
        $region18: #{tpu_custom_call.1} parent=11 // pred_check_branch
          %173 = sbr.rel (%p171) target = $region20
        $region19: #{tpu_custom_call.1} parent=11 // pred_region
          _
        $region20: #{tpu_custom_call.1} parent=11 // pred_fallthru
          _
        // Predicated region
        $region21: #{tpu_custom_call.1} parent=11 // pred_check
          %p174 = pneg %p106
        $region22: #{tpu_custom_call.1} parent=11 // pred_check_branch
          %176 = sbr.rel (%p174) target = $region24
        $region23: #{tpu_custom_call.1} parent=11 // pred_region
          _
        $region24: #{tpu_custom_call.1} parent=11 // pred_fallthru
          _
        // Predicated region
        $region25: #{tpu_custom_call.1} parent=11 // pred_check
          %p177 = pneg %p127
        $region26: #{tpu_custom_call.1} parent=11 // pred_check_branch
          %179 = sbr.rel (%p177) target = $region28
        $region27: #{tpu_custom_call.1} parent=11 // pred_region
          _
        $region28: #{tpu_custom_call.1} parent=11 // pred_fallthru
          _
      $region12: #{tpu_custom_call.1} parent=5 // pred_fallthru
        _
      %p180 = scmp.lt.s32.totalorder %s17, 2
      // Predicated region
      $region29: #{tpu_custom_call.1} parent=5 // pred_check
        %p181 = pneg %p180
      $region30: #{tpu_custom_call.1} parent=5 // pred_check_branch
        %183 = sbr.rel (%p181) target = $region32
      $region31: #{tpu_custom_call.1} parent=5 // pred_region
        // Predicated region
        $region33: #{tpu_custom_call.1} parent=31 // pred_check
          %p184 = pneg %p37
        $region34: #{tpu_custom_call.1} parent=31 // pred_check_branch
          %186 = sbr.rel (%p184) target = $region36
        $region35: #{tpu_custom_call.1} parent=31 // pred_region
          %s187 = sand.u32 %s27, 1
          %s188 = scalar_lea.sflag [#allocation5], %s187
          %s189 = sand.u32 %s27, 1
          %s190 = smul.addr %s189, 512
          %s191 = scalar_lea.vmem [#allocation4], %s190
          %s193 = ssub.s32 8192, 8192
          %194 = vsyncadd %s188, %s193
          %s195 = smul.addr %s17, 64
          %s196 = smul.addr %s195, 128
          %s197 = scalar_lea.hbm %s0, %s196
          %s198 = sshll.u32 %s191, 4
          %s199 = int_to_ptr.vmem [resolvable:$true] %s198
          %204 = dma.hbm_to_vmem [thread:$0]  %s197, 8192, %s199, %s188, 256, 256, 16
        $region36: #{tpu_custom_call.1} parent=31 // pred_fallthru
          _
      $region32: #{tpu_custom_call.1} parent=5 // pred_fallthru
        _
      %p205 = scmp.le.s32.totalorder 1, %s17
      %p206 = scmp.lt.s32.totalorder %s17, 3
      %p207 = pnand %p205, %p206
      %p208 = pneg %p207
      // Predicated region
      $region37: #{tpu_custom_call.1} parent=5 // pred_check
        _
      $region38: #{tpu_custom_call.1} parent=5 // pred_check_branch
        %210 = sbr.rel (%p207) target = $region40
      $region39: #{tpu_custom_call.1} parent=5 // pred_region
        %s211 = ssub.s32 %s17, 1
        %s212 = sand.u32 %s30, 1
        %s213 = scalar_lea.sflag [#allocation5], %s212
        %s214 = sand.u32 %s30, 1
        %s215 = smul.addr %s214, 512
        %s216 = scalar_lea.vmem [#allocation4], %s215
        // Predicated region
        $region41: #{tpu_custom_call.1} parent=39 // pred_check
          %p217 = pneg %p43
        $region42: #{tpu_custom_call.1} parent=39 // pred_check_branch
          %219 = sbr.rel (%p217) target = $region44
        $region43: #{tpu_custom_call.1} parent=39 // pred_region
          %220 = dma.done %s213, 8192
        $region44: #{tpu_custom_call.1} parent=39 // pred_fallthru
          _
        %s221 = sand.u32 %s30, 1
        %s222 = scalar_lea.sflag [#allocation5], %s221
        %s223 = sand.u32 %s30, 1
        %s224 = smul.addr %s223, 512
        %s225 = scalar_lea.vmem [#allocation4], %s224
        %p226 = pneg %p43
        %p227 = pneg %p40
        %p228 = pneg %p64
        %p229 = pneg %p61
        %p230 = pneg %p85
        %p231 = pneg %p82
        %p232 = pneg %p106
        %p233 = pneg %p103
        %p234 = pneg %p127
        %p235 = pneg %p124
        %p236 = pneg %p153
        %p237 = pneg %p150
        %s238 = sand.u32 %s140, 1
        %s239 = scalar_lea.sflag [#allocation6], %s238
        %s240 = sand.u32 %s140, 1
        %s241 = smul.addr %s240, 512
        %s242 = scalar_lea.vmem [#allocation7], %s241
        %243 = vst [vmem:[#allocation2] sm:$0xff] 0.0
        %244 = vst [vmem:[#allocation2 + $0x8] sm:$0xff] 0.0
        %245 = vst [vmem:[#allocation2 + $0x10] sm:$0xff] 0.0
        %246 = vst [vmem:[#allocation2 + $0x18] sm:$0xff] 0.0
        %247 = vst [vmem:[#allocation2 + $0x20] sm:$0xff] 0.0
        %248 = vst [vmem:[#allocation2 + $0x28] sm:$0xff] 0.0
        %249 = vst [vmem:[#allocation2 + $0x30] sm:$0xff] 0.0
        %250 = vst [vmem:[#allocation2 + $0x38] sm:$0xff] 0.0
        %251 = vst [vmem:[#allocation2 + $0x240] sm:$0xff] 0.0
        %252 = vst [vmem:[#allocation2 + $0x248] sm:$0xff] 0.0
        %253 = vst [vmem:[#allocation2 + $0x250] sm:$0xff] 0.0
        %254 = vst [vmem:[#allocation2 + $0x258] sm:$0xff] 0.0
        %255 = vst [vmem:[#allocation2 + $0x260] sm:$0xff] 0.0
        %256 = vst [vmem:[#allocation2 + $0x268] sm:$0xff] 0.0
        %257 = vst [vmem:[#allocation2 + $0x270] sm:$0xff] 0.0
        %258 = vst [vmem:[#allocation2 + $0x278] sm:$0xff] 0.0
        %v259 = vld [vmem:[%s216] sm:$0xff]
        %v260 = vld [vmem:[%s216 + $0x8] sm:$0xff]
        %v261 = vld [vmem:[%s216 + $0x10] sm:$0xff]
        %v262 = vld [vmem:[%s216 + $0x18] sm:$0xff]
        %v263 = vld [vmem:[%s216 + $0x20] sm:$0xff]
        %v264 = vld [vmem:[%s216 + $0x28] sm:$0xff]
        %v265 = vld [vmem:[%s216 + $0x30] sm:$0xff]
        %v266 = vld [vmem:[%s216 + $0x38] sm:$0xff]
        %v267 = vld [vmem:[%s216 + $0x40] sm:$0xff]
        %v268 = vld [vmem:[%s216 + $0x48] sm:$0xff]
        %v269 = vld [vmem:[%s216 + $0x50] sm:$0xff]
        %v270 = vld [vmem:[%s216 + $0x58] sm:$0xff]
        %v271 = vld [vmem:[%s216 + $0x60] sm:$0xff]
        %v272 = vld [vmem:[%s216 + $0x68] sm:$0xff]
        %v273 = vld [vmem:[%s216 + $0x70] sm:$0xff]
        %v274 = vld [vmem:[%s216 + $0x78] sm:$0xff]
        %v275 = vld [vmem:[%s216 + $0x80] sm:$0xff]
        %v276 = vld [vmem:[%s216 + $0x88] sm:$0xff]
        %v277 = vld [vmem:[%s216 + $0x90] sm:$0xff]
        %v278 = vld [vmem:[%s216 + $0x98] sm:$0xff]
        %v279 = vld [vmem:[%s216 + $0xa0] sm:$0xff]
        %v280 = vld [vmem:[%s216 + $0xa8] sm:$0xff]
        %v281 = vld [vmem:[%s216 + $0xb0] sm:$0xff]
        %v282 = vld [vmem:[%s216 + $0xb8] sm:$0xff]
        %v283 = vld [vmem:[%s216 + $0xc0] sm:$0xff]
        %v284 = vld [vmem:[%s216 + $0xc8] sm:$0xff]
        %v285 = vld [vmem:[%s216 + $0xd0] sm:$0xff]
        %v286 = vld [vmem:[%s216 + $0xd8] sm:$0xff]
        %v287 = vld [vmem:[%s216 + $0xe0] sm:$0xff]
        %v288 = vld [vmem:[%s216 + $0xe8] sm:$0xff]
        %v289 = vld [vmem:[%s216 + $0xf0] sm:$0xff]
        %v290 = vld [vmem:[%s216 + $0xf8] sm:$0xff]
        %v291 = vld [vmem:[%s216 + $0x100] sm:$0xff]
        %v292 = vld [vmem:[%s216 + $0x108] sm:$0xff]
        %v293 = vld [vmem:[%s216 + $0x110] sm:$0xff]
        %v294 = vld [vmem:[%s216 + $0x118] sm:$0xff]
        %v295 = vld [vmem:[%s216 + $0x120] sm:$0xff]
        %v296 = vld [vmem:[%s216 + $0x128] sm:$0xff]
        %v297 = vld [vmem:[%s216 + $0x130] sm:$0xff]
        %v298 = vld [vmem:[%s216 + $0x138] sm:$0xff]
        %v299 = vld [vmem:[%s216 + $0x140] sm:$0xff]
        %v300 = vld [vmem:[%s216 + $0x148] sm:$0xff]
        %v301 = vld [vmem:[%s216 + $0x150] sm:$0xff]
        %v302 = vld [vmem:[%s216 + $0x158] sm:$0xff]
        %v303 = vld [vmem:[%s216 + $0x160] sm:$0xff]
        %v304 = vld [vmem:[%s216 + $0x168] sm:$0xff]
        %v305 = vld [vmem:[%s216 + $0x170] sm:$0xff]
        %v306 = vld [vmem:[%s216 + $0x178] sm:$0xff]
        %v307 = vld [vmem:[%s216 + $0x180] sm:$0xff]
        %v308 = vld [vmem:[%s216 + $0x188] sm:$0xff]
        %v309 = vld [vmem:[%s216 + $0x190] sm:$0xff]
        %v310 = vld [vmem:[%s216 + $0x198] sm:$0xff]
        %v311 = vld [vmem:[%s216 + $0x1a0] sm:$0xff]
        %v312 = vld [vmem:[%s216 + $0x1a8] sm:$0xff]
        %v313 = vld [vmem:[%s216 + $0x1b0] sm:$0xff]
        %v314 = vld [vmem:[%s216 + $0x1b8] sm:$0xff]
        %v315 = vld [vmem:[%s216 + $0x1c0] sm:$0xff]
        %v316 = vld [vmem:[%s216 + $0x1c8] sm:$0xff]
        %v317 = vld [vmem:[%s216 + $0x1d0] sm:$0xff]
        %v318 = vld [vmem:[%s216 + $0x1d8] sm:$0xff]
        %v319 = vld [vmem:[%s216 + $0x1e0] sm:$0xff]
        %v320 = vld [vmem:[%s216 + $0x1e8] sm:$0xff]
        %v321 = vld [vmem:[%s216 + $0x1f0] sm:$0xff]
        %v322 = vld [vmem:[%s216 + $0x1f8] sm:$0xff]
        %323 = vst [vmem:[#allocation2 + $0x40] sm:$0xff] %v259
        %324 = vst [vmem:[#allocation2 + $0x48] sm:$0xff] %v260
        %325 = vst [vmem:[#allocation2 + $0x50] sm:$0xff] %v261
        %326 = vst [vmem:[#allocation2 + $0x58] sm:$0xff] %v262
        %327 = vst [vmem:[#allocation2 + $0x60] sm:$0xff] %v263
        %328 = vst [vmem:[#allocation2 + $0x68] sm:$0xff] %v264
        %329 = vst [vmem:[#allocation2 + $0x70] sm:$0xff] %v265
        %330 = vst [vmem:[#allocation2 + $0x78] sm:$0xff] %v266
        %331 = vst [vmem:[#allocation2 + $0x80] sm:$0xff] %v267
        %332 = vst [vmem:[#allocation2 + $0x88] sm:$0xff] %v268
        %333 = vst [vmem:[#allocation2 + $0x90] sm:$0xff] %v269
        %334 = vst [vmem:[#allocation2 + $0x98] sm:$0xff] %v270
        %335 = vst [vmem:[#allocation2 + $0xa0] sm:$0xff] %v271
        %336 = vst [vmem:[#allocation2 + $0xa8] sm:$0xff] %v272
        %337 = vst [vmem:[#allocation2 + $0xb0] sm:$0xff] %v273
        %338 = vst [vmem:[#allocation2 + $0xb8] sm:$0xff] %v274
        %339 = vst [vmem:[#allocation2 + $0xc0] sm:$0xff] %v275
        %340 = vst [vmem:[#allocation2 + $0xc8] sm:$0xff] %v276
        %341 = vst [vmem:[#allocation2 + $0xd0] sm:$0xff] %v277
        %342 = vst [vmem:[#allocation2 + $0xd8] sm:$0xff] %v278
        %343 = vst [vmem:[#allocation2 + $0xe0] sm:$0xff] %v279
        %344 = vst [vmem:[#allocation2 + $0xe8] sm:$0xff] %v280
        %345 = vst [vmem:[#allocation2 + $0xf0] sm:$0xff] %v281
        %346 = vst [vmem:[#allocation2 + $0xf8] sm:$0xff] %v282
        %347 = vst [vmem:[#allocation2 + $0x100] sm:$0xff] %v283
        %348 = vst [vmem:[#allocation2 + $0x108] sm:$0xff] %v284
        %349 = vst [vmem:[#allocation2 + $0x110] sm:$0xff] %v285
        %350 = vst [vmem:[#allocation2 + $0x118] sm:$0xff] %v286
        %351 = vst [vmem:[#allocation2 + $0x120] sm:$0xff] %v287
        %352 = vst [vmem:[#allocation2 + $0x128] sm:$0xff] %v288
        %353 = vst [vmem:[#allocation2 + $0x130] sm:$0xff] %v289
        %354 = vst [vmem:[#allocation2 + $0x138] sm:$0xff] %v290
        %355 = vst [vmem:[#allocation2 + $0x140] sm:$0xff] %v291
        %356 = vst [vmem:[#allocation2 + $0x148] sm:$0xff] %v292
        %357 = vst [vmem:[#allocation2 + $0x150] sm:$0xff] %v293
        %358 = vst [vmem:[#allocation2 + $0x158] sm:$0xff] %v294
        %359 = vst [vmem:[#allocation2 + $0x160] sm:$0xff] %v295
        %360 = vst [vmem:[#allocation2 + $0x168] sm:$0xff] %v296
        %361 = vst [vmem:[#allocation2 + $0x170] sm:$0xff] %v297
        %362 = vst [vmem:[#allocation2 + $0x178] sm:$0xff] %v298
        %363 = vst [vmem:[#allocation2 + $0x180] sm:$0xff] %v299
        %364 = vst [vmem:[#allocation2 + $0x188] sm:$0xff] %v300
        %365 = vst [vmem:[#allocation2 + $0x190] sm:$0xff] %v301
        %366 = vst [vmem:[#allocation2 + $0x198] sm:$0xff] %v302
        %367 = vst [vmem:[#allocation2 + $0x1a0] sm:$0xff] %v303
        %368 = vst [vmem:[#allocation2 + $0x1a8] sm:$0xff] %v304
        %369 = vst [vmem:[#allocation2 + $0x1b0] sm:$0xff] %v305
        %370 = vst [vmem:[#allocation2 + $0x1b8] sm:$0xff] %v306
        %371 = vst [vmem:[#allocation2 + $0x1c0] sm:$0xff] %v307
        %372 = vst [vmem:[#allocation2 + $0x1c8] sm:$0xff] %v308
        %373 = vst [vmem:[#allocation2 + $0x1d0] sm:$0xff] %v309
        %374 = vst [vmem:[#allocation2 + $0x1d8] sm:$0xff] %v310
        %375 = vst [vmem:[#allocation2 + $0x1e0] sm:$0xff] %v311
        %376 = vst [vmem:[#allocation2 + $0x1e8] sm:$0xff] %v312
        %377 = vst [vmem:[#allocation2 + $0x1f0] sm:$0xff] %v313
        %378 = vst [vmem:[#allocation2 + $0x1f8] sm:$0xff] %v314
        %379 = vst [vmem:[#allocation2 + $0x200] sm:$0xff] %v315
        %380 = vst [vmem:[#allocation2 + $0x208] sm:$0xff] %v316
        %381 = vst [vmem:[#allocation2 + $0x210] sm:$0xff] %v317
        %382 = vst [vmem:[#allocation2 + $0x218] sm:$0xff] %v318
        %383 = vst [vmem:[#allocation2 + $0x220] sm:$0xff] %v319
        %384 = vst [vmem:[#allocation2 + $0x228] sm:$0xff] %v320
        %385 = vst [vmem:[#allocation2 + $0x230] sm:$0xff] %v321
        %386 = vst [vmem:[#allocation2 + $0x238] sm:$0xff] %v322
        %387 = vst [vmem:[#allocation3] sm:$0xff] 0.0
        %388 = vst [vmem:[#allocation3 + $0x8] sm:$0xff] 0.0
        %389 = vst [vmem:[#allocation3 + $0x10] sm:$0xff] 0.0
        %390 = vst [vmem:[#allocation3 + $0x18] sm:$0xff] 0.0
        %391 = vst [vmem:[#allocation3 + $0x20] sm:$0xff] 0.0
        %392 = vst [vmem:[#allocation3 + $0x28] sm:$0xff] 0.0
        %393 = vst [vmem:[#allocation3 + $0x30] sm:$0xff] 0.0
        %394 = vst [vmem:[#allocation3 + $0x38] sm:$0xff] 0.0
        %395 = vst [vmem:[#allocation3 + $0x240] sm:$0xff] 0.0
        %396 = vst [vmem:[#allocation3 + $0x248] sm:$0xff] 0.0
        %397 = vst [vmem:[#allocation3 + $0x250] sm:$0xff] 0.0
        %398 = vst [vmem:[#allocation3 + $0x258] sm:$0xff] 0.0
        %399 = vst [vmem:[#allocation3 + $0x260] sm:$0xff] 0.0
        %400 = vst [vmem:[#allocation3 + $0x268] sm:$0xff] 0.0
        %401 = vst [vmem:[#allocation3 + $0x270] sm:$0xff] 0.0
        %402 = vst [vmem:[#allocation3 + $0x278] sm:$0xff] 0.0
        %v403 = vld [vmem:[%s1] sm:$0xff]
        %v404 = vld [vmem:[%s1 + $0x8] sm:$0xff]
        %v405 = vld [vmem:[%s1 + $0x10] sm:$0xff]
        %v406 = vld [vmem:[%s1 + $0x18] sm:$0xff]
        %v407 = vld [vmem:[%s2] sm:$0xff]
        %v408 = vld [vmem:[%s2 + $0x8] sm:$0xff]
        %v409 = vld [vmem:[%s2 + $0x10] sm:$0xff]
        %v410 = vld [vmem:[%s2 + $0x18] sm:$0xff]
        %412 = vset.pattern.permute.xlu0 0
        %413 = vperm.xlu0 %412, %v407
        %v414 = vpop.permute.xlu0 %413
        %417 = vset.pattern.permute.xlu0 0
        %418 = vperm.xlu0 %417, %v408
        %v419 = vpop.permute.xlu0 %418
        %422 = vset.pattern.permute.xlu0 0
        %423 = vperm.xlu0 %422, %v409
        %v424 = vpop.permute.xlu0 %423
        %427 = vset.pattern.permute.xlu0 0
        %428 = vperm.xlu0 %427, %v410
        %v429 = vpop.permute.xlu0 %428
        %v431 = vld [vmem:[#allocation2] sm:$0xff]
        %v432 = vld [vmem:[#allocation2 + $0x8] sm:$0xff]
        %v433 = vld [vmem:[#allocation2 + $0x10] sm:$0xff]
        %v434 = vld [vmem:[#allocation2 + $0x18] sm:$0xff]
        %v435 = vld [vmem:[#allocation2 + $0x20] sm:$0xff]
        %v436 = vld [vmem:[#allocation2 + $0x28] sm:$0xff]
        %v437 = vld [vmem:[#allocation2 + $0x30] sm:$0xff]
        %v438 = vld [vmem:[#allocation2 + $0x38] sm:$0xff]
        %v439 = vld [vmem:[#allocation2 + $0x40] sm:$0xff]
        %v440 = vld [vmem:[#allocation2 + $0x48] sm:$0xff]
        %v441 = vld [vmem:[#allocation2 + $0x50] sm:$0xff]
        %v442 = vld [vmem:[#allocation2 + $0x58] sm:$0xff]
        %v443 = vld [vmem:[#allocation2 + $0x60] sm:$0xff]
        %v444 = vld [vmem:[#allocation2 + $0x68] sm:$0xff]
        %v445 = vld [vmem:[#allocation2 + $0x70] sm:$0xff]
        %v446 = vld [vmem:[#allocation2 + $0x78] sm:$0xff]
        %v447 = vld [vmem:[#allocation2 + $0x80] sm:$0xff]
        %v448 = vld [vmem:[#allocation2 + $0x88] sm:$0xff]
        %v449 = vld [vmem:[#allocation2 + $0x90] sm:$0xff]
        %v450 = vld [vmem:[#allocation2 + $0x98] sm:$0xff]
        %v451 = vld [vmem:[#allocation2 + $0xa0] sm:$0xff]
        %v452 = vld [vmem:[#allocation2 + $0xa8] sm:$0xff]
        %v453 = vld [vmem:[#allocation2 + $0xb0] sm:$0xff]
        %v454 = vld [vmem:[#allocation2 + $0xb8] sm:$0xff]
        %vm455 = vcmask 785408
        %v457 = vsel %vm455, %v403, 0
        %v460 = vsel %vm455, %v404, 0
        %v463 = vsel %vm455, %v405, 0
        %v466 = vsel %vm455, %v406, 0
        %468 = vmatprep.subr.mxu0 0.0
        %469 = vmatpush1.msra.mxu0 0.0
        %470 = vmatprep.subr.mxu0 0.0
        %471 = vmatpush1.msra.mxu0 0.0
        %472 = vmatprep.subr.mxu0 0.0
        %473 = vmatpush1.msra.mxu0 0.0
        %474 = vmatprep.subr.mxu0 0.0
        %475 = vmatpush1.msra.mxu0 0.0
        %476 = vmatprep.subr.mxu0 %v454
        %477 = vmatpush1.msra.mxu0 %v453
        %478 = vmatprep.subr.mxu0 %v452
        %479 = vmatpush1.msra.mxu0 %v451
        %480 = vmatprep.subr.mxu0 %v450
        %481 = vmatpush1.msra.mxu0 %v449
        %482 = vmatprep.subr.mxu0 %v448
        %483 = vmatpush1.msra.mxu0 %v447
        %484 = vmatprep.subr.mxu0 %v446
        %485 = vmatpush1.msra.mxu0 %v445
        %486 = vmatprep.subr.mxu0 %v444
        %487 = vmatpush1.msra.mxu0 %v443
        %488 = vmatprep.subr.mxu0 %v442
        %489 = vmatpush1.msra.mxu0 %v441
        %490 = vmatprep.subr.mxu0 %v440
        %491 = vmatpush1.msra.mxu0 %v439
        %492 = vmatprep.subr.mxu0 %v438
        %493 = vmatpush1.msra.mxu0 %v437
        %494 = vmatprep.subr.mxu0 %v436
        %495 = vmatpush1.msra.mxu0 %v435
        %496 = vmatprep.subr.mxu0 %v434
        %497 = vmatpush1.msra.mxu0 %v433
        %498 = vmatprep.subr.mxu0 %v432
        %499 = vmatpush1.msra.mxu0 %v431
        %500 = vmatprep.subr.mxu0 0.0
        %501 = vmatpush2.msra.mxu0 0.0
        %502 = vmatprep.subr.mxu0 0.0
        %503 = vmatpush2.msra.mxu0 0.0
        %504 = vmatprep.subr.mxu0 0.0
        %505 = vmatpush2.msra.mxu0 0.0
        %506 = vmatprep.subr.mxu0 0.0
        %507 = vmatpush2.msra.mxu0 0.0
        %508 = vmatprep.subr.mxu0 0.0
        %509 = vmatpush2.msra.mxu0 0.0
        %510 = vmatprep.subr.mxu0 0.0
        %511 = vmatpush2.msra.mxu0 0.0
        %512 = vmatprep.subr.mxu0 0.0
        %513 = vmatpush2.msra.mxu0 0.0
        %514 = vmatprep.subr.mxu0 0.0
        %515 = vmatpush2.msra.mxu0 0.0
        %516 = vmatprep.subr.mxu0 0.0
        %517 = vmatpush2.msra.mxu0 0.0
        %518 = vmatprep.subr.mxu0 0.0
        %519 = vmatpush2.msra.mxu0 0.0
        %520 = vmatprep.subr.mxu0 0.0
        %521 = vmatpush2.msra.mxu0 0.0
        %522 = vmatprep.subr.mxu0 0.0
        %523 = vmatpush2.msra.mxu0 0.0
        %524 = vmatprep.subr.mxu0 0.0
        %525 = vmatpush2.msra.mxu0 0.0
        %526 = vmatprep.subr.mxu0 0.0
        %527 = vmatpush2.msra.mxu0 0.0
        %528 = vmatprep.subr.mxu0 0.0
        %529 = vmatpush2.msra.mxu0 0.0
        %530 = vmatprep.subr.mxu0 0.0
        %531 = vmatpush2.msra.mxu0 0.0
        %532 = vmatprep.mubr.f32.mxu0 0.0
        %533 = vmatmul.mubr.f32.gmra.mxu0 %v457
        %v534 = vpop.f32.mrf.mxu0
        %v535 = vadd.f32 %v414, %v534
        %v536 = vpop.f32.mrf.mxu0
        %v537 = vadd.f32 %v414, %v536
        %538 = vmatprep.mubr.f32.mxu0 0.0
        %539 = vmatmul.mubr.f32.gmra.mxu0 %v460
        %v540 = vpop.f32.mrf.mxu0
        %v541 = vadd.f32 %v419, %v540
        %v542 = vpop.f32.mrf.mxu0
        %v543 = vadd.f32 %v419, %v542
        %544 = vmatprep.mubr.f32.mxu0 0.0
        %545 = vmatmul.mubr.f32.gmra.mxu0 %v463
        %v546 = vpop.f32.mrf.mxu0
        %v547 = vadd.f32 %v424, %v546
        %v548 = vpop.f32.mrf.mxu0
        %v549 = vadd.f32 %v424, %v548
        %550 = vmatprep.mubr.f32.mxu0 0.0
        %551 = vmatmul.mubr.f32.gmra.mxu0 %v466
        %v552 = vpop.f32.mrf.mxu0
        %v553 = vadd.f32 %v429, %v552
        %v554 = vpop.f32.mrf.mxu0
        %v555 = vadd.f32 %v429, %v554
        %556 = vdwg.mxu0
        %v557 = vmax.f32 %v535, 0.0
        %v558 = vmax.f32 %v537, 0.0
        %v559 = vmax.f32 %v541, 0.0
        %v560 = vmax.f32 %v543, 0.0
        %v561 = vmax.f32 %v547, 0.0
        %v562 = vmax.f32 %v549, 0.0
        %v563 = vmax.f32 %v553, 0.0
        %v564 = vmax.f32 %v555, 0.0
        %565 = vst [vmem:[#allocation3 + $0x40] sm:$0xff] %v557
        %566 = vst [vmem:[#allocation3 + $0x48] sm:$0xff] %v558
        %567 = vst [vmem:[#allocation3 + $0x50] sm:$0xff] %v559
        %568 = vst [vmem:[#allocation3 + $0x58] sm:$0xff] %v560
        %569 = vst [vmem:[#allocation3 + $0x60] sm:$0xff] %v561
        %570 = vst [vmem:[#allocation3 + $0x68] sm:$0xff] %v562
        %571 = vst [vmem:[#allocation3 + $0x70] sm:$0xff] %v563
        %572 = vst [vmem:[#allocation3 + $0x78] sm:$0xff] %v564
        %v573 = vld [vmem:[#allocation2 + $0x40] sm:$0xff]
        %v574 = vld [vmem:[#allocation2 + $0x48] sm:$0xff]
        %v575 = vld [vmem:[#allocation2 + $0x50] sm:$0xff]
        %v576 = vld [vmem:[#allocation2 + $0x58] sm:$0xff]
        %v577 = vld [vmem:[#allocation2 + $0x60] sm:$0xff]
        %v578 = vld [vmem:[#allocation2 + $0x68] sm:$0xff]
        %v579 = vld [vmem:[#allocation2 + $0x70] sm:$0xff]
        %v580 = vld [vmem:[#allocation2 + $0x78] sm:$0xff]
        %v581 = vld [vmem:[#allocation2 + $0x80] sm:$0xff]
        %v582 = vld [vmem:[#allocation2 + $0x88] sm:$0xff]
        %v583 = vld [vmem:[#allocation2 + $0x90] sm:$0xff]
        %v584 = vld [vmem:[#allocation2 + $0x98] sm:$0xff]
        %v585 = vld [vmem:[#allocation2 + $0xa0] sm:$0xff]
        %v586 = vld [vmem:[#allocation2 + $0xa8] sm:$0xff]
        %v587 = vld [vmem:[#allocation2 + $0xb0] sm:$0xff]
        %v588 = vld [vmem:[#allocation2 + $0xb8] sm:$0xff]
        %v589 = vld [vmem:[#allocation2 + $0xc0] sm:$0xff]
        %v590 = vld [vmem:[#allocation2 + $0xc8] sm:$0xff]
        %v591 = vld [vmem:[#allocation2 + $0xd0] sm:$0xff]
        %v592 = vld [vmem:[#allocation2 + $0xd8] sm:$0xff]
        %v593 = vld [vmem:[#allocation2 + $0xe0] sm:$0xff]
        %v594 = vld [vmem:[#allocation2 + $0xe8] sm:$0xff]
        %v595 = vld [vmem:[#allocation2 + $0xf0] sm:$0xff]
        %v596 = vld [vmem:[#allocation2 + $0xf8] sm:$0xff]
        %597 = vmatprep.subr.mxu0 0.0
        %598 = vmatpush1.msra.mxu0 0.0
        %599 = vmatprep.subr.mxu0 0.0
        %600 = vmatpush1.msra.mxu0 0.0
        %601 = vmatprep.subr.mxu0 0.0
        %602 = vmatpush1.msra.mxu0 0.0
        %603 = vmatprep.subr.mxu0 0.0
        %604 = vmatpush1.msra.mxu0 0.0
        %605 = vmatprep.subr.mxu0 %v596
        %606 = vmatpush1.msra.mxu0 %v595
        %607 = vmatprep.subr.mxu0 %v594
        %608 = vmatpush1.msra.mxu0 %v593
        %609 = vmatprep.subr.mxu0 %v592
        %610 = vmatpush1.msra.mxu0 %v591
        %611 = vmatprep.subr.mxu0 %v590
        %612 = vmatpush1.msra.mxu0 %v589
        %613 = vmatprep.subr.mxu0 %v588
        %614 = vmatpush1.msra.mxu0 %v587
        %615 = vmatprep.subr.mxu0 %v586
        %616 = vmatpush1.msra.mxu0 %v585
        %617 = vmatprep.subr.mxu0 %v584
        %618 = vmatpush1.msra.mxu0 %v583
        %619 = vmatprep.subr.mxu0 %v582
        %620 = vmatpush1.msra.mxu0 %v581
        %621 = vmatprep.subr.mxu0 %v580
        %622 = vmatpush1.msra.mxu0 %v579
        %623 = vmatprep.subr.mxu0 %v578
        %624 = vmatpush1.msra.mxu0 %v577
        %625 = vmatprep.subr.mxu0 %v576
        %626 = vmatpush1.msra.mxu0 %v575
        %627 = vmatprep.subr.mxu0 %v574
        %628 = vmatpush1.msra.mxu0 %v573
        %629 = vmatprep.subr.mxu0 0.0
        %630 = vmatpush2.msra.mxu0 0.0
        %631 = vmatprep.subr.mxu0 0.0
        %632 = vmatpush2.msra.mxu0 0.0
        %633 = vmatprep.subr.mxu0 0.0
        %634 = vmatpush2.msra.mxu0 0.0
        %635 = vmatprep.subr.mxu0 0.0
        %636 = vmatpush2.msra.mxu0 0.0
        %637 = vmatprep.subr.mxu0 0.0
        %638 = vmatpush2.msra.mxu0 0.0
        %639 = vmatprep.subr.mxu0 0.0
        %640 = vmatpush2.msra.mxu0 0.0
        %641 = vmatprep.subr.mxu0 0.0
        %642 = vmatpush2.msra.mxu0 0.0
        %643 = vmatprep.subr.mxu0 0.0
        %644 = vmatpush2.msra.mxu0 0.0
        %645 = vmatprep.subr.mxu0 0.0
        %646 = vmatpush2.msra.mxu0 0.0
        %647 = vmatprep.subr.mxu0 0.0
        %648 = vmatpush2.msra.mxu0 0.0
        %649 = vmatprep.subr.mxu0 0.0
        %650 = vmatpush2.msra.mxu0 0.0
        %651 = vmatprep.subr.mxu0 0.0
        %652 = vmatpush2.msra.mxu0 0.0
        %653 = vmatprep.subr.mxu0 0.0
        %654 = vmatpush2.msra.mxu0 0.0
        %655 = vmatprep.subr.mxu0 0.0
        %656 = vmatpush2.msra.mxu0 0.0
        %657 = vmatprep.subr.mxu0 0.0
        %658 = vmatpush2.msra.mxu0 0.0
        %659 = vmatprep.subr.mxu0 0.0
        %660 = vmatpush2.msra.mxu0 0.0
        %661 = vmatprep.mubr.f32.mxu0 0.0
        %662 = vmatmul.mubr.f32.gmra.mxu0 %v457
        %v663 = vpop.f32.mrf.mxu0
        %v664 = vadd.f32 %v414, %v663
        %v665 = vpop.f32.mrf.mxu0
        %v666 = vadd.f32 %v414, %v665
        %667 = vmatprep.mubr.f32.mxu0 0.0
        %668 = vmatmul.mubr.f32.gmra.mxu0 %v460
        %v669 = vpop.f32.mrf.mxu0
        %v670 = vadd.f32 %v419, %v669
        %v671 = vpop.f32.mrf.mxu0
        %v672 = vadd.f32 %v419, %v671
        %673 = vmatprep.mubr.f32.mxu0 0.0
        %674 = vmatmul.mubr.f32.gmra.mxu0 %v463
        %v675 = vpop.f32.mrf.mxu0
        %v676 = vadd.f32 %v424, %v675
        %v677 = vpop.f32.mrf.mxu0
        %v678 = vadd.f32 %v424, %v677
        %679 = vmatprep.mubr.f32.mxu0 0.0
        %680 = vmatmul.mubr.f32.gmra.mxu0 %v466
        %v681 = vpop.f32.mrf.mxu0
        %v682 = vadd.f32 %v429, %v681
        %v683 = vpop.f32.mrf.mxu0
        %v684 = vadd.f32 %v429, %v683
        %685 = vdwg.mxu0
        %v686 = vmax.f32 %v664, 0.0
        %v687 = vmax.f32 %v666, 0.0
        %v688 = vmax.f32 %v670, 0.0
        %v689 = vmax.f32 %v672, 0.0
        %v690 = vmax.f32 %v676, 0.0
        %v691 = vmax.f32 %v678, 0.0
        %v692 = vmax.f32 %v682, 0.0
        %v693 = vmax.f32 %v684, 0.0
        %694 = vst [vmem:[#allocation3 + $0x80] sm:$0xff] %v686
        %695 = vst [vmem:[#allocation3 + $0x88] sm:$0xff] %v687
        %696 = vst [vmem:[#allocation3 + $0x90] sm:$0xff] %v688
        %697 = vst [vmem:[#allocation3 + $0x98] sm:$0xff] %v689
        %698 = vst [vmem:[#allocation3 + $0xa0] sm:$0xff] %v690
        %699 = vst [vmem:[#allocation3 + $0xa8] sm:$0xff] %v691
        %700 = vst [vmem:[#allocation3 + $0xb0] sm:$0xff] %v692
        %701 = vst [vmem:[#allocation3 + $0xb8] sm:$0xff] %v693
        %v702 = vld [vmem:[#allocation2 + $0x80] sm:$0xff]
        %v703 = vld [vmem:[#allocation2 + $0x88] sm:$0xff]
        %v704 = vld [vmem:[#allocation2 + $0x90] sm:$0xff]
        %v705 = vld [vmem:[#allocation2 + $0x98] sm:$0xff]
        %v706 = vld [vmem:[#allocation2 + $0xa0] sm:$0xff]
        %v707 = vld [vmem:[#allocation2 + $0xa8] sm:$0xff]
        %v708 = vld [vmem:[#allocation2 + $0xb0] sm:$0xff]
        %v709 = vld [vmem:[#allocation2 + $0xb8] sm:$0xff]
        %v710 = vld [vmem:[#allocation2 + $0xc0] sm:$0xff]
        %v711 = vld [vmem:[#allocation2 + $0xc8] sm:$0xff]
        %v712 = vld [vmem:[#allocation2 + $0xd0] sm:$0xff]
        %v713 = vld [vmem:[#allocation2 + $0xd8] sm:$0xff]
        %v714 = vld [vmem:[#allocation2 + $0xe0] sm:$0xff]
        %v715 = vld [vmem:[#allocation2 + $0xe8] sm:$0xff]
        %v716 = vld [vmem:[#allocation2 + $0xf0] sm:$0xff]
        %v717 = vld [vmem:[#allocation2 + $0xf8] sm:$0xff]
        %v718 = vld [vmem:[#allocation2 + $0x100] sm:$0xff]
        %v719 = vld [vmem:[#allocation2 + $0x108] sm:$0xff]
        %v720 = vld [vmem:[#allocation2 + $0x110] sm:$0xff]
        %v721 = vld [vmem:[#allocation2 + $0x118] sm:$0xff]
        %v722 = vld [vmem:[#allocation2 + $0x120] sm:$0xff]
        %v723 = vld [vmem:[#allocation2 + $0x128] sm:$0xff]
        %v724 = vld [vmem:[#allocation2 + $0x130] sm:$0xff]
        %v725 = vld [vmem:[#allocation2 + $0x138] sm:$0xff]
        %726 = vmatprep.subr.mxu0 0.0
        %727 = vmatpush1.msra.mxu0 0.0
        %728 = vmatprep.subr.mxu0 0.0
        %729 = vmatpush1.msra.mxu0 0.0
        %730 = vmatprep.subr.mxu0 0.0
        %731 = vmatpush1.msra.mxu0 0.0
        %732 = vmatprep.subr.mxu0 0.0
        %733 = vmatpush1.msra.mxu0 0.0
        %734 = vmatprep.subr.mxu0 %v725
        %735 = vmatpush1.msra.mxu0 %v724
        %736 = vmatprep.subr.mxu0 %v723
        %737 = vmatpush1.msra.mxu0 %v722
        %738 = vmatprep.subr.mxu0 %v721
        %739 = vmatpush1.msra.mxu0 %v720
        %740 = vmatprep.subr.mxu0 %v719
        %741 = vmatpush1.msra.mxu0 %v718
        %742 = vmatprep.subr.mxu0 %v717
        %743 = vmatpush1.msra.mxu0 %v716
        %744 = vmatprep.subr.mxu0 %v715
        %745 = vmatpush1.msra.mxu0 %v714
        %746 = vmatprep.subr.mxu0 %v713
        %747 = vmatpush1.msra.mxu0 %v712
        %748 = vmatprep.subr.mxu0 %v711
        %749 = vmatpush1.msra.mxu0 %v710
        %750 = vmatprep.subr.mxu0 %v709
        %751 = vmatpush1.msra.mxu0 %v708
        %752 = vmatprep.subr.mxu0 %v707
        %753 = vmatpush1.msra.mxu0 %v706
        %754 = vmatprep.subr.mxu0 %v705
        %755 = vmatpush1.msra.mxu0 %v704
        %756 = vmatprep.subr.mxu0 %v703
        %757 = vmatpush1.msra.mxu0 %v702
        %758 = vmatprep.subr.mxu0 0.0
        %759 = vmatpush2.msra.mxu0 0.0
        %760 = vmatprep.subr.mxu0 0.0
        %761 = vmatpush2.msra.mxu0 0.0
        %762 = vmatprep.subr.mxu0 0.0
        %763 = vmatpush2.msra.mxu0 0.0
        %764 = vmatprep.subr.mxu0 0.0
        %765 = vmatpush2.msra.mxu0 0.0
        %766 = vmatprep.subr.mxu0 0.0
        %767 = vmatpush2.msra.mxu0 0.0
        %768 = vmatprep.subr.mxu0 0.0
        %769 = vmatpush2.msra.mxu0 0.0
        %770 = vmatprep.subr.mxu0 0.0
        %771 = vmatpush2.msra.mxu0 0.0
        %772 = vmatprep.subr.mxu0 0.0
        %773 = vmatpush2.msra.mxu0 0.0
        %774 = vmatprep.subr.mxu0 0.0
        %775 = vmatpush2.msra.mxu0 0.0
        %776 = vmatprep.subr.mxu0 0.0
        %777 = vmatpush2.msra.mxu0 0.0
        %778 = vmatprep.subr.mxu0 0.0
        %779 = vmatpush2.msra.mxu0 0.0
        %780 = vmatprep.subr.mxu0 0.0
        %781 = vmatpush2.msra.mxu0 0.0
        %782 = vmatprep.subr.mxu0 0.0
        %783 = vmatpush2.msra.mxu0 0.0
        %784 = vmatprep.subr.mxu0 0.0
        %785 = vmatpush2.msra.mxu0 0.0
        %786 = vmatprep.subr.mxu0 0.0
        %787 = vmatpush2.msra.mxu0 0.0
        %788 = vmatprep.subr.mxu0 0.0
        %789 = vmatpush2.msra.mxu0 0.0
        %790 = vmatprep.mubr.f32.mxu0 0.0
        %791 = vmatmul.mubr.f32.gmra.mxu0 %v457
        %v792 = vpop.f32.mrf.mxu0
        %v793 = vadd.f32 %v414, %v792
        %v794 = vpop.f32.mrf.mxu0
        %v795 = vadd.f32 %v414, %v794
        %796 = vmatprep.mubr.f32.mxu0 0.0
        %797 = vmatmul.mubr.f32.gmra.mxu0 %v460
        %v798 = vpop.f32.mrf.mxu0
        %v799 = vadd.f32 %v419, %v798
        %v800 = vpop.f32.mrf.mxu0
        %v801 = vadd.f32 %v419, %v800
        %802 = vmatprep.mubr.f32.mxu0 0.0
        %803 = vmatmul.mubr.f32.gmra.mxu0 %v463
        %v804 = vpop.f32.mrf.mxu0
        %v805 = vadd.f32 %v424, %v804
        %v806 = vpop.f32.mrf.mxu0
        %v807 = vadd.f32 %v424, %v806
        %808 = vmatprep.mubr.f32.mxu0 0.0
        %809 = vmatmul.mubr.f32.gmra.mxu0 %v466
        %v810 = vpop.f32.mrf.mxu0
        %v811 = vadd.f32 %v429, %v810
        %v812 = vpop.f32.mrf.mxu0
        %v813 = vadd.f32 %v429, %v812
        %814 = vdwg.mxu0
        %v815 = vmax.f32 %v793, 0.0
        %v816 = vmax.f32 %v795, 0.0
        %v817 = vmax.f32 %v799, 0.0
        %v818 = vmax.f32 %v801, 0.0
        %v819 = vmax.f32 %v805, 0.0
        %v820 = vmax.f32 %v807, 0.0
        %v821 = vmax.f32 %v811, 0.0
        %v822 = vmax.f32 %v813, 0.0
        %823 = vst [vmem:[#allocation3 + $0xc0] sm:$0xff] %v815
        %824 = vst [vmem:[#allocation3 + $0xc8] sm:$0xff] %v816
        %825 = vst [vmem:[#allocation3 + $0xd0] sm:$0xff] %v817
        %826 = vst [vmem:[#allocation3 + $0xd8] sm:$0xff] %v818
        %827 = vst [vmem:[#allocation3 + $0xe0] sm:$0xff] %v819
        %828 = vst [vmem:[#allocation3 + $0xe8] sm:$0xff] %v820
        %829 = vst [vmem:[#allocation3 + $0xf0] sm:$0xff] %v821
        %830 = vst [vmem:[#allocation3 + $0xf8] sm:$0xff] %v822
        %v831 = vld [vmem:[#allocation2 + $0xc0] sm:$0xff]
        %v832 = vld [vmem:[#allocation2 + $0xc8] sm:$0xff]
        %v833 = vld [vmem:[#allocation2 + $0xd0] sm:$0xff]
        %v834 = vld [vmem:[#allocation2 + $0xd8] sm:$0xff]
        %v835 = vld [vmem:[#allocation2 + $0xe0] sm:$0xff]
        %v836 = vld [vmem:[#allocation2 + $0xe8] sm:$0xff]
        %v837 = vld [vmem:[#allocation2 + $0xf0] sm:$0xff]
        %v838 = vld [vmem:[#allocation2 + $0xf8] sm:$0xff]
        %v839 = vld [vmem:[#allocation2 + $0x100] sm:$0xff]
        %v840 = vld [vmem:[#allocation2 + $0x108] sm:$0xff]
        %v841 = vld [vmem:[#allocation2 + $0x110] sm:$0xff]
        %v842 = vld [vmem:[#allocation2 + $0x118] sm:$0xff]
        %v843 = vld [vmem:[#allocation2 + $0x120] sm:$0xff]
        %v844 = vld [vmem:[#allocation2 + $0x128] sm:$0xff]
        %v845 = vld [vmem:[#allocation2 + $0x130] sm:$0xff]
        %v846 = vld [vmem:[#allocation2 + $0x138] sm:$0xff]
        %v847 = vld [vmem:[#allocation2 + $0x140] sm:$0xff]
        %v848 = vld [vmem:[#allocation2 + $0x148] sm:$0xff]
        %v849 = vld [vmem:[#allocation2 + $0x150] sm:$0xff]
        %v850 = vld [vmem:[#allocation2 + $0x158] sm:$0xff]
        %v851 = vld [vmem:[#allocation2 + $0x160] sm:$0xff]
        %v852 = vld [vmem:[#allocation2 + $0x168] sm:$0xff]
        %v853 = vld [vmem:[#allocation2 + $0x170] sm:$0xff]
        %v854 = vld [vmem:[#allocation2 + $0x178] sm:$0xff]
        %855 = vmatprep.subr.mxu0 0.0
        %856 = vmatpush1.msra.mxu0 0.0
        %857 = vmatprep.subr.mxu0 0.0
        %858 = vmatpush1.msra.mxu0 0.0
        %859 = vmatprep.subr.mxu0 0.0
        %860 = vmatpush1.msra.mxu0 0.0
        %861 = vmatprep.subr.mxu0 0.0
        %862 = vmatpush1.msra.mxu0 0.0
        %863 = vmatprep.subr.mxu0 %v854
        %864 = vmatpush1.msra.mxu0 %v853
        %865 = vmatprep.subr.mxu0 %v852
        %866 = vmatpush1.msra.mxu0 %v851
        %867 = vmatprep.subr.mxu0 %v850
        %868 = vmatpush1.msra.mxu0 %v849
        %869 = vmatprep.subr.mxu0 %v848
        %870 = vmatpush1.msra.mxu0 %v847
        %871 = vmatprep.subr.mxu0 %v846
        %872 = vmatpush1.msra.mxu0 %v845
        %873 = vmatprep.subr.mxu0 %v844
        %874 = vmatpush1.msra.mxu0 %v843
        %875 = vmatprep.subr.mxu0 %v842
        %876 = vmatpush1.msra.mxu0 %v841
        %877 = vmatprep.subr.mxu0 %v840
        %878 = vmatpush1.msra.mxu0 %v839
        %879 = vmatprep.subr.mxu0 %v838
        %880 = vmatpush1.msra.mxu0 %v837
        %881 = vmatprep.subr.mxu0 %v836
        %882 = vmatpush1.msra.mxu0 %v835
        %883 = vmatprep.subr.mxu0 %v834
        %884 = vmatpush1.msra.mxu0 %v833
        %885 = vmatprep.subr.mxu0 %v832
        %886 = vmatpush1.msra.mxu0 %v831
        %887 = vmatprep.subr.mxu0 0.0
        %888 = vmatpush2.msra.mxu0 0.0
        %889 = vmatprep.subr.mxu0 0.0
        %890 = vmatpush2.msra.mxu0 0.0
        %891 = vmatprep.subr.mxu0 0.0
        %892 = vmatpush2.msra.mxu0 0.0
        %893 = vmatprep.subr.mxu0 0.0
        %894 = vmatpush2.msra.mxu0 0.0
        %895 = vmatprep.subr.mxu0 0.0
        %896 = vmatpush2.msra.mxu0 0.0
        %897 = vmatprep.subr.mxu0 0.0
        %898 = vmatpush2.msra.mxu0 0.0
        %899 = vmatprep.subr.mxu0 0.0
        %900 = vmatpush2.msra.mxu0 0.0
        %901 = vmatprep.subr.mxu0 0.0
        %902 = vmatpush2.msra.mxu0 0.0
        %903 = vmatprep.subr.mxu0 0.0
        %904 = vmatpush2.msra.mxu0 0.0
        %905 = vmatprep.subr.mxu0 0.0
        %906 = vmatpush2.msra.mxu0 0.0
        %907 = vmatprep.subr.mxu0 0.0
        %908 = vmatpush2.msra.mxu0 0.0
        %909 = vmatprep.subr.mxu0 0.0
        %910 = vmatpush2.msra.mxu0 0.0
        %911 = vmatprep.subr.mxu0 0.0
        %912 = vmatpush2.msra.mxu0 0.0
        %913 = vmatprep.subr.mxu0 0.0
        %914 = vmatpush2.msra.mxu0 0.0
        %915 = vmatprep.subr.mxu0 0.0
        %916 = vmatpush2.msra.mxu0 0.0
        %917 = vmatprep.subr.mxu0 0.0
        %918 = vmatpush2.msra.mxu0 0.0
        %919 = vmatprep.mubr.f32.mxu0 0.0
        %920 = vmatmul.mubr.f32.gmra.mxu0 %v457
        %v921 = vpop.f32.mrf.mxu0
        %v922 = vadd.f32 %v414, %v921
        %v923 = vpop.f32.mrf.mxu0
        %v924 = vadd.f32 %v414, %v923
        %925 = vmatprep.mubr.f32.mxu0 0.0
        %926 = vmatmul.mubr.f32.gmra.mxu0 %v460
        %v927 = vpop.f32.mrf.mxu0
        %v928 = vadd.f32 %v419, %v927
        %v929 = vpop.f32.mrf.mxu0
        %v930 = vadd.f32 %v419, %v929
        %931 = vmatprep.mubr.f32.mxu0 0.0
        %932 = vmatmul.mubr.f32.gmra.mxu0 %v463
        %v933 = vpop.f32.mrf.mxu0
        %v934 = vadd.f32 %v424, %v933
        %v935 = vpop.f32.mrf.mxu0
        %v936 = vadd.f32 %v424, %v935
        %937 = vmatprep.mubr.f32.mxu0 0.0
        %938 = vmatmul.mubr.f32.gmra.mxu0 %v466
        %v939 = vpop.f32.mrf.mxu0
        %v940 = vadd.f32 %v429, %v939
        %v941 = vpop.f32.mrf.mxu0
        %v942 = vadd.f32 %v429, %v941
        %943 = vdwg.mxu0
        %v944 = vmax.f32 %v922, 0.0
        %v945 = vmax.f32 %v924, 0.0
        %v946 = vmax.f32 %v928, 0.0
        %v947 = vmax.f32 %v930, 0.0
        %v948 = vmax.f32 %v934, 0.0
        %v949 = vmax.f32 %v936, 0.0
        %v950 = vmax.f32 %v940, 0.0
        %v951 = vmax.f32 %v942, 0.0
        %952 = vst [vmem:[#allocation3 + $0x100] sm:$0xff] %v944
        %953 = vst [vmem:[#allocation3 + $0x108] sm:$0xff] %v945
        %954 = vst [vmem:[#allocation3 + $0x110] sm:$0xff] %v946
        %955 = vst [vmem:[#allocation3 + $0x118] sm:$0xff] %v947
        %956 = vst [vmem:[#allocation3 + $0x120] sm:$0xff] %v948
        %957 = vst [vmem:[#allocation3 + $0x128] sm:$0xff] %v949
        %958 = vst [vmem:[#allocation3 + $0x130] sm:$0xff] %v950
        %959 = vst [vmem:[#allocation3 + $0x138] sm:$0xff] %v951
        %v960 = vld [vmem:[#allocation2 + $0x100] sm:$0xff]
        %v961 = vld [vmem:[#allocation2 + $0x108] sm:$0xff]
        %v962 = vld [vmem:[#allocation2 + $0x110] sm:$0xff]
        %v963 = vld [vmem:[#allocation2 + $0x118] sm:$0xff]
        %v964 = vld [vmem:[#allocation2 + $0x120] sm:$0xff]
        %v965 = vld [vmem:[#allocation2 + $0x128] sm:$0xff]
        %v966 = vld [vmem:[#allocation2 + $0x130] sm:$0xff]
        %v967 = vld [vmem:[#allocation2 + $0x138] sm:$0xff]
        %v968 = vld [vmem:[#allocation2 + $0x140] sm:$0xff]
        %v969 = vld [vmem:[#allocation2 + $0x148] sm:$0xff]
        %v970 = vld [vmem:[#allocation2 + $0x150] sm:$0xff]
        %v971 = vld [vmem:[#allocation2 + $0x158] sm:$0xff]
        %v972 = vld [vmem:[#allocation2 + $0x160] sm:$0xff]
        %v973 = vld [vmem:[#allocation2 + $0x168] sm:$0xff]
        %v974 = vld [vmem:[#allocation2 + $0x170] sm:$0xff]
        %v975 = vld [vmem:[#allocation2 + $0x178] sm:$0xff]
        %v976 = vld [vmem:[#allocation2 + $0x180] sm:$0xff]
        %v977 = vld [vmem:[#allocation2 + $0x188] sm:$0xff]
        %v978 = vld [vmem:[#allocation2 + $0x190] sm:$0xff]
        %v979 = vld [vmem:[#allocation2 + $0x198] sm:$0xff]
        %v980 = vld [vmem:[#allocation2 + $0x1a0] sm:$0xff]
        %v981 = vld [vmem:[#allocation2 + $0x1a8] sm:$0xff]
        %v982 = vld [vmem:[#allocation2 + $0x1b0] sm:$0xff]
        %v983 = vld [vmem:[#allocation2 + $0x1b8] sm:$0xff]
        %984 = vmatprep.subr.mxu0 0.0
        %985 = vmatpush1.msra.mxu0 0.0
        %986 = vmatprep.subr.mxu0 0.0
        %987 = vmatpush1.msra.mxu0 0.0
        %988 = vmatprep.subr.mxu0 0.0
        %989 = vmatpush1.msra.mxu0 0.0
        %990 = vmatprep.subr.mxu0 0.0
        %991 = vmatpush1.msra.mxu0 0.0
        %992 = vmatprep.subr.mxu0 %v983
        %993 = vmatpush1.msra.mxu0 %v982
        %994 = vmatprep.subr.mxu0 %v981
        %995 = vmatpush1.msra.mxu0 %v980
        %996 = vmatprep.subr.mxu0 %v979
        %997 = vmatpush1.msra.mxu0 %v978
        %998 = vmatprep.subr.mxu0 %v977
        %999 = vmatpush1.msra.mxu0 %v976
        %1000 = vmatprep.subr.mxu0 %v975
        %1001 = vmatpush1.msra.mxu0 %v974
        %1002 = vmatprep.subr.mxu0 %v973
        %1003 = vmatpush1.msra.mxu0 %v972
        %1004 = vmatprep.subr.mxu0 %v971
        %1005 = vmatpush1.msra.mxu0 %v970
        %1006 = vmatprep.subr.mxu0 %v969
        %1007 = vmatpush1.msra.mxu0 %v968
        %1008 = vmatprep.subr.mxu0 %v967
        %1009 = vmatpush1.msra.mxu0 %v966
        %1010 = vmatprep.subr.mxu0 %v965
        %1011 = vmatpush1.msra.mxu0 %v964
        %1012 = vmatprep.subr.mxu0 %v963
        %1013 = vmatpush1.msra.mxu0 %v962
        %1014 = vmatprep.subr.mxu0 %v961
        %1015 = vmatpush1.msra.mxu0 %v960
        %1016 = vmatprep.subr.mxu0 0.0
        %1017 = vmatpush2.msra.mxu0 0.0
        %1018 = vmatprep.subr.mxu0 0.0
        %1019 = vmatpush2.msra.mxu0 0.0
        %1020 = vmatprep.subr.mxu0 0.0
        %1021 = vmatpush2.msra.mxu0 0.0
        %1022 = vmatprep.subr.mxu0 0.0
        %1023 = vmatpush2.msra.mxu0 0.0
        %1024 = vmatprep.subr.mxu0 0.0
        %1025 = vmatpush2.msra.mxu0 0.0
        %1026 = vmatprep.subr.mxu0 0.0
        %1027 = vmatpush2.msra.mxu0 0.0
        %1028 = vmatprep.subr.mxu0 0.0
        %1029 = vmatpush2.msra.mxu0 0.0
        %1030 = vmatprep.subr.mxu0 0.0
        %1031 = vmatpush2.msra.mxu0 0.0
        %1032 = vmatprep.subr.mxu0 0.0
        %1033 = vmatpush2.msra.mxu0 0.0
        %1034 = vmatprep.subr.mxu0 0.0
        %1035 = vmatpush2.msra.mxu0 0.0
        %1036 = vmatprep.subr.mxu0 0.0
        %1037 = vmatpush2.msra.mxu0 0.0
        %1038 = vmatprep.subr.mxu0 0.0
        %1039 = vmatpush2.msra.mxu0 0.0
        %1040 = vmatprep.subr.mxu0 0.0
        %1041 = vmatpush2.msra.mxu0 0.0
        %1042 = vmatprep.subr.mxu0 0.0
        %1043 = vmatpush2.msra.mxu0 0.0
        %1044 = vmatprep.subr.mxu0 0.0
        %1045 = vmatpush2.msra.mxu0 0.0
        %1046 = vmatprep.subr.mxu0 0.0
        %1047 = vmatpush2.msra.mxu0 0.0
        %1048 = vmatprep.mubr.f32.mxu0 0.0
        %1049 = vmatmul.mubr.f32.gmra.mxu0 %v457
        %v1050 = vpop.f32.mrf.mxu0
        %v1051 = vadd.f32 %v414, %v1050
        %v1052 = vpop.f32.mrf.mxu0
        %v1053 = vadd.f32 %v414, %v1052
        %1054 = vmatprep.mubr.f32.mxu0 0.0
        %1055 = vmatmul.mubr.f32.gmra.mxu0 %v460
        %v1056 = vpop.f32.mrf.mxu0
        %v1057 = vadd.f32 %v419, %v1056
        %v1058 = vpop.f32.mrf.mxu0
        %v1059 = vadd.f32 %v419, %v1058
        %1060 = vmatprep.mubr.f32.mxu0 0.0
        %1061 = vmatmul.mubr.f32.gmra.mxu0 %v463
        %v1062 = vpop.f32.mrf.mxu0
        %v1063 = vadd.f32 %v424, %v1062
        %v1064 = vpop.f32.mrf.mxu0
        %v1065 = vadd.f32 %v424, %v1064
        %1066 = vmatprep.mubr.f32.mxu0 0.0
        %1067 = vmatmul.mubr.f32.gmra.mxu0 %v466
        %v1068 = vpop.f32.mrf.mxu0
        %v1069 = vadd.f32 %v429, %v1068
        %v1070 = vpop.f32.mrf.mxu0
        %v1071 = vadd.f32 %v429, %v1070
        %1072 = vdwg.mxu0
        %v1073 = vmax.f32 %v1051, 0.0
        %v1074 = vmax.f32 %v1053, 0.0
        %v1075 = vmax.f32 %v1057, 0.0
        %v1076 = vmax.f32 %v1059, 0.0
        %v1077 = vmax.f32 %v1063, 0.0
        %v1078 = vmax.f32 %v1065, 0.0
        %v1079 = vmax.f32 %v1069, 0.0
        %v1080 = vmax.f32 %v1071, 0.0
        %1081 = vst [vmem:[#allocation3 + $0x140] sm:$0xff] %v1073
        %1082 = vst [vmem:[#allocation3 + $0x148] sm:$0xff] %v1074
        %1083 = vst [vmem:[#allocation3 + $0x150] sm:$0xff] %v1075
        %1084 = vst [vmem:[#allocation3 + $0x158] sm:$0xff] %v1076
        %1085 = vst [vmem:[#allocation3 + $0x160] sm:$0xff] %v1077
        %1086 = vst [vmem:[#allocation3 + $0x168] sm:$0xff] %v1078
        %1087 = vst [vmem:[#allocation3 + $0x170] sm:$0xff] %v1079
        %1088 = vst [vmem:[#allocation3 + $0x178] sm:$0xff] %v1080
        %v1089 = vld [vmem:[#allocation2 + $0x140] sm:$0xff]
        %v1090 = vld [vmem:[#allocation2 + $0x148] sm:$0xff]
        %v1091 = vld [vmem:[#allocation2 + $0x150] sm:$0xff]
        %v1092 = vld [vmem:[#allocation2 + $0x158] sm:$0xff]
        %v1093 = vld [vmem:[#allocation2 + $0x160] sm:$0xff]
        %v1094 = vld [vmem:[#allocation2 + $0x168] sm:$0xff]
        %v1095 = vld [vmem:[#allocation2 + $0x170] sm:$0xff]
        %v1096 = vld [vmem:[#allocation2 + $0x178] sm:$0xff]
        %v1097 = vld [vmem:[#allocation2 + $0x180] sm:$0xff]
        %v1098 = vld [vmem:[#allocation2 + $0x188] sm:$0xff]
        %v1099 = vld [vmem:[#allocation2 + $0x190] sm:$0xff]
        %v1100 = vld [vmem:[#allocation2 + $0x198] sm:$0xff]
        %v1101 = vld [vmem:[#allocation2 + $0x1a0] sm:$0xff]
        %v1102 = vld [vmem:[#allocation2 + $0x1a8] sm:$0xff]
        %v1103 = vld [vmem:[#allocation2 + $0x1b0] sm:$0xff]
        %v1104 = vld [vmem:[#allocation2 + $0x1b8] sm:$0xff]
        %v1105 = vld [vmem:[#allocation2 + $0x1c0] sm:$0xff]
        %v1106 = vld [vmem:[#allocation2 + $0x1c8] sm:$0xff]
        %v1107 = vld [vmem:[#allocation2 + $0x1d0] sm:$0xff]
        %v1108 = vld [vmem:[#allocation2 + $0x1d8] sm:$0xff]
        %v1109 = vld [vmem:[#allocation2 + $0x1e0] sm:$0xff]
        %v1110 = vld [vmem:[#allocation2 + $0x1e8] sm:$0xff]
        %v1111 = vld [vmem:[#allocation2 + $0x1f0] sm:$0xff]
        %v1112 = vld [vmem:[#allocation2 + $0x1f8] sm:$0xff]
        %1113 = vmatprep.subr.mxu0 0.0
        %1114 = vmatpush1.msra.mxu0 0.0
        %1115 = vmatprep.subr.mxu0 0.0
        %1116 = vmatpush1.msra.mxu0 0.0
        %1117 = vmatprep.subr.mxu0 0.0
        %1118 = vmatpush1.msra.mxu0 0.0
        %1119 = vmatprep.subr.mxu0 0.0
        %1120 = vmatpush1.msra.mxu0 0.0
        %1121 = vmatprep.subr.mxu0 %v1112
        %1122 = vmatpush1.msra.mxu0 %v1111
        %1123 = vmatprep.subr.mxu0 %v1110
        %1124 = vmatpush1.msra.mxu0 %v1109
        %1125 = vmatprep.subr.mxu0 %v1108
        %1126 = vmatpush1.msra.mxu0 %v1107
        %1127 = vmatprep.subr.mxu0 %v1106
        %1128 = vmatpush1.msra.mxu0 %v1105
        %1129 = vmatprep.subr.mxu0 %v1104
        %1130 = vmatpush1.msra.mxu0 %v1103
        %1131 = vmatprep.subr.mxu0 %v1102
        %1132 = vmatpush1.msra.mxu0 %v1101
        %1133 = vmatprep.subr.mxu0 %v1100
        %1134 = vmatpush1.msra.mxu0 %v1099
        %1135 = vmatprep.subr.mxu0 %v1098
        %1136 = vmatpush1.msra.mxu0 %v1097
        %1137 = vmatprep.subr.mxu0 %v1096
        %1138 = vmatpush1.msra.mxu0 %v1095
        %1139 = vmatprep.subr.mxu0 %v1094
        %1140 = vmatpush1.msra.mxu0 %v1093
        %1141 = vmatprep.subr.mxu0 %v1092
        %1142 = vmatpush1.msra.mxu0 %v1091
        %1143 = vmatprep.subr.mxu0 %v1090
        %1144 = vmatpush1.msra.mxu0 %v1089
        %1145 = vmatprep.subr.mxu0 0.0
        %1146 = vmatpush2.msra.mxu0 0.0
        %1147 = vmatprep.subr.mxu0 0.0
        %1148 = vmatpush2.msra.mxu0 0.0
        %1149 = vmatprep.subr.mxu0 0.0
        %1150 = vmatpush2.msra.mxu0 0.0
        %1151 = vmatprep.subr.mxu0 0.0
        %1152 = vmatpush2.msra.mxu0 0.0
        %1153 = vmatprep.subr.mxu0 0.0
        %1154 = vmatpush2.msra.mxu0 0.0
        %1155 = vmatprep.subr.mxu0 0.0
        %1156 = vmatpush2.msra.mxu0 0.0
        %1157 = vmatprep.subr.mxu0 0.0
        %1158 = vmatpush2.msra.mxu0 0.0
        %1159 = vmatprep.subr.mxu0 0.0
        %1160 = vmatpush2.msra.mxu0 0.0
        %1161 = vmatprep.subr.mxu0 0.0
        %1162 = vmatpush2.msra.mxu0 0.0
        %1163 = vmatprep.subr.mxu0 0.0
        %1164 = vmatpush2.msra.mxu0 0.0
        %1165 = vmatprep.subr.mxu0 0.0
        %1166 = vmatpush2.msra.mxu0 0.0
        %1167 = vmatprep.subr.mxu0 0.0
        %1168 = vmatpush2.msra.mxu0 0.0
        %1169 = vmatprep.subr.mxu0 0.0
        %1170 = vmatpush2.msra.mxu0 0.0
        %1171 = vmatprep.subr.mxu0 0.0
        %1172 = vmatpush2.msra.mxu0 0.0
        %1173 = vmatprep.subr.mxu0 0.0
        %1174 = vmatpush2.msra.mxu0 0.0
        %1175 = vmatprep.subr.mxu0 0.0
        %1176 = vmatpush2.msra.mxu0 0.0
        %1177 = vmatprep.mubr.f32.mxu0 0.0
        %1178 = vmatmul.mubr.f32.gmra.mxu0 %v457
        %v1179 = vpop.f32.mrf.mxu0
        %v1180 = vadd.f32 %v414, %v1179
        %v1181 = vpop.f32.mrf.mxu0
        %v1182 = vadd.f32 %v414, %v1181
        %1183 = vmatprep.mubr.f32.mxu0 0.0
        %1184 = vmatmul.mubr.f32.gmra.mxu0 %v460
        %v1185 = vpop.f32.mrf.mxu0
        %v1186 = vadd.f32 %v419, %v1185
        %v1187 = vpop.f32.mrf.mxu0
        %v1188 = vadd.f32 %v419, %v1187
        %1189 = vmatprep.mubr.f32.mxu0 0.0
        %1190 = vmatmul.mubr.f32.gmra.mxu0 %v463
        %v1191 = vpop.f32.mrf.mxu0
        %v1192 = vadd.f32 %v424, %v1191
        %v1193 = vpop.f32.mrf.mxu0
        %v1194 = vadd.f32 %v424, %v1193
        %1195 = vmatprep.mubr.f32.mxu0 0.0
        %1196 = vmatmul.mubr.f32.gmra.mxu0 %v466
        %v1197 = vpop.f32.mrf.mxu0
        %v1198 = vadd.f32 %v429, %v1197
        %v1199 = vpop.f32.mrf.mxu0
        %v1200 = vadd.f32 %v429, %v1199
        %1201 = vdwg.mxu0
        %v1202 = vmax.f32 %v1180, 0.0
        %v1203 = vmax.f32 %v1182, 0.0
        %v1204 = vmax.f32 %v1186, 0.0
        %v1205 = vmax.f32 %v1188, 0.0
        %v1206 = vmax.f32 %v1192, 0.0
        %v1207 = vmax.f32 %v1194, 0.0
        %v1208 = vmax.f32 %v1198, 0.0
        %v1209 = vmax.f32 %v1200, 0.0
        %1210 = vst [vmem:[#allocation3 + $0x180] sm:$0xff] %v1202
        %1211 = vst [vmem:[#allocation3 + $0x188] sm:$0xff] %v1203
        %1212 = vst [vmem:[#allocation3 + $0x190] sm:$0xff] %v1204
        %1213 = vst [vmem:[#allocation3 + $0x198] sm:$0xff] %v1205
        %1214 = vst [vmem:[#allocation3 + $0x1a0] sm:$0xff] %v1206
        %1215 = vst [vmem:[#allocation3 + $0x1a8] sm:$0xff] %v1207
        %1216 = vst [vmem:[#allocation3 + $0x1b0] sm:$0xff] %v1208
        %1217 = vst [vmem:[#allocation3 + $0x1b8] sm:$0xff] %v1209
        %v1218 = vld [vmem:[#allocation2 + $0x180] sm:$0xff]
        %v1219 = vld [vmem:[#allocation2 + $0x188] sm:$0xff]
        %v1220 = vld [vmem:[#allocation2 + $0x190] sm:$0xff]
        %v1221 = vld [vmem:[#allocation2 + $0x198] sm:$0xff]
        %v1222 = vld [vmem:[#allocation2 + $0x1a0] sm:$0xff]
        %v1223 = vld [vmem:[#allocation2 + $0x1a8] sm:$0xff]
        %v1224 = vld [vmem:[#allocation2 + $0x1b0] sm:$0xff]
        %v1225 = vld [vmem:[#allocation2 + $0x1b8] sm:$0xff]
        %v1226 = vld [vmem:[#allocation2 + $0x1c0] sm:$0xff]
        %v1227 = vld [vmem:[#allocation2 + $0x1c8] sm:$0xff]
        %v1228 = vld [vmem:[#allocation2 + $0x1d0] sm:$0xff]
        %v1229 = vld [vmem:[#allocation2 + $0x1d8] sm:$0xff]
        %v1230 = vld [vmem:[#allocation2 + $0x1e0] sm:$0xff]
        %v1231 = vld [vmem:[#allocation2 + $0x1e8] sm:$0xff]
        %v1232 = vld [vmem:[#allocation2 + $0x1f0] sm:$0xff]
        %v1233 = vld [vmem:[#allocation2 + $0x1f8] sm:$0xff]
        %v1234 = vld [vmem:[#allocation2 + $0x200] sm:$0xff]
        %v1235 = vld [vmem:[#allocation2 + $0x208] sm:$0xff]
        %v1236 = vld [vmem:[#allocation2 + $0x210] sm:$0xff]
        %v1237 = vld [vmem:[#allocation2 + $0x218] sm:$0xff]
        %v1238 = vld [vmem:[#allocation2 + $0x220] sm:$0xff]
        %v1239 = vld [vmem:[#allocation2 + $0x228] sm:$0xff]
        %v1240 = vld [vmem:[#allocation2 + $0x230] sm:$0xff]
        %v1241 = vld [vmem:[#allocation2 + $0x238] sm:$0xff]
        %1242 = vmatprep.subr.mxu0 0.0
        %1243 = vmatpush1.msra.mxu0 0.0
        %1244 = vmatprep.subr.mxu0 0.0
        %1245 = vmatpush1.msra.mxu0 0.0
        %1246 = vmatprep.subr.mxu0 0.0
        %1247 = vmatpush1.msra.mxu0 0.0
        %1248 = vmatprep.subr.mxu0 0.0
        %1249 = vmatpush1.msra.mxu0 0.0
        %1250 = vmatprep.subr.mxu0 %v1241
        %1251 = vmatpush1.msra.mxu0 %v1240
        %1252 = vmatprep.subr.mxu0 %v1239
        %1253 = vmatpush1.msra.mxu0 %v1238
        %1254 = vmatprep.subr.mxu0 %v1237
        %1255 = vmatpush1.msra.mxu0 %v1236
        %1256 = vmatprep.subr.mxu0 %v1235
        %1257 = vmatpush1.msra.mxu0 %v1234
        %1258 = vmatprep.subr.mxu0 %v1233
        %1259 = vmatpush1.msra.mxu0 %v1232
        %1260 = vmatprep.subr.mxu0 %v1231
        %1261 = vmatpush1.msra.mxu0 %v1230
        %1262 = vmatprep.subr.mxu0 %v1229
        %1263 = vmatpush1.msra.mxu0 %v1228
        %1264 = vmatprep.subr.mxu0 %v1227
        %1265 = vmatpush1.msra.mxu0 %v1226
        %1266 = vmatprep.subr.mxu0 %v1225
        %1267 = vmatpush1.msra.mxu0 %v1224
        %1268 = vmatprep.subr.mxu0 %v1223
        %1269 = vmatpush1.msra.mxu0 %v1222
        %1270 = vmatprep.subr.mxu0 %v1221
        %1271 = vmatpush1.msra.mxu0 %v1220
        %1272 = vmatprep.subr.mxu0 %v1219
        %1273 = vmatpush1.msra.mxu0 %v1218
        %1274 = vmatprep.subr.mxu0 0.0
        %1275 = vmatpush2.msra.mxu0 0.0
        %1276 = vmatprep.subr.mxu0 0.0
        %1277 = vmatpush2.msra.mxu0 0.0
        %1278 = vmatprep.subr.mxu0 0.0
        %1279 = vmatpush2.msra.mxu0 0.0
        %1280 = vmatprep.subr.mxu0 0.0
        %1281 = vmatpush2.msra.mxu0 0.0
        %1282 = vmatprep.subr.mxu0 0.0
        %1283 = vmatpush2.msra.mxu0 0.0
        %1284 = vmatprep.subr.mxu0 0.0
        %1285 = vmatpush2.msra.mxu0 0.0
        %1286 = vmatprep.subr.mxu0 0.0
        %1287 = vmatpush2.msra.mxu0 0.0
        %1288 = vmatprep.subr.mxu0 0.0
        %1289 = vmatpush2.msra.mxu0 0.0
        %1290 = vmatprep.subr.mxu0 0.0
        %1291 = vmatpush2.msra.mxu0 0.0
        %1292 = vmatprep.subr.mxu0 0.0
        %1293 = vmatpush2.msra.mxu0 0.0
        %1294 = vmatprep.subr.mxu0 0.0
        %1295 = vmatpush2.msra.mxu0 0.0
        %1296 = vmatprep.subr.mxu0 0.0
        %1297 = vmatpush2.msra.mxu0 0.0
        %1298 = vmatprep.subr.mxu0 0.0
        %1299 = vmatpush2.msra.mxu0 0.0
        %1300 = vmatprep.subr.mxu0 0.0
        %1301 = vmatpush2.msra.mxu0 0.0
        %1302 = vmatprep.subr.mxu0 0.0
        %1303 = vmatpush2.msra.mxu0 0.0
        %1304 = vmatprep.subr.mxu0 0.0
        %1305 = vmatpush2.msra.mxu0 0.0
        %1306 = vmatprep.mubr.f32.mxu0 0.0
        %1307 = vmatmul.mubr.f32.gmra.mxu0 %v457
        %v1308 = vpop.f32.mrf.mxu0
        %v1309 = vadd.f32 %v414, %v1308
        %v1310 = vpop.f32.mrf.mxu0
        %v1311 = vadd.f32 %v414, %v1310
        %1312 = vmatprep.mubr.f32.mxu0 0.0
        %1313 = vmatmul.mubr.f32.gmra.mxu0 %v460
        %v1314 = vpop.f32.mrf.mxu0
        %v1315 = vadd.f32 %v419, %v1314
        %v1316 = vpop.f32.mrf.mxu0
        %v1317 = vadd.f32 %v419, %v1316
        %1318 = vmatprep.mubr.f32.mxu0 0.0
        %1319 = vmatmul.mubr.f32.gmra.mxu0 %v463
        %v1320 = vpop.f32.mrf.mxu0
        %v1321 = vadd.f32 %v424, %v1320
        %v1322 = vpop.f32.mrf.mxu0
        %v1323 = vadd.f32 %v424, %v1322
        %1324 = vmatprep.mubr.f32.mxu0 0.0
        %1325 = vmatmul.mubr.f32.gmra.mxu0 %v466
        %v1326 = vpop.f32.mrf.mxu0
        %v1327 = vadd.f32 %v429, %v1326
        %v1328 = vpop.f32.mrf.mxu0
        %v1329 = vadd.f32 %v429, %v1328
        %1330 = vdwg.mxu0
        %v1331 = vmax.f32 %v1309, 0.0
        %v1332 = vmax.f32 %v1311, 0.0
        %v1333 = vmax.f32 %v1315, 0.0
        %v1334 = vmax.f32 %v1317, 0.0
        %v1335 = vmax.f32 %v1321, 0.0
        %v1336 = vmax.f32 %v1323, 0.0
        %v1337 = vmax.f32 %v1327, 0.0
        %v1338 = vmax.f32 %v1329, 0.0
        %1339 = vst [vmem:[#allocation3 + $0x1c0] sm:$0xff] %v1331
        %1340 = vst [vmem:[#allocation3 + $0x1c8] sm:$0xff] %v1332
        %1341 = vst [vmem:[#allocation3 + $0x1d0] sm:$0xff] %v1333
        %1342 = vst [vmem:[#allocation3 + $0x1d8] sm:$0xff] %v1334
        %1343 = vst [vmem:[#allocation3 + $0x1e0] sm:$0xff] %v1335
        %1344 = vst [vmem:[#allocation3 + $0x1e8] sm:$0xff] %v1336
        %1345 = vst [vmem:[#allocation3 + $0x1f0] sm:$0xff] %v1337
        %1346 = vst [vmem:[#allocation3 + $0x1f8] sm:$0xff] %v1338
        %v1347 = vld [vmem:[#allocation2 + $0x1c0] sm:$0xff]
        %v1348 = vld [vmem:[#allocation2 + $0x1c8] sm:$0xff]
        %v1349 = vld [vmem:[#allocation2 + $0x1d0] sm:$0xff]
        %v1350 = vld [vmem:[#allocation2 + $0x1d8] sm:$0xff]
        %v1351 = vld [vmem:[#allocation2 + $0x1e0] sm:$0xff]
        %v1352 = vld [vmem:[#allocation2 + $0x1e8] sm:$0xff]
        %v1353 = vld [vmem:[#allocation2 + $0x1f0] sm:$0xff]
        %v1354 = vld [vmem:[#allocation2 + $0x1f8] sm:$0xff]
        %v1355 = vld [vmem:[#allocation2 + $0x200] sm:$0xff]
        %v1356 = vld [vmem:[#allocation2 + $0x208] sm:$0xff]
        %v1357 = vld [vmem:[#allocation2 + $0x210] sm:$0xff]
        %v1358 = vld [vmem:[#allocation2 + $0x218] sm:$0xff]
        %v1359 = vld [vmem:[#allocation2 + $0x220] sm:$0xff]
        %v1360 = vld [vmem:[#allocation2 + $0x228] sm:$0xff]
        %v1361 = vld [vmem:[#allocation2 + $0x230] sm:$0xff]
        %v1362 = vld [vmem:[#allocation2 + $0x238] sm:$0xff]
        %v1363 = vld [vmem:[#allocation2 + $0x240] sm:$0xff]
        %v1364 = vld [vmem:[#allocation2 + $0x248] sm:$0xff]
        %v1365 = vld [vmem:[#allocation2 + $0x250] sm:$0xff]
        %v1366 = vld [vmem:[#allocation2 + $0x258] sm:$0xff]
        %v1367 = vld [vmem:[#allocation2 + $0x260] sm:$0xff]
        %v1368 = vld [vmem:[#allocation2 + $0x268] sm:$0xff]
        %v1369 = vld [vmem:[#allocation2 + $0x270] sm:$0xff]
        %v1370 = vld [vmem:[#allocation2 + $0x278] sm:$0xff]
        %1371 = vmatprep.subr.mxu0 0.0
        %1372 = vmatpush1.msra.mxu0 0.0
        %1373 = vmatprep.subr.mxu0 0.0
        %1374 = vmatpush1.msra.mxu0 0.0
        %1375 = vmatprep.subr.mxu0 0.0
        %1376 = vmatpush1.msra.mxu0 0.0
        %1377 = vmatprep.subr.mxu0 0.0
        %1378 = vmatpush1.msra.mxu0 0.0
        %1379 = vmatprep.subr.mxu0 %v1370
        %1380 = vmatpush1.msra.mxu0 %v1369
        %1381 = vmatprep.subr.mxu0 %v1368
        %1382 = vmatpush1.msra.mxu0 %v1367
        %1383 = vmatprep.subr.mxu0 %v1366
        %1384 = vmatpush1.msra.mxu0 %v1365
        %1385 = vmatprep.subr.mxu0 %v1364
        %1386 = vmatpush1.msra.mxu0 %v1363
        %1387 = vmatprep.subr.mxu0 %v1362
        %1388 = vmatpush1.msra.mxu0 %v1361
        %1389 = vmatprep.subr.mxu0 %v1360
        %1390 = vmatpush1.msra.mxu0 %v1359
        %1391 = vmatprep.subr.mxu0 %v1358
        %1392 = vmatpush1.msra.mxu0 %v1357
        %1393 = vmatprep.subr.mxu0 %v1356
        %1394 = vmatpush1.msra.mxu0 %v1355
        %1395 = vmatprep.subr.mxu0 %v1354
        %1396 = vmatpush1.msra.mxu0 %v1353
        %1397 = vmatprep.subr.mxu0 %v1352
        %1398 = vmatpush1.msra.mxu0 %v1351
        %1399 = vmatprep.subr.mxu0 %v1350
        %1400 = vmatpush1.msra.mxu0 %v1349
        %1401 = vmatprep.subr.mxu0 %v1348
        %1402 = vmatpush1.msra.mxu0 %v1347
        %1403 = vmatprep.subr.mxu0 0.0
        %1404 = vmatpush2.msra.mxu0 0.0
        %1405 = vmatprep.subr.mxu0 0.0
        %1406 = vmatpush2.msra.mxu0 0.0
        %1407 = vmatprep.subr.mxu0 0.0
        %1408 = vmatpush2.msra.mxu0 0.0
        %1409 = vmatprep.subr.mxu0 0.0
        %1410 = vmatpush2.msra.mxu0 0.0
        %1411 = vmatprep.subr.mxu0 0.0
        %1412 = vmatpush2.msra.mxu0 0.0
        %1413 = vmatprep.subr.mxu0 0.0
        %1414 = vmatpush2.msra.mxu0 0.0
        %1415 = vmatprep.subr.mxu0 0.0
        %1416 = vmatpush2.msra.mxu0 0.0
        %1417 = vmatprep.subr.mxu0 0.0
        %1418 = vmatpush2.msra.mxu0 0.0
        %1419 = vmatprep.subr.mxu0 0.0
        %1420 = vmatpush2.msra.mxu0 0.0
        %1421 = vmatprep.subr.mxu0 0.0
        %1422 = vmatpush2.msra.mxu0 0.0
        %1423 = vmatprep.subr.mxu0 0.0
        %1424 = vmatpush2.msra.mxu0 0.0
        %1425 = vmatprep.subr.mxu0 0.0
        %1426 = vmatpush2.msra.mxu0 0.0
        %1427 = vmatprep.subr.mxu0 0.0
        %1428 = vmatpush2.msra.mxu0 0.0
        %1429 = vmatprep.subr.mxu0 0.0
        %1430 = vmatpush2.msra.mxu0 0.0
        %1431 = vmatprep.subr.mxu0 0.0
        %1432 = vmatpush2.msra.mxu0 0.0
        %1433 = vmatprep.subr.mxu0 0.0
        %1434 = vmatpush2.msra.mxu0 0.0
        %1435 = vmatprep.mubr.f32.mxu0 0.0
        %1436 = vmatmul.mubr.f32.gmra.mxu0 %v457
        %v1437 = vpop.f32.mrf.mxu0
        %v1438 = vadd.f32 %v414, %v1437
        %v1439 = vpop.f32.mrf.mxu0
        %v1440 = vadd.f32 %v414, %v1439
        %1441 = vmatprep.mubr.f32.mxu0 0.0
        %1442 = vmatmul.mubr.f32.gmra.mxu0 %v460
        %v1443 = vpop.f32.mrf.mxu0
        %v1444 = vadd.f32 %v419, %v1443
        %v1445 = vpop.f32.mrf.mxu0
        %v1446 = vadd.f32 %v419, %v1445
        %1447 = vmatprep.mubr.f32.mxu0 0.0
        %1448 = vmatmul.mubr.f32.gmra.mxu0 %v463
        %v1449 = vpop.f32.mrf.mxu0
        %v1450 = vadd.f32 %v424, %v1449
        %v1451 = vpop.f32.mrf.mxu0
        %v1452 = vadd.f32 %v424, %v1451
        %1453 = vmatprep.mubr.f32.mxu0 0.0
        %1454 = vmatmul.mubr.f32.gmra.mxu0 %v466
        %v1455 = vpop.f32.mrf.mxu0
        %v1456 = vadd.f32 %v429, %v1455
        %v1457 = vpop.f32.mrf.mxu0
        %v1458 = vadd.f32 %v429, %v1457
        %1459 = vdwg.mxu0
        %v1460 = vmax.f32 %v1438, 0.0
        %v1461 = vmax.f32 %v1440, 0.0
        %v1462 = vmax.f32 %v1444, 0.0
        %v1463 = vmax.f32 %v1446, 0.0
        %v1464 = vmax.f32 %v1450, 0.0
        %v1465 = vmax.f32 %v1452, 0.0
        %v1466 = vmax.f32 %v1456, 0.0
        %v1467 = vmax.f32 %v1458, 0.0
        %1468 = vst [vmem:[#allocation3 + $0x200] sm:$0xff] %v1460
        %1469 = vst [vmem:[#allocation3 + $0x208] sm:$0xff] %v1461
        %1470 = vst [vmem:[#allocation3 + $0x210] sm:$0xff] %v1462
        %1471 = vst [vmem:[#allocation3 + $0x218] sm:$0xff] %v1463
        %1472 = vst [vmem:[#allocation3 + $0x220] sm:$0xff] %v1464
        %1473 = vst [vmem:[#allocation3 + $0x228] sm:$0xff] %v1465
        %1474 = vst [vmem:[#allocation3 + $0x230] sm:$0xff] %v1466
        %1475 = vst [vmem:[#allocation3 + $0x238] sm:$0xff] %v1467
        %v1476 = vld [vmem:[%s3] sm:$0xff]
        %v1477 = vld [vmem:[%s3 + $0x8] sm:$0xff]
        %v1478 = vld [vmem:[%s3 + $0x10] sm:$0xff]
        %v1479 = vld [vmem:[%s3 + $0x18] sm:$0xff]
        %v1480 = vld [vmem:[%s4] sm:$0xff]
        %v1481 = vld [vmem:[%s4 + $0x8] sm:$0xff]
        %v1482 = vld [vmem:[%s4 + $0x10] sm:$0xff]
        %v1483 = vld [vmem:[%s4 + $0x18] sm:$0xff]
        %1485 = vset.pattern.permute.xlu0 0
        %1486 = vperm.xlu0 %1485, %v1480
        %v1487 = vpop.permute.xlu0 %1486
        %1490 = vset.pattern.permute.xlu0 0
        %1491 = vperm.xlu0 %1490, %v1481
        %v1492 = vpop.permute.xlu0 %1491
        %1495 = vset.pattern.permute.xlu0 0
        %1496 = vperm.xlu0 %1495, %v1482
        %v1497 = vpop.permute.xlu0 %1496
        %1500 = vset.pattern.permute.xlu0 0
        %1501 = vperm.xlu0 %1500, %v1483
        %v1502 = vpop.permute.xlu0 %1501
        %v1504 = vld [vmem:[#allocation3] sm:$0xff]
        %v1505 = vld [vmem:[#allocation3 + $0x8] sm:$0xff]
        %v1506 = vld [vmem:[#allocation3 + $0x10] sm:$0xff]
        %v1507 = vld [vmem:[#allocation3 + $0x18] sm:$0xff]
        %v1508 = vld [vmem:[#allocation3 + $0x20] sm:$0xff]
        %v1509 = vld [vmem:[#allocation3 + $0x28] sm:$0xff]
        %v1510 = vld [vmem:[#allocation3 + $0x30] sm:$0xff]
        %v1511 = vld [vmem:[#allocation3 + $0x38] sm:$0xff]
        %v1512 = vld [vmem:[#allocation3 + $0x40] sm:$0xff]
        %v1513 = vld [vmem:[#allocation3 + $0x48] sm:$0xff]
        %v1514 = vld [vmem:[#allocation3 + $0x50] sm:$0xff]
        %v1515 = vld [vmem:[#allocation3 + $0x58] sm:$0xff]
        %v1516 = vld [vmem:[#allocation3 + $0x60] sm:$0xff]
        %v1517 = vld [vmem:[#allocation3 + $0x68] sm:$0xff]
        %v1518 = vld [vmem:[#allocation3 + $0x70] sm:$0xff]
        %v1519 = vld [vmem:[#allocation3 + $0x78] sm:$0xff]
        %v1520 = vld [vmem:[#allocation3 + $0x80] sm:$0xff]
        %v1521 = vld [vmem:[#allocation3 + $0x88] sm:$0xff]
        %v1522 = vld [vmem:[#allocation3 + $0x90] sm:$0xff]
        %v1523 = vld [vmem:[#allocation3 + $0x98] sm:$0xff]
        %v1524 = vld [vmem:[#allocation3 + $0xa0] sm:$0xff]
        %v1525 = vld [vmem:[#allocation3 + $0xa8] sm:$0xff]
        %v1526 = vld [vmem:[#allocation3 + $0xb0] sm:$0xff]
        %v1527 = vld [vmem:[#allocation3 + $0xb8] sm:$0xff]
        %v1529 = vsel %vm455, %v1476, 0
        %v1532 = vsel %vm455, %v1477, 0
        %v1535 = vsel %vm455, %v1478, 0
        %v1538 = vsel %vm455, %v1479, 0
        %1540 = vmatprep.subr.mxu0 0.0
        %1541 = vmatpush1.msra.mxu0 0.0
        %1542 = vmatprep.subr.mxu0 0.0
        %1543 = vmatpush1.msra.mxu0 0.0
        %1544 = vmatprep.subr.mxu0 0.0
        %1545 = vmatpush1.msra.mxu0 0.0
        %1546 = vmatprep.subr.mxu0 0.0
        %1547 = vmatpush1.msra.mxu0 0.0
        %1548 = vmatprep.subr.mxu0 %v1527
        %1549 = vmatpush1.msra.mxu0 %v1526
        %1550 = vmatprep.subr.mxu0 %v1525
        %1551 = vmatpush1.msra.mxu0 %v1524
        %1552 = vmatprep.subr.mxu0 %v1523
        %1553 = vmatpush1.msra.mxu0 %v1522
        %1554 = vmatprep.subr.mxu0 %v1521
        %1555 = vmatpush1.msra.mxu0 %v1520
        %1556 = vmatprep.subr.mxu0 %v1519
        %1557 = vmatpush1.msra.mxu0 %v1518
        %1558 = vmatprep.subr.mxu0 %v1517
        %1559 = vmatpush1.msra.mxu0 %v1516
        %1560 = vmatprep.subr.mxu0 %v1515
        %1561 = vmatpush1.msra.mxu0 %v1514
        %1562 = vmatprep.subr.mxu0 %v1513
        %1563 = vmatpush1.msra.mxu0 %v1512
        %1564 = vmatprep.subr.mxu0 %v1511
        %1565 = vmatpush1.msra.mxu0 %v1510
        %1566 = vmatprep.subr.mxu0 %v1509
        %1567 = vmatpush1.msra.mxu0 %v1508
        %1568 = vmatprep.subr.mxu0 %v1507
        %1569 = vmatpush1.msra.mxu0 %v1506
        %1570 = vmatprep.subr.mxu0 %v1505
        %1571 = vmatpush1.msra.mxu0 %v1504
        %1572 = vmatprep.subr.mxu0 0.0
        %1573 = vmatpush2.msra.mxu0 0.0
        %1574 = vmatprep.subr.mxu0 0.0
        %1575 = vmatpush2.msra.mxu0 0.0
        %1576 = vmatprep.subr.mxu0 0.0
        %1577 = vmatpush2.msra.mxu0 0.0
        %1578 = vmatprep.subr.mxu0 0.0
        %1579 = vmatpush2.msra.mxu0 0.0
        %1580 = vmatprep.subr.mxu0 0.0
        %1581 = vmatpush2.msra.mxu0 0.0
        %1582 = vmatprep.subr.mxu0 0.0
        %1583 = vmatpush2.msra.mxu0 0.0
        %1584 = vmatprep.subr.mxu0 0.0
        %1585 = vmatpush2.msra.mxu0 0.0
        %1586 = vmatprep.subr.mxu0 0.0
        %1587 = vmatpush2.msra.mxu0 0.0
        %1588 = vmatprep.subr.mxu0 0.0
        %1589 = vmatpush2.msra.mxu0 0.0
        %1590 = vmatprep.subr.mxu0 0.0
        %1591 = vmatpush2.msra.mxu0 0.0
        %1592 = vmatprep.subr.mxu0 0.0
        %1593 = vmatpush2.msra.mxu0 0.0
        %1594 = vmatprep.subr.mxu0 0.0
        %1595 = vmatpush2.msra.mxu0 0.0
        %1596 = vmatprep.subr.mxu0 0.0
        %1597 = vmatpush2.msra.mxu0 0.0
        %1598 = vmatprep.subr.mxu0 0.0
        %1599 = vmatpush2.msra.mxu0 0.0
        %1600 = vmatprep.subr.mxu0 0.0
        %1601 = vmatpush2.msra.mxu0 0.0
        %1602 = vmatprep.subr.mxu0 0.0
        %1603 = vmatpush2.msra.mxu0 0.0
        %1604 = vmatprep.mubr.f32.mxu0 0.0
        %1605 = vmatmul.mubr.f32.gmra.mxu0 %v1529
        %v1606 = vpop.f32.mrf.mxu0
        %v1607 = vadd.f32 %v1487, %v1606
        %v1608 = vpop.f32.mrf.mxu0
        %v1609 = vadd.f32 %v1487, %v1608
        %1610 = vmatprep.mubr.f32.mxu0 0.0
        %1611 = vmatmul.mubr.f32.gmra.mxu0 %v1532
        %v1612 = vpop.f32.mrf.mxu0
        %v1613 = vadd.f32 %v1492, %v1612
        %v1614 = vpop.f32.mrf.mxu0
        %v1615 = vadd.f32 %v1492, %v1614
        %1616 = vmatprep.mubr.f32.mxu0 0.0
        %1617 = vmatmul.mubr.f32.gmra.mxu0 %v1535
        %v1618 = vpop.f32.mrf.mxu0
        %v1619 = vadd.f32 %v1497, %v1618
        %v1620 = vpop.f32.mrf.mxu0
        %v1621 = vadd.f32 %v1497, %v1620
        %1622 = vmatprep.mubr.f32.mxu0 0.0
        %1623 = vmatmul.mubr.f32.gmra.mxu0 %v1538
        %v1624 = vpop.f32.mrf.mxu0
        %v1625 = vadd.f32 %v1502, %v1624
        %v1626 = vpop.f32.mrf.mxu0
        %v1627 = vadd.f32 %v1502, %v1626
        %1628 = vdwg.mxu0
        %1629 = vst [vmem:[%s242] sm:$0xff] %v1607
        %1630 = vst [vmem:[%s242 + $0x8] sm:$0xff] %v1609
        %1631 = vst [vmem:[%s242 + $0x10] sm:$0xff] %v1613
        %1632 = vst [vmem:[%s242 + $0x18] sm:$0xff] %v1615
        %1633 = vst [vmem:[%s242 + $0x20] sm:$0xff] %v1619
        %1634 = vst [vmem:[%s242 + $0x28] sm:$0xff] %v1621
        %1635 = vst [vmem:[%s242 + $0x30] sm:$0xff] %v1625
        %1636 = vst [vmem:[%s242 + $0x38] sm:$0xff] %v1627
        %v1637 = vld [vmem:[#allocation3 + $0x40] sm:$0xff]
        %v1638 = vld [vmem:[#allocation3 + $0x48] sm:$0xff]
        %v1639 = vld [vmem:[#allocation3 + $0x50] sm:$0xff]
        %v1640 = vld [vmem:[#allocation3 + $0x58] sm:$0xff]
        %v1641 = vld [vmem:[#allocation3 + $0x60] sm:$0xff]
        %v1642 = vld [vmem:[#allocation3 + $0x68] sm:$0xff]
        %v1643 = vld [vmem:[#allocation3 + $0x70] sm:$0xff]
        %v1644 = vld [vmem:[#allocation3 + $0x78] sm:$0xff]
        %v1645 = vld [vmem:[#allocation3 + $0x80] sm:$0xff]
        %v1646 = vld [vmem:[#allocation3 + $0x88] sm:$0xff]
        %v1647 = vld [vmem:[#allocation3 + $0x90] sm:$0xff]
        %v1648 = vld [vmem:[#allocation3 + $0x98] sm:$0xff]
        %v1649 = vld [vmem:[#allocation3 + $0xa0] sm:$0xff]
        %v1650 = vld [vmem:[#allocation3 + $0xa8] sm:$0xff]
        %v1651 = vld [vmem:[#allocation3 + $0xb0] sm:$0xff]
        %v1652 = vld [vmem:[#allocation3 + $0xb8] sm:$0xff]
        %v1653 = vld [vmem:[#allocation3 + $0xc0] sm:$0xff]
        %v1654 = vld [vmem:[#allocation3 + $0xc8] sm:$0xff]
        %v1655 = vld [vmem:[#allocation3 + $0xd0] sm:$0xff]
        %v1656 = vld [vmem:[#allocation3 + $0xd8] sm:$0xff]
        %v1657 = vld [vmem:[#allocation3 + $0xe0] sm:$0xff]
        %v1658 = vld [vmem:[#allocation3 + $0xe8] sm:$0xff]
        %v1659 = vld [vmem:[#allocation3 + $0xf0] sm:$0xff]
        %v1660 = vld [vmem:[#allocation3 + $0xf8] sm:$0xff]
        %1661 = vmatprep.subr.mxu0 0.0
        %1662 = vmatpush1.msra.mxu0 0.0
        %1663 = vmatprep.subr.mxu0 0.0
        %1664 = vmatpush1.msra.mxu0 0.0
        %1665 = vmatprep.subr.mxu0 0.0
        %1666 = vmatpush1.msra.mxu0 0.0
        %1667 = vmatprep.subr.mxu0 0.0
        %1668 = vmatpush1.msra.mxu0 0.0
        %1669 = vmatprep.subr.mxu0 %v1660
        %1670 = vmatpush1.msra.mxu0 %v1659
        %1671 = vmatprep.subr.mxu0 %v1658
        %1672 = vmatpush1.msra.mxu0 %v1657
        %1673 = vmatprep.subr.mxu0 %v1656
        %1674 = vmatpush1.msra.mxu0 %v1655
        %1675 = vmatprep.subr.mxu0 %v1654
        %1676 = vmatpush1.msra.mxu0 %v1653
        %1677 = vmatprep.subr.mxu0 %v1652
        %1678 = vmatpush1.msra.mxu0 %v1651
        %1679 = vmatprep.subr.mxu0 %v1650
        %1680 = vmatpush1.msra.mxu0 %v1649
        %1681 = vmatprep.subr.mxu0 %v1648
        %1682 = vmatpush1.msra.mxu0 %v1647
        %1683 = vmatprep.subr.mxu0 %v1646
        %1684 = vmatpush1.msra.mxu0 %v1645
        %1685 = vmatprep.subr.mxu0 %v1644
        %1686 = vmatpush1.msra.mxu0 %v1643
        %1687 = vmatprep.subr.mxu0 %v1642
        %1688 = vmatpush1.msra.mxu0 %v1641
        %1689 = vmatprep.subr.mxu0 %v1640
        %1690 = vmatpush1.msra.mxu0 %v1639
        %1691 = vmatprep.subr.mxu0 %v1638
        %1692 = vmatpush1.msra.mxu0 %v1637
        %1693 = vmatprep.subr.mxu0 0.0
        %1694 = vmatpush2.msra.mxu0 0.0
        %1695 = vmatprep.subr.mxu0 0.0
        %1696 = vmatpush2.msra.mxu0 0.0
        %1697 = vmatprep.subr.mxu0 0.0
        %1698 = vmatpush2.msra.mxu0 0.0
        %1699 = vmatprep.subr.mxu0 0.0
        %1700 = vmatpush2.msra.mxu0 0.0
        %1701 = vmatprep.subr.mxu0 0.0
        %1702 = vmatpush2.msra.mxu0 0.0
        %1703 = vmatprep.subr.mxu0 0.0
        %1704 = vmatpush2.msra.mxu0 0.0
        %1705 = vmatprep.subr.mxu0 0.0
        %1706 = vmatpush2.msra.mxu0 0.0
        %1707 = vmatprep.subr.mxu0 0.0
        %1708 = vmatpush2.msra.mxu0 0.0
        %1709 = vmatprep.subr.mxu0 0.0
        %1710 = vmatpush2.msra.mxu0 0.0
        %1711 = vmatprep.subr.mxu0 0.0
        %1712 = vmatpush2.msra.mxu0 0.0
        %1713 = vmatprep.subr.mxu0 0.0
        %1714 = vmatpush2.msra.mxu0 0.0
        %1715 = vmatprep.subr.mxu0 0.0
        %1716 = vmatpush2.msra.mxu0 0.0
        %1717 = vmatprep.subr.mxu0 0.0
        %1718 = vmatpush2.msra.mxu0 0.0
        %1719 = vmatprep.subr.mxu0 0.0
        %1720 = vmatpush2.msra.mxu0 0.0
        %1721 = vmatprep.subr.mxu0 0.0
        %1722 = vmatpush2.msra.mxu0 0.0
        %1723 = vmatprep.subr.mxu0 0.0
        %1724 = vmatpush2.msra.mxu0 0.0
        %1725 = vmatprep.mubr.f32.mxu0 0.0
        %1726 = vmatmul.mubr.f32.gmra.mxu0 %v1529
        %v1727 = vpop.f32.mrf.mxu0
        %v1728 = vadd.f32 %v1487, %v1727
        %v1729 = vpop.f32.mrf.mxu0
        %v1730 = vadd.f32 %v1487, %v1729
        %1731 = vmatprep.mubr.f32.mxu0 0.0
        %1732 = vmatmul.mubr.f32.gmra.mxu0 %v1532
        %v1733 = vpop.f32.mrf.mxu0
        %v1734 = vadd.f32 %v1492, %v1733
        %v1735 = vpop.f32.mrf.mxu0
        %v1736 = vadd.f32 %v1492, %v1735
        %1737 = vmatprep.mubr.f32.mxu0 0.0
        %1738 = vmatmul.mubr.f32.gmra.mxu0 %v1535
        %v1739 = vpop.f32.mrf.mxu0
        %v1740 = vadd.f32 %v1497, %v1739
        %v1741 = vpop.f32.mrf.mxu0
        %v1742 = vadd.f32 %v1497, %v1741
        %1743 = vmatprep.mubr.f32.mxu0 0.0
        %1744 = vmatmul.mubr.f32.gmra.mxu0 %v1538
        %v1745 = vpop.f32.mrf.mxu0
        %v1746 = vadd.f32 %v1502, %v1745
        %v1747 = vpop.f32.mrf.mxu0
        %v1748 = vadd.f32 %v1502, %v1747
        %1749 = vdwg.mxu0
        %1750 = vst [vmem:[%s242 + $0x40] sm:$0xff] %v1728
        %1751 = vst [vmem:[%s242 + $0x48] sm:$0xff] %v1730
        %1752 = vst [vmem:[%s242 + $0x50] sm:$0xff] %v1734
        %1753 = vst [vmem:[%s242 + $0x58] sm:$0xff] %v1736
        %1754 = vst [vmem:[%s242 + $0x60] sm:$0xff] %v1740
        %1755 = vst [vmem:[%s242 + $0x68] sm:$0xff] %v1742
        %1756 = vst [vmem:[%s242 + $0x70] sm:$0xff] %v1746
        %1757 = vst [vmem:[%s242 + $0x78] sm:$0xff] %v1748
        %v1758 = vld [vmem:[#allocation3 + $0x80] sm:$0xff]
        %v1759 = vld [vmem:[#allocation3 + $0x88] sm:$0xff]
        %v1760 = vld [vmem:[#allocation3 + $0x90] sm:$0xff]
        %v1761 = vld [vmem:[#allocation3 + $0x98] sm:$0xff]
        %v1762 = vld [vmem:[#allocation3 + $0xa0] sm:$0xff]
        %v1763 = vld [vmem:[#allocation3 + $0xa8] sm:$0xff]
        %v1764 = vld [vmem:[#allocation3 + $0xb0] sm:$0xff]
        %v1765 = vld [vmem:[#allocation3 + $0xb8] sm:$0xff]
        %v1766 = vld [vmem:[#allocation3 + $0xc0] sm:$0xff]
        %v1767 = vld [vmem:[#allocation3 + $0xc8] sm:$0xff]
        %v1768 = vld [vmem:[#allocation3 + $0xd0] sm:$0xff]
        %v1769 = vld [vmem:[#allocation3 + $0xd8] sm:$0xff]
        %v1770 = vld [vmem:[#allocation3 + $0xe0] sm:$0xff]
        %v1771 = vld [vmem:[#allocation3 + $0xe8] sm:$0xff]
        %v1772 = vld [vmem:[#allocation3 + $0xf0] sm:$0xff]
        %v1773 = vld [vmem:[#allocation3 + $0xf8] sm:$0xff]
        %v1774 = vld [vmem:[#allocation3 + $0x100] sm:$0xff]
        %v1775 = vld [vmem:[#allocation3 + $0x108] sm:$0xff]
        %v1776 = vld [vmem:[#allocation3 + $0x110] sm:$0xff]
        %v1777 = vld [vmem:[#allocation3 + $0x118] sm:$0xff]
        %v1778 = vld [vmem:[#allocation3 + $0x120] sm:$0xff]
        %v1779 = vld [vmem:[#allocation3 + $0x128] sm:$0xff]
        %v1780 = vld [vmem:[#allocation3 + $0x130] sm:$0xff]
        %v1781 = vld [vmem:[#allocation3 + $0x138] sm:$0xff]
        %1782 = vmatprep.subr.mxu0 0.0
        %1783 = vmatpush1.msra.mxu0 0.0
        %1784 = vmatprep.subr.mxu0 0.0
        %1785 = vmatpush1.msra.mxu0 0.0
        %1786 = vmatprep.subr.mxu0 0.0
        %1787 = vmatpush1.msra.mxu0 0.0
        %1788 = vmatprep.subr.mxu0 0.0
        %1789 = vmatpush1.msra.mxu0 0.0
        %1790 = vmatprep.subr.mxu0 %v1781
        %1791 = vmatpush1.msra.mxu0 %v1780
        %1792 = vmatprep.subr.mxu0 %v1779
        %1793 = vmatpush1.msra.mxu0 %v1778
        %1794 = vmatprep.subr.mxu0 %v1777
        %1795 = vmatpush1.msra.mxu0 %v1776
        %1796 = vmatprep.subr.mxu0 %v1775
        %1797 = vmatpush1.msra.mxu0 %v1774
        %1798 = vmatprep.subr.mxu0 %v1773
        %1799 = vmatpush1.msra.mxu0 %v1772
        %1800 = vmatprep.subr.mxu0 %v1771
        %1801 = vmatpush1.msra.mxu0 %v1770
        %1802 = vmatprep.subr.mxu0 %v1769
        %1803 = vmatpush1.msra.mxu0 %v1768
        %1804 = vmatprep.subr.mxu0 %v1767
        %1805 = vmatpush1.msra.mxu0 %v1766
        %1806 = vmatprep.subr.mxu0 %v1765
        %1807 = vmatpush1.msra.mxu0 %v1764
        %1808 = vmatprep.subr.mxu0 %v1763
        %1809 = vmatpush1.msra.mxu0 %v1762
        %1810 = vmatprep.subr.mxu0 %v1761
        %1811 = vmatpush1.msra.mxu0 %v1760
        %1812 = vmatprep.subr.mxu0 %v1759
        %1813 = vmatpush1.msra.mxu0 %v1758
        %1814 = vmatprep.subr.mxu0 0.0
        %1815 = vmatpush2.msra.mxu0 0.0
        %1816 = vmatprep.subr.mxu0 0.0
        %1817 = vmatpush2.msra.mxu0 0.0
        %1818 = vmatprep.subr.mxu0 0.0
        %1819 = vmatpush2.msra.mxu0 0.0
        %1820 = vmatprep.subr.mxu0 0.0
        %1821 = vmatpush2.msra.mxu0 0.0
        %1822 = vmatprep.subr.mxu0 0.0
        %1823 = vmatpush2.msra.mxu0 0.0
        %1824 = vmatprep.subr.mxu0 0.0
        %1825 = vmatpush2.msra.mxu0 0.0
        %1826 = vmatprep.subr.mxu0 0.0
        %1827 = vmatpush2.msra.mxu0 0.0
        %1828 = vmatprep.subr.mxu0 0.0
        %1829 = vmatpush2.msra.mxu0 0.0
        %1830 = vmatprep.subr.mxu0 0.0
        %1831 = vmatpush2.msra.mxu0 0.0
        %1832 = vmatprep.subr.mxu0 0.0
        %1833 = vmatpush2.msra.mxu0 0.0
        %1834 = vmatprep.subr.mxu0 0.0
        %1835 = vmatpush2.msra.mxu0 0.0
        %1836 = vmatprep.subr.mxu0 0.0
        %1837 = vmatpush2.msra.mxu0 0.0
        %1838 = vmatprep.subr.mxu0 0.0
        %1839 = vmatpush2.msra.mxu0 0.0
        %1840 = vmatprep.subr.mxu0 0.0
        %1841 = vmatpush2.msra.mxu0 0.0
        %1842 = vmatprep.subr.mxu0 0.0
        %1843 = vmatpush2.msra.mxu0 0.0
        %1844 = vmatprep.subr.mxu0 0.0
        %1845 = vmatpush2.msra.mxu0 0.0
        %1846 = vmatprep.mubr.f32.mxu0 0.0
        %1847 = vmatmul.mubr.f32.gmra.mxu0 %v1529
        %v1848 = vpop.f32.mrf.mxu0
        %v1849 = vadd.f32 %v1487, %v1848
        %v1850 = vpop.f32.mrf.mxu0
        %v1851 = vadd.f32 %v1487, %v1850
        %1852 = vmatprep.mubr.f32.mxu0 0.0
        %1853 = vmatmul.mubr.f32.gmra.mxu0 %v1532
        %v1854 = vpop.f32.mrf.mxu0
        %v1855 = vadd.f32 %v1492, %v1854
        %v1856 = vpop.f32.mrf.mxu0
        %v1857 = vadd.f32 %v1492, %v1856
        %1858 = vmatprep.mubr.f32.mxu0 0.0
        %1859 = vmatmul.mubr.f32.gmra.mxu0 %v1535
        %v1860 = vpop.f32.mrf.mxu0
        %v1861 = vadd.f32 %v1497, %v1860
        %v1862 = vpop.f32.mrf.mxu0
        %v1863 = vadd.f32 %v1497, %v1862
        %1864 = vmatprep.mubr.f32.mxu0 0.0
        %1865 = vmatmul.mubr.f32.gmra.mxu0 %v1538
        %v1866 = vpop.f32.mrf.mxu0
        %v1867 = vadd.f32 %v1502, %v1866
        %v1868 = vpop.f32.mrf.mxu0
        %v1869 = vadd.f32 %v1502, %v1868
        %1870 = vdwg.mxu0
        %1871 = vst [vmem:[%s242 + $0x80] sm:$0xff] %v1849
        %1872 = vst [vmem:[%s242 + $0x88] sm:$0xff] %v1851
        %1873 = vst [vmem:[%s242 + $0x90] sm:$0xff] %v1855
        %1874 = vst [vmem:[%s242 + $0x98] sm:$0xff] %v1857
        %1875 = vst [vmem:[%s242 + $0xa0] sm:$0xff] %v1861
        %1876 = vst [vmem:[%s242 + $0xa8] sm:$0xff] %v1863
        %1877 = vst [vmem:[%s242 + $0xb0] sm:$0xff] %v1867
        %1878 = vst [vmem:[%s242 + $0xb8] sm:$0xff] %v1869
        %v1879 = vld [vmem:[#allocation3 + $0xc0] sm:$0xff]
        %v1880 = vld [vmem:[#allocation3 + $0xc8] sm:$0xff]
        %v1881 = vld [vmem:[#allocation3 + $0xd0] sm:$0xff]
        %v1882 = vld [vmem:[#allocation3 + $0xd8] sm:$0xff]
        %v1883 = vld [vmem:[#allocation3 + $0xe0] sm:$0xff]
        %v1884 = vld [vmem:[#allocation3 + $0xe8] sm:$0xff]
        %v1885 = vld [vmem:[#allocation3 + $0xf0] sm:$0xff]
        %v1886 = vld [vmem:[#allocation3 + $0xf8] sm:$0xff]
        %v1887 = vld [vmem:[#allocation3 + $0x100] sm:$0xff]
        %v1888 = vld [vmem:[#allocation3 + $0x108] sm:$0xff]
        %v1889 = vld [vmem:[#allocation3 + $0x110] sm:$0xff]
        %v1890 = vld [vmem:[#allocation3 + $0x118] sm:$0xff]
        %v1891 = vld [vmem:[#allocation3 + $0x120] sm:$0xff]
        %v1892 = vld [vmem:[#allocation3 + $0x128] sm:$0xff]
        %v1893 = vld [vmem:[#allocation3 + $0x130] sm:$0xff]
        %v1894 = vld [vmem:[#allocation3 + $0x138] sm:$0xff]
        %v1895 = vld [vmem:[#allocation3 + $0x140] sm:$0xff]
        %v1896 = vld [vmem:[#allocation3 + $0x148] sm:$0xff]
        %v1897 = vld [vmem:[#allocation3 + $0x150] sm:$0xff]
        %v1898 = vld [vmem:[#allocation3 + $0x158] sm:$0xff]
        %v1899 = vld [vmem:[#allocation3 + $0x160] sm:$0xff]
        %v1900 = vld [vmem:[#allocation3 + $0x168] sm:$0xff]
        %v1901 = vld [vmem:[#allocation3 + $0x170] sm:$0xff]
        %v1902 = vld [vmem:[#allocation3 + $0x178] sm:$0xff]
        %1903 = vmatprep.subr.mxu0 0.0
        %1904 = vmatpush1.msra.mxu0 0.0
        %1905 = vmatprep.subr.mxu0 0.0
        %1906 = vmatpush1.msra.mxu0 0.0
        %1907 = vmatprep.subr.mxu0 0.0
        %1908 = vmatpush1.msra.mxu0 0.0
        %1909 = vmatprep.subr.mxu0 0.0
        %1910 = vmatpush1.msra.mxu0 0.0
        %1911 = vmatprep.subr.mxu0 %v1902
        %1912 = vmatpush1.msra.mxu0 %v1901
        %1913 = vmatprep.subr.mxu0 %v1900
        %1914 = vmatpush1.msra.mxu0 %v1899
        %1915 = vmatprep.subr.mxu0 %v1898
        %1916 = vmatpush1.msra.mxu0 %v1897
        %1917 = vmatprep.subr.mxu0 %v1896
        %1918 = vmatpush1.msra.mxu0 %v1895
        %1919 = vmatprep.subr.mxu0 %v1894
        %1920 = vmatpush1.msra.mxu0 %v1893
        %1921 = vmatprep.subr.mxu0 %v1892
        %1922 = vmatpush1.msra.mxu0 %v1891
        %1923 = vmatprep.subr.mxu0 %v1890
        %1924 = vmatpush1.msra.mxu0 %v1889
        %1925 = vmatprep.subr.mxu0 %v1888
        %1926 = vmatpush1.msra.mxu0 %v1887
        %1927 = vmatprep.subr.mxu0 %v1886
        %1928 = vmatpush1.msra.mxu0 %v1885
        %1929 = vmatprep.subr.mxu0 %v1884
        %1930 = vmatpush1.msra.mxu0 %v1883
        %1931 = vmatprep.subr.mxu0 %v1882
        %1932 = vmatpush1.msra.mxu0 %v1881
        %1933 = vmatprep.subr.mxu0 %v1880
        %1934 = vmatpush1.msra.mxu0 %v1879
        %1935 = vmatprep.subr.mxu0 0.0
        %1936 = vmatpush2.msra.mxu0 0.0
        %1937 = vmatprep.subr.mxu0 0.0
        %1938 = vmatpush2.msra.mxu0 0.0
        %1939 = vmatprep.subr.mxu0 0.0
        %1940 = vmatpush2.msra.mxu0 0.0
        %1941 = vmatprep.subr.mxu0 0.0
        %1942 = vmatpush2.msra.mxu0 0.0
        %1943 = vmatprep.subr.mxu0 0.0
        %1944 = vmatpush2.msra.mxu0 0.0
        %1945 = vmatprep.subr.mxu0 0.0
        %1946 = vmatpush2.msra.mxu0 0.0
        %1947 = vmatprep.subr.mxu0 0.0
        %1948 = vmatpush2.msra.mxu0 0.0
        %1949 = vmatprep.subr.mxu0 0.0
        %1950 = vmatpush2.msra.mxu0 0.0
        %1951 = vmatprep.subr.mxu0 0.0
        %1952 = vmatpush2.msra.mxu0 0.0
        %1953 = vmatprep.subr.mxu0 0.0
        %1954 = vmatpush2.msra.mxu0 0.0
        %1955 = vmatprep.subr.mxu0 0.0
        %1956 = vmatpush2.msra.mxu0 0.0
        %1957 = vmatprep.subr.mxu0 0.0
        %1958 = vmatpush2.msra.mxu0 0.0
        %1959 = vmatprep.subr.mxu0 0.0
        %1960 = vmatpush2.msra.mxu0 0.0
        %1961 = vmatprep.subr.mxu0 0.0
        %1962 = vmatpush2.msra.mxu0 0.0
        %1963 = vmatprep.subr.mxu0 0.0
        %1964 = vmatpush2.msra.mxu0 0.0
        %1965 = vmatprep.subr.mxu0 0.0
        %1966 = vmatpush2.msra.mxu0 0.0
        %1967 = vmatprep.mubr.f32.mxu0 0.0
        %1968 = vmatmul.mubr.f32.gmra.mxu0 %v1529
        %v1969 = vpop.f32.mrf.mxu0
        %v1970 = vadd.f32 %v1487, %v1969
        %v1971 = vpop.f32.mrf.mxu0
        %v1972 = vadd.f32 %v1487, %v1971
        %1973 = vmatprep.mubr.f32.mxu0 0.0
        %1974 = vmatmul.mubr.f32.gmra.mxu0 %v1532
        %v1975 = vpop.f32.mrf.mxu0
        %v1976 = vadd.f32 %v1492, %v1975
        %v1977 = vpop.f32.mrf.mxu0
        %v1978 = vadd.f32 %v1492, %v1977
        %1979 = vmatprep.mubr.f32.mxu0 0.0
        %1980 = vmatmul.mubr.f32.gmra.mxu0 %v1535
        %v1981 = vpop.f32.mrf.mxu0
        %v1982 = vadd.f32 %v1497, %v1981
        %v1983 = vpop.f32.mrf.mxu0
        %v1984 = vadd.f32 %v1497, %v1983
        %1985 = vmatprep.mubr.f32.mxu0 0.0
        %1986 = vmatmul.mubr.f32.gmra.mxu0 %v1538
        %v1987 = vpop.f32.mrf.mxu0
        %v1988 = vadd.f32 %v1502, %v1987
        %v1989 = vpop.f32.mrf.mxu0
        %v1990 = vadd.f32 %v1502, %v1989
        %1991 = vdwg.mxu0
        %1992 = vst [vmem:[%s242 + $0xc0] sm:$0xff] %v1970
        %1993 = vst [vmem:[%s242 + $0xc8] sm:$0xff] %v1972
        %1994 = vst [vmem:[%s242 + $0xd0] sm:$0xff] %v1976
        %1995 = vst [vmem:[%s242 + $0xd8] sm:$0xff] %v1978
        %1996 = vst [vmem:[%s242 + $0xe0] sm:$0xff] %v1982
        %1997 = vst [vmem:[%s242 + $0xe8] sm:$0xff] %v1984
        %1998 = vst [vmem:[%s242 + $0xf0] sm:$0xff] %v1988
        %1999 = vst [vmem:[%s242 + $0xf8] sm:$0xff] %v1990
        %v2000 = vld [vmem:[#allocation3 + $0x100] sm:$0xff]
        %v2001 = vld [vmem:[#allocation3 + $0x108] sm:$0xff]
        %v2002 = vld [vmem:[#allocation3 + $0x110] sm:$0xff]
        %v2003 = vld [vmem:[#allocation3 + $0x118] sm:$0xff]
        %v2004 = vld [vmem:[#allocation3 + $0x120] sm:$0xff]
        %v2005 = vld [vmem:[#allocation3 + $0x128] sm:$0xff]
        %v2006 = vld [vmem:[#allocation3 + $0x130] sm:$0xff]
        %v2007 = vld [vmem:[#allocation3 + $0x138] sm:$0xff]
        %v2008 = vld [vmem:[#allocation3 + $0x140] sm:$0xff]
        %v2009 = vld [vmem:[#allocation3 + $0x148] sm:$0xff]
        %v2010 = vld [vmem:[#allocation3 + $0x150] sm:$0xff]
        %v2011 = vld [vmem:[#allocation3 + $0x158] sm:$0xff]
        %v2012 = vld [vmem:[#allocation3 + $0x160] sm:$0xff]
        %v2013 = vld [vmem:[#allocation3 + $0x168] sm:$0xff]
        %v2014 = vld [vmem:[#allocation3 + $0x170] sm:$0xff]
        %v2015 = vld [vmem:[#allocation3 + $0x178] sm:$0xff]
        %v2016 = vld [vmem:[#allocation3 + $0x180] sm:$0xff]
        %v2017 = vld [vmem:[#allocation3 + $0x188] sm:$0xff]
        %v2018 = vld [vmem:[#allocation3 + $0x190] sm:$0xff]
        %v2019 = vld [vmem:[#allocation3 + $0x198] sm:$0xff]
        %v2020 = vld [vmem:[#allocation3 + $0x1a0] sm:$0xff]
        %v2021 = vld [vmem:[#allocation3 + $0x1a8] sm:$0xff]
        %v2022 = vld [vmem:[#allocation3 + $0x1b0] sm:$0xff]
        %v2023 = vld [vmem:[#allocation3 + $0x1b8] sm:$0xff]
        %2024 = vmatprep.subr.mxu0 0.0
        %2025 = vmatpush1.msra.mxu0 0.0
        %2026 = vmatprep.subr.mxu0 0.0
        %2027 = vmatpush1.msra.mxu0 0.0
        %2028 = vmatprep.subr.mxu0 0.0
        %2029 = vmatpush1.msra.mxu0 0.0
        %2030 = vmatprep.subr.mxu0 0.0
        %2031 = vmatpush1.msra.mxu0 0.0
        %2032 = vmatprep.subr.mxu0 %v2023
        %2033 = vmatpush1.msra.mxu0 %v2022
        %2034 = vmatprep.subr.mxu0 %v2021
        %2035 = vmatpush1.msra.mxu0 %v2020
        %2036 = vmatprep.subr.mxu0 %v2019
        %2037 = vmatpush1.msra.mxu0 %v2018
        %2038 = vmatprep.subr.mxu0 %v2017
        %2039 = vmatpush1.msra.mxu0 %v2016
        %2040 = vmatprep.subr.mxu0 %v2015
        %2041 = vmatpush1.msra.mxu0 %v2014
        %2042 = vmatprep.subr.mxu0 %v2013
        %2043 = vmatpush1.msra.mxu0 %v2012
        %2044 = vmatprep.subr.mxu0 %v2011
        %2045 = vmatpush1.msra.mxu0 %v2010
        %2046 = vmatprep.subr.mxu0 %v2009
        %2047 = vmatpush1.msra.mxu0 %v2008
        %2048 = vmatprep.subr.mxu0 %v2007
        %2049 = vmatpush1.msra.mxu0 %v2006
        %2050 = vmatprep.subr.mxu0 %v2005
        %2051 = vmatpush1.msra.mxu0 %v2004
        %2052 = vmatprep.subr.mxu0 %v2003
        %2053 = vmatpush1.msra.mxu0 %v2002
        %2054 = vmatprep.subr.mxu0 %v2001
        %2055 = vmatpush1.msra.mxu0 %v2000
        %2056 = vmatprep.subr.mxu0 0.0
        %2057 = vmatpush2.msra.mxu0 0.0
        %2058 = vmatprep.subr.mxu0 0.0
        %2059 = vmatpush2.msra.mxu0 0.0
        %2060 = vmatprep.subr.mxu0 0.0
        %2061 = vmatpush2.msra.mxu0 0.0
        %2062 = vmatprep.subr.mxu0 0.0
        %2063 = vmatpush2.msra.mxu0 0.0
        %2064 = vmatprep.subr.mxu0 0.0
        %2065 = vmatpush2.msra.mxu0 0.0
        %2066 = vmatprep.subr.mxu0 0.0
        %2067 = vmatpush2.msra.mxu0 0.0
        %2068 = vmatprep.subr.mxu0 0.0
        %2069 = vmatpush2.msra.mxu0 0.0
        %2070 = vmatprep.subr.mxu0 0.0
        %2071 = vmatpush2.msra.mxu0 0.0
        %2072 = vmatprep.subr.mxu0 0.0
        %2073 = vmatpush2.msra.mxu0 0.0
        %2074 = vmatprep.subr.mxu0 0.0
        %2075 = vmatpush2.msra.mxu0 0.0
        %2076 = vmatprep.subr.mxu0 0.0
        %2077 = vmatpush2.msra.mxu0 0.0
        %2078 = vmatprep.subr.mxu0 0.0
        %2079 = vmatpush2.msra.mxu0 0.0
        %2080 = vmatprep.subr.mxu0 0.0
        %2081 = vmatpush2.msra.mxu0 0.0
        %2082 = vmatprep.subr.mxu0 0.0
        %2083 = vmatpush2.msra.mxu0 0.0
        %2084 = vmatprep.subr.mxu0 0.0
        %2085 = vmatpush2.msra.mxu0 0.0
        %2086 = vmatprep.subr.mxu0 0.0
        %2087 = vmatpush2.msra.mxu0 0.0
        %2088 = vmatprep.mubr.f32.mxu0 0.0
        %2089 = vmatmul.mubr.f32.gmra.mxu0 %v1529
        %v2090 = vpop.f32.mrf.mxu0
        %v2091 = vadd.f32 %v1487, %v2090
        %v2092 = vpop.f32.mrf.mxu0
        %v2093 = vadd.f32 %v1487, %v2092
        %2094 = vmatprep.mubr.f32.mxu0 0.0
        %2095 = vmatmul.mubr.f32.gmra.mxu0 %v1532
        %v2096 = vpop.f32.mrf.mxu0
        %v2097 = vadd.f32 %v1492, %v2096
        %v2098 = vpop.f32.mrf.mxu0
        %v2099 = vadd.f32 %v1492, %v2098
        %2100 = vmatprep.mubr.f32.mxu0 0.0
        %2101 = vmatmul.mubr.f32.gmra.mxu0 %v1535
        %v2102 = vpop.f32.mrf.mxu0
        %v2103 = vadd.f32 %v1497, %v2102
        %v2104 = vpop.f32.mrf.mxu0
        %v2105 = vadd.f32 %v1497, %v2104
        %2106 = vmatprep.mubr.f32.mxu0 0.0
        %2107 = vmatmul.mubr.f32.gmra.mxu0 %v1538
        %v2108 = vpop.f32.mrf.mxu0
        %v2109 = vadd.f32 %v1502, %v2108
        %v2110 = vpop.f32.mrf.mxu0
        %v2111 = vadd.f32 %v1502, %v2110
        %2112 = vdwg.mxu0
        %2113 = vst [vmem:[%s242 + $0x100] sm:$0xff] %v2091
        %2114 = vst [vmem:[%s242 + $0x108] sm:$0xff] %v2093
        %2115 = vst [vmem:[%s242 + $0x110] sm:$0xff] %v2097
        %2116 = vst [vmem:[%s242 + $0x118] sm:$0xff] %v2099
        %2117 = vst [vmem:[%s242 + $0x120] sm:$0xff] %v2103
        %2118 = vst [vmem:[%s242 + $0x128] sm:$0xff] %v2105
        %2119 = vst [vmem:[%s242 + $0x130] sm:$0xff] %v2109
        %2120 = vst [vmem:[%s242 + $0x138] sm:$0xff] %v2111
        %v2121 = vld [vmem:[#allocation3 + $0x140] sm:$0xff]
        %v2122 = vld [vmem:[#allocation3 + $0x148] sm:$0xff]
        %v2123 = vld [vmem:[#allocation3 + $0x150] sm:$0xff]
        %v2124 = vld [vmem:[#allocation3 + $0x158] sm:$0xff]
        %v2125 = vld [vmem:[#allocation3 + $0x160] sm:$0xff]
        %v2126 = vld [vmem:[#allocation3 + $0x168] sm:$0xff]
        %v2127 = vld [vmem:[#allocation3 + $0x170] sm:$0xff]
        %v2128 = vld [vmem:[#allocation3 + $0x178] sm:$0xff]
        %v2129 = vld [vmem:[#allocation3 + $0x180] sm:$0xff]
        %v2130 = vld [vmem:[#allocation3 + $0x188] sm:$0xff]
        %v2131 = vld [vmem:[#allocation3 + $0x190] sm:$0xff]
        %v2132 = vld [vmem:[#allocation3 + $0x198] sm:$0xff]
        %v2133 = vld [vmem:[#allocation3 + $0x1a0] sm:$0xff]
        %v2134 = vld [vmem:[#allocation3 + $0x1a8] sm:$0xff]
        %v2135 = vld [vmem:[#allocation3 + $0x1b0] sm:$0xff]
        %v2136 = vld [vmem:[#allocation3 + $0x1b8] sm:$0xff]
        %v2137 = vld [vmem:[#allocation3 + $0x1c0] sm:$0xff]
        %v2138 = vld [vmem:[#allocation3 + $0x1c8] sm:$0xff]
        %v2139 = vld [vmem:[#allocation3 + $0x1d0] sm:$0xff]
        %v2140 = vld [vmem:[#allocation3 + $0x1d8] sm:$0xff]
        %v2141 = vld [vmem:[#allocation3 + $0x1e0] sm:$0xff]
        %v2142 = vld [vmem:[#allocation3 + $0x1e8] sm:$0xff]
        %v2143 = vld [vmem:[#allocation3 + $0x1f0] sm:$0xff]
        %v2144 = vld [vmem:[#allocation3 + $0x1f8] sm:$0xff]
        %2145 = vmatprep.subr.mxu0 0.0
        %2146 = vmatpush1.msra.mxu0 0.0
        %2147 = vmatprep.subr.mxu0 0.0
        %2148 = vmatpush1.msra.mxu0 0.0
        %2149 = vmatprep.subr.mxu0 0.0
        %2150 = vmatpush1.msra.mxu0 0.0
        %2151 = vmatprep.subr.mxu0 0.0
        %2152 = vmatpush1.msra.mxu0 0.0
        %2153 = vmatprep.subr.mxu0 %v2144
        %2154 = vmatpush1.msra.mxu0 %v2143
        %2155 = vmatprep.subr.mxu0 %v2142
        %2156 = vmatpush1.msra.mxu0 %v2141
        %2157 = vmatprep.subr.mxu0 %v2140
        %2158 = vmatpush1.msra.mxu0 %v2139
        %2159 = vmatprep.subr.mxu0 %v2138
        %2160 = vmatpush1.msra.mxu0 %v2137
        %2161 = vmatprep.subr.mxu0 %v2136
        %2162 = vmatpush1.msra.mxu0 %v2135
        %2163 = vmatprep.subr.mxu0 %v2134
        %2164 = vmatpush1.msra.mxu0 %v2133
        %2165 = vmatprep.subr.mxu0 %v2132
        %2166 = vmatpush1.msra.mxu0 %v2131
        %2167 = vmatprep.subr.mxu0 %v2130
        %2168 = vmatpush1.msra.mxu0 %v2129
        %2169 = vmatprep.subr.mxu0 %v2128
        %2170 = vmatpush1.msra.mxu0 %v2127
        %2171 = vmatprep.subr.mxu0 %v2126
        %2172 = vmatpush1.msra.mxu0 %v2125
        %2173 = vmatprep.subr.mxu0 %v2124
        %2174 = vmatpush1.msra.mxu0 %v2123
        %2175 = vmatprep.subr.mxu0 %v2122
        %2176 = vmatpush1.msra.mxu0 %v2121
        %2177 = vmatprep.subr.mxu0 0.0
        %2178 = vmatpush2.msra.mxu0 0.0
        %2179 = vmatprep.subr.mxu0 0.0
        %2180 = vmatpush2.msra.mxu0 0.0
        %2181 = vmatprep.subr.mxu0 0.0
        %2182 = vmatpush2.msra.mxu0 0.0
        %2183 = vmatprep.subr.mxu0 0.0
        %2184 = vmatpush2.msra.mxu0 0.0
        %2185 = vmatprep.subr.mxu0 0.0
        %2186 = vmatpush2.msra.mxu0 0.0
        %2187 = vmatprep.subr.mxu0 0.0
        %2188 = vmatpush2.msra.mxu0 0.0
        %2189 = vmatprep.subr.mxu0 0.0
        %2190 = vmatpush2.msra.mxu0 0.0
        %2191 = vmatprep.subr.mxu0 0.0
        %2192 = vmatpush2.msra.mxu0 0.0
        %2193 = vmatprep.subr.mxu0 0.0
        %2194 = vmatpush2.msra.mxu0 0.0
        %2195 = vmatprep.subr.mxu0 0.0
        %2196 = vmatpush2.msra.mxu0 0.0
        %2197 = vmatprep.subr.mxu0 0.0
        %2198 = vmatpush2.msra.mxu0 0.0
        %2199 = vmatprep.subr.mxu0 0.0
        %2200 = vmatpush2.msra.mxu0 0.0
        %2201 = vmatprep.subr.mxu0 0.0
        %2202 = vmatpush2.msra.mxu0 0.0
        %2203 = vmatprep.subr.mxu0 0.0
        %2204 = vmatpush2.msra.mxu0 0.0
        %2205 = vmatprep.subr.mxu0 0.0
        %2206 = vmatpush2.msra.mxu0 0.0
        %2207 = vmatprep.subr.mxu0 0.0
        %2208 = vmatpush2.msra.mxu0 0.0
        %2209 = vmatprep.mubr.f32.mxu0 0.0
        %2210 = vmatmul.mubr.f32.gmra.mxu0 %v1529
        %v2211 = vpop.f32.mrf.mxu0
        %v2212 = vadd.f32 %v1487, %v2211
        %v2213 = vpop.f32.mrf.mxu0
        %v2214 = vadd.f32 %v1487, %v2213
        %2215 = vmatprep.mubr.f32.mxu0 0.0
        %2216 = vmatmul.mubr.f32.gmra.mxu0 %v1532
        %v2217 = vpop.f32.mrf.mxu0
        %v2218 = vadd.f32 %v1492, %v2217
        %v2219 = vpop.f32.mrf.mxu0
        %v2220 = vadd.f32 %v1492, %v2219
        %2221 = vmatprep.mubr.f32.mxu0 0.0
        %2222 = vmatmul.mubr.f32.gmra.mxu0 %v1535
        %v2223 = vpop.f32.mrf.mxu0
        %v2224 = vadd.f32 %v1497, %v2223
        %v2225 = vpop.f32.mrf.mxu0
        %v2226 = vadd.f32 %v1497, %v2225
        %2227 = vmatprep.mubr.f32.mxu0 0.0
        %2228 = vmatmul.mubr.f32.gmra.mxu0 %v1538
        %v2229 = vpop.f32.mrf.mxu0
        %v2230 = vadd.f32 %v1502, %v2229
        %v2231 = vpop.f32.mrf.mxu0
        %v2232 = vadd.f32 %v1502, %v2231
        %2233 = vdwg.mxu0
        %2234 = vst [vmem:[%s242 + $0x140] sm:$0xff] %v2212
        %2235 = vst [vmem:[%s242 + $0x148] sm:$0xff] %v2214
        %2236 = vst [vmem:[%s242 + $0x150] sm:$0xff] %v2218
        %2237 = vst [vmem:[%s242 + $0x158] sm:$0xff] %v2220
        %2238 = vst [vmem:[%s242 + $0x160] sm:$0xff] %v2224
        %2239 = vst [vmem:[%s242 + $0x168] sm:$0xff] %v2226
        %2240 = vst [vmem:[%s242 + $0x170] sm:$0xff] %v2230
        %2241 = vst [vmem:[%s242 + $0x178] sm:$0xff] %v2232
        %v2242 = vld [vmem:[#allocation3 + $0x180] sm:$0xff]
        %v2243 = vld [vmem:[#allocation3 + $0x188] sm:$0xff]
        %v2244 = vld [vmem:[#allocation3 + $0x190] sm:$0xff]
        %v2245 = vld [vmem:[#allocation3 + $0x198] sm:$0xff]
        %v2246 = vld [vmem:[#allocation3 + $0x1a0] sm:$0xff]
        %v2247 = vld [vmem:[#allocation3 + $0x1a8] sm:$0xff]
        %v2248 = vld [vmem:[#allocation3 + $0x1b0] sm:$0xff]
        %v2249 = vld [vmem:[#allocation3 + $0x1b8] sm:$0xff]
        %v2250 = vld [vmem:[#allocation3 + $0x1c0] sm:$0xff]
        %v2251 = vld [vmem:[#allocation3 + $0x1c8] sm:$0xff]
        %v2252 = vld [vmem:[#allocation3 + $0x1d0] sm:$0xff]
        %v2253 = vld [vmem:[#allocation3 + $0x1d8] sm:$0xff]
        %v2254 = vld [vmem:[#allocation3 + $0x1e0] sm:$0xff]
        %v2255 = vld [vmem:[#allocation3 + $0x1e8] sm:$0xff]
        %v2256 = vld [vmem:[#allocation3 + $0x1f0] sm:$0xff]
        %v2257 = vld [vmem:[#allocation3 + $0x1f8] sm:$0xff]
        %v2258 = vld [vmem:[#allocation3 + $0x200] sm:$0xff]
        %v2259 = vld [vmem:[#allocation3 + $0x208] sm:$0xff]
        %v2260 = vld [vmem:[#allocation3 + $0x210] sm:$0xff]
        %v2261 = vld [vmem:[#allocation3 + $0x218] sm:$0xff]
        %v2262 = vld [vmem:[#allocation3 + $0x220] sm:$0xff]
        %v2263 = vld [vmem:[#allocation3 + $0x228] sm:$0xff]
        %v2264 = vld [vmem:[#allocation3 + $0x230] sm:$0xff]
        %v2265 = vld [vmem:[#allocation3 + $0x238] sm:$0xff]
        %2266 = vmatprep.subr.mxu0 0.0
        %2267 = vmatpush1.msra.mxu0 0.0
        %2268 = vmatprep.subr.mxu0 0.0
        %2269 = vmatpush1.msra.mxu0 0.0
        %2270 = vmatprep.subr.mxu0 0.0
        %2271 = vmatpush1.msra.mxu0 0.0
        %2272 = vmatprep.subr.mxu0 0.0
        %2273 = vmatpush1.msra.mxu0 0.0
        %2274 = vmatprep.subr.mxu0 %v2265
        %2275 = vmatpush1.msra.mxu0 %v2264
        %2276 = vmatprep.subr.mxu0 %v2263
        %2277 = vmatpush1.msra.mxu0 %v2262
        %2278 = vmatprep.subr.mxu0 %v2261
        %2279 = vmatpush1.msra.mxu0 %v2260
        %2280 = vmatprep.subr.mxu0 %v2259
        %2281 = vmatpush1.msra.mxu0 %v2258
        %2282 = vmatprep.subr.mxu0 %v2257
        %2283 = vmatpush1.msra.mxu0 %v2256
        %2284 = vmatprep.subr.mxu0 %v2255
        %2285 = vmatpush1.msra.mxu0 %v2254
        %2286 = vmatprep.subr.mxu0 %v2253
        %2287 = vmatpush1.msra.mxu0 %v2252
        %2288 = vmatprep.subr.mxu0 %v2251
        %2289 = vmatpush1.msra.mxu0 %v2250
        %2290 = vmatprep.subr.mxu0 %v2249
        %2291 = vmatpush1.msra.mxu0 %v2248
        %2292 = vmatprep.subr.mxu0 %v2247
        %2293 = vmatpush1.msra.mxu0 %v2246
        %2294 = vmatprep.subr.mxu0 %v2245
        %2295 = vmatpush1.msra.mxu0 %v2244
        %2296 = vmatprep.subr.mxu0 %v2243
        %2297 = vmatpush1.msra.mxu0 %v2242
        %2298 = vmatprep.subr.mxu0 0.0
        %2299 = vmatpush2.msra.mxu0 0.0
        %2300 = vmatprep.subr.mxu0 0.0
        %2301 = vmatpush2.msra.mxu0 0.0
        %2302 = vmatprep.subr.mxu0 0.0
        %2303 = vmatpush2.msra.mxu0 0.0
        %2304 = vmatprep.subr.mxu0 0.0
        %2305 = vmatpush2.msra.mxu0 0.0
        %2306 = vmatprep.subr.mxu0 0.0
        %2307 = vmatpush2.msra.mxu0 0.0
        %2308 = vmatprep.subr.mxu0 0.0
        %2309 = vmatpush2.msra.mxu0 0.0
        %2310 = vmatprep.subr.mxu0 0.0
        %2311 = vmatpush2.msra.mxu0 0.0
        %2312 = vmatprep.subr.mxu0 0.0
        %2313 = vmatpush2.msra.mxu0 0.0
        %2314 = vmatprep.subr.mxu0 0.0
        %2315 = vmatpush2.msra.mxu0 0.0
        %2316 = vmatprep.subr.mxu0 0.0
        %2317 = vmatpush2.msra.mxu0 0.0
        %2318 = vmatprep.subr.mxu0 0.0
        %2319 = vmatpush2.msra.mxu0 0.0
        %2320 = vmatprep.subr.mxu0 0.0
        %2321 = vmatpush2.msra.mxu0 0.0
        %2322 = vmatprep.subr.mxu0 0.0
        %2323 = vmatpush2.msra.mxu0 0.0
        %2324 = vmatprep.subr.mxu0 0.0
        %2325 = vmatpush2.msra.mxu0 0.0
        %2326 = vmatprep.subr.mxu0 0.0
        %2327 = vmatpush2.msra.mxu0 0.0
        %2328 = vmatprep.subr.mxu0 0.0
        %2329 = vmatpush2.msra.mxu0 0.0
        %2330 = vmatprep.mubr.f32.mxu0 0.0
        %2331 = vmatmul.mubr.f32.gmra.mxu0 %v1529
        %v2332 = vpop.f32.mrf.mxu0
        %v2333 = vadd.f32 %v1487, %v2332
        %v2334 = vpop.f32.mrf.mxu0
        %v2335 = vadd.f32 %v1487, %v2334
        %2336 = vmatprep.mubr.f32.mxu0 0.0
        %2337 = vmatmul.mubr.f32.gmra.mxu0 %v1532
        %v2338 = vpop.f32.mrf.mxu0
        %v2339 = vadd.f32 %v1492, %v2338
        %v2340 = vpop.f32.mrf.mxu0
        %v2341 = vadd.f32 %v1492, %v2340
        %2342 = vmatprep.mubr.f32.mxu0 0.0
        %2343 = vmatmul.mubr.f32.gmra.mxu0 %v1535
        %v2344 = vpop.f32.mrf.mxu0
        %v2345 = vadd.f32 %v1497, %v2344
        %v2346 = vpop.f32.mrf.mxu0
        %v2347 = vadd.f32 %v1497, %v2346
        %2348 = vmatprep.mubr.f32.mxu0 0.0
        %2349 = vmatmul.mubr.f32.gmra.mxu0 %v1538
        %v2350 = vpop.f32.mrf.mxu0
        %v2351 = vadd.f32 %v1502, %v2350
        %v2352 = vpop.f32.mrf.mxu0
        %v2353 = vadd.f32 %v1502, %v2352
        %2354 = vdwg.mxu0
        %2355 = vst [vmem:[%s242 + $0x180] sm:$0xff] %v2333
        %2356 = vst [vmem:[%s242 + $0x188] sm:$0xff] %v2335
        %2357 = vst [vmem:[%s242 + $0x190] sm:$0xff] %v2339
        %2358 = vst [vmem:[%s242 + $0x198] sm:$0xff] %v2341
        %2359 = vst [vmem:[%s242 + $0x1a0] sm:$0xff] %v2345
        %2360 = vst [vmem:[%s242 + $0x1a8] sm:$0xff] %v2347
        %2361 = vst [vmem:[%s242 + $0x1b0] sm:$0xff] %v2351
        %2362 = vst [vmem:[%s242 + $0x1b8] sm:$0xff] %v2353
        %v2363 = vld [vmem:[#allocation3 + $0x1c0] sm:$0xff]
        %v2364 = vld [vmem:[#allocation3 + $0x1c8] sm:$0xff]
        %v2365 = vld [vmem:[#allocation3 + $0x1d0] sm:$0xff]
        %v2366 = vld [vmem:[#allocation3 + $0x1d8] sm:$0xff]
        %v2367 = vld [vmem:[#allocation3 + $0x1e0] sm:$0xff]
        %v2368 = vld [vmem:[#allocation3 + $0x1e8] sm:$0xff]
        %v2369 = vld [vmem:[#allocation3 + $0x1f0] sm:$0xff]
        %v2370 = vld [vmem:[#allocation3 + $0x1f8] sm:$0xff]
        %v2371 = vld [vmem:[#allocation3 + $0x200] sm:$0xff]
        %v2372 = vld [vmem:[#allocation3 + $0x208] sm:$0xff]
        %v2373 = vld [vmem:[#allocation3 + $0x210] sm:$0xff]
        %v2374 = vld [vmem:[#allocation3 + $0x218] sm:$0xff]
        %v2375 = vld [vmem:[#allocation3 + $0x220] sm:$0xff]
        %v2376 = vld [vmem:[#allocation3 + $0x228] sm:$0xff]
        %v2377 = vld [vmem:[#allocation3 + $0x230] sm:$0xff]
        %v2378 = vld [vmem:[#allocation3 + $0x238] sm:$0xff]
        %v2379 = vld [vmem:[#allocation3 + $0x240] sm:$0xff]
        %v2380 = vld [vmem:[#allocation3 + $0x248] sm:$0xff]
        %v2381 = vld [vmem:[#allocation3 + $0x250] sm:$0xff]
        %v2382 = vld [vmem:[#allocation3 + $0x258] sm:$0xff]
        %v2383 = vld [vmem:[#allocation3 + $0x260] sm:$0xff]
        %v2384 = vld [vmem:[#allocation3 + $0x268] sm:$0xff]
        %v2385 = vld [vmem:[#allocation3 + $0x270] sm:$0xff]
        %v2386 = vld [vmem:[#allocation3 + $0x278] sm:$0xff]
        %2387 = vmatprep.subr.mxu0 0.0
        %2388 = vmatpush1.msra.mxu0 0.0
        %2389 = vmatprep.subr.mxu0 0.0
        %2390 = vmatpush1.msra.mxu0 0.0
        %2391 = vmatprep.subr.mxu0 0.0
        %2392 = vmatpush1.msra.mxu0 0.0
        %2393 = vmatprep.subr.mxu0 0.0
        %2394 = vmatpush1.msra.mxu0 0.0
        %2395 = vmatprep.subr.mxu0 %v2386
        %2396 = vmatpush1.msra.mxu0 %v2385
        %2397 = vmatprep.subr.mxu0 %v2384
        %2398 = vmatpush1.msra.mxu0 %v2383
        %2399 = vmatprep.subr.mxu0 %v2382
        %2400 = vmatpush1.msra.mxu0 %v2381
        %2401 = vmatprep.subr.mxu0 %v2380
        %2402 = vmatpush1.msra.mxu0 %v2379
        %2403 = vmatprep.subr.mxu0 %v2378
        %2404 = vmatpush1.msra.mxu0 %v2377
        %2405 = vmatprep.subr.mxu0 %v2376
        %2406 = vmatpush1.msra.mxu0 %v2375
        %2407 = vmatprep.subr.mxu0 %v2374
        %2408 = vmatpush1.msra.mxu0 %v2373
        %2409 = vmatprep.subr.mxu0 %v2372
        %2410 = vmatpush1.msra.mxu0 %v2371
        %2411 = vmatprep.subr.mxu0 %v2370
        %2412 = vmatpush1.msra.mxu0 %v2369
        %2413 = vmatprep.subr.mxu0 %v2368
        %2414 = vmatpush1.msra.mxu0 %v2367
        %2415 = vmatprep.subr.mxu0 %v2366
        %2416 = vmatpush1.msra.mxu0 %v2365
        %2417 = vmatprep.subr.mxu0 %v2364
        %2418 = vmatpush1.msra.mxu0 %v2363
        %2419 = vmatprep.subr.mxu0 0.0
        %2420 = vmatpush2.msra.mxu0 0.0
        %2421 = vmatprep.subr.mxu0 0.0
        %2422 = vmatpush2.msra.mxu0 0.0
        %2423 = vmatprep.subr.mxu0 0.0
        %2424 = vmatpush2.msra.mxu0 0.0
        %2425 = vmatprep.subr.mxu0 0.0
        %2426 = vmatpush2.msra.mxu0 0.0
        %2427 = vmatprep.subr.mxu0 0.0
        %2428 = vmatpush2.msra.mxu0 0.0
        %2429 = vmatprep.subr.mxu0 0.0
        %2430 = vmatpush2.msra.mxu0 0.0
        %2431 = vmatprep.subr.mxu0 0.0
        %2432 = vmatpush2.msra.mxu0 0.0
        %2433 = vmatprep.subr.mxu0 0.0
        %2434 = vmatpush2.msra.mxu0 0.0
        %2435 = vmatprep.subr.mxu0 0.0
        %2436 = vmatpush2.msra.mxu0 0.0
        %2437 = vmatprep.subr.mxu0 0.0
        %2438 = vmatpush2.msra.mxu0 0.0
        %2439 = vmatprep.subr.mxu0 0.0
        %2440 = vmatpush2.msra.mxu0 0.0
        %2441 = vmatprep.subr.mxu0 0.0
        %2442 = vmatpush2.msra.mxu0 0.0
        %2443 = vmatprep.subr.mxu0 0.0
        %2444 = vmatpush2.msra.mxu0 0.0
        %2445 = vmatprep.subr.mxu0 0.0
        %2446 = vmatpush2.msra.mxu0 0.0
        %2447 = vmatprep.subr.mxu0 0.0
        %2448 = vmatpush2.msra.mxu0 0.0
        %2449 = vmatprep.subr.mxu0 0.0
        %2450 = vmatpush2.msra.mxu0 0.0
        %2451 = vmatprep.mubr.f32.mxu0 0.0
        %2452 = vmatmul.mubr.f32.gmra.mxu0 %v1529
        %v2453 = vpop.f32.mrf.mxu0
        %v2454 = vadd.f32 %v1487, %v2453
        %v2455 = vpop.f32.mrf.mxu0
        %v2456 = vadd.f32 %v1487, %v2455
        %2457 = vmatprep.mubr.f32.mxu0 0.0
        %2458 = vmatmul.mubr.f32.gmra.mxu0 %v1532
        %v2459 = vpop.f32.mrf.mxu0
        %v2460 = vadd.f32 %v1492, %v2459
        %v2461 = vpop.f32.mrf.mxu0
        %v2462 = vadd.f32 %v1492, %v2461
        %2463 = vmatprep.mubr.f32.mxu0 0.0
        %2464 = vmatmul.mubr.f32.gmra.mxu0 %v1535
        %v2465 = vpop.f32.mrf.mxu0
        %v2466 = vadd.f32 %v1497, %v2465
        %v2467 = vpop.f32.mrf.mxu0
        %v2468 = vadd.f32 %v1497, %v2467
        %2469 = vmatprep.mubr.f32.mxu0 0.0
        %2470 = vmatmul.mubr.f32.gmra.mxu0 %v1538
        %v2471 = vpop.f32.mrf.mxu0
        %v2472 = vadd.f32 %v1502, %v2471
        %v2473 = vpop.f32.mrf.mxu0
        %v2474 = vadd.f32 %v1502, %v2473
        %2475 = vdwg.mxu0
        %2476 = vst [vmem:[%s242 + $0x1c0] sm:$0xff] %v2454
        %2477 = vst [vmem:[%s242 + $0x1c8] sm:$0xff] %v2456
        %2478 = vst [vmem:[%s242 + $0x1d0] sm:$0xff] %v2460
        %2479 = vst [vmem:[%s242 + $0x1d8] sm:$0xff] %v2462
        %2480 = vst [vmem:[%s242 + $0x1e0] sm:$0xff] %v2466
        %2481 = vst [vmem:[%s242 + $0x1e8] sm:$0xff] %v2468
        %2482 = vst [vmem:[%s242 + $0x1f0] sm:$0xff] %v2472
        %2483 = vst [vmem:[%s242 + $0x1f8] sm:$0xff] %v2474
        %s2484 = sand.u32 %s140, 1
        %s2485 = scalar_lea.sflag [#allocation6], %s2484
        %s2486 = sand.u32 %s140, 1
        %s2487 = smul.addr %s2486, 512
        %s2488 = scalar_lea.vmem [#allocation7], %s2487
        // Predicated region
        $region45: #{tpu_custom_call.1} parent=39 // pred_check
          %p2489 = pneg %p150
        $region46: #{tpu_custom_call.1} parent=39 // pred_check_branch
          %2491 = sbr.rel (%p2489) target = $region48
        $region47: #{tpu_custom_call.1} parent=39 // pred_region
          %s2493 = ssub.s32 8192, 8192
          %2494 = vsyncadd %s2485, %s2493
          %s2495 = smul.addr %s22, 64
          %s2496 = smul.addr %s2495, 128
          %s2497 = scalar_lea.hbm %s5, %s2496
          %s2498 = sshll.u32 %s2488, 4
          %s2499 = int_to_ptr.vmem [resolvable:$true] %s2498
          %2504 = dma.vmem_to_hbm [thread:$0]  %s2499, 8192, %s2497, %s2485, 256, 256, 16
        $region48: #{tpu_custom_call.1} parent=39 // pred_fallthru
          _
      $region40: #{tpu_custom_call.1} parent=5 // pred_fallthru
        _
      %p2505 = scmp.le.s32.totalorder 2, %s17
      // Predicated region
      $region49: #{tpu_custom_call.1} parent=5 // pred_check
        %p2506 = pneg %p2505
      $region50: #{tpu_custom_call.1} parent=5 // pred_check_branch
        %2508 = sbr.rel (%p2506) target = $region52
      $region51: #{tpu_custom_call.1} parent=5 // pred_region
        %s2509 = ssub.s32 %s17, 2
        // Predicated region
        $region53: #{tpu_custom_call.1} parent=51 // pred_check
          %p2510 = pneg %p156
        $region54: #{tpu_custom_call.1} parent=51 // pred_check_branch
          %2512 = sbr.rel (%p2510) target = $region56
        $region55: #{tpu_custom_call.1} parent=51 // pred_region
          %s2513 = sand.u32 %s141, 1
          %s2514 = scalar_lea.sflag [#allocation6], %s2513
          %s2515 = sand.u32 %s141, 1
          %s2516 = smul.addr %s2515, 512
          %s2517 = scalar_lea.vmem [#allocation7], %s2516
          %2518 = dma.done %s2514, 8192
        $region56: #{tpu_custom_call.1} parent=51 // pred_fallthru
          _
      $region52: #{tpu_custom_call.1} parent=5 // pred_fallthru
        _
    $region6: #{tpu_custom_call.1} parent=1 // loop_footer
      %s21 = sadd.s32 1, %s17
    $region7: #{tpu_custom_call.1} parent=1 // loop_footer_branch
      %16 = sbr.rel target = $region3
    $region8: #{tpu_custom_call.1} parent=1 // loop_exit
      _
    %2519 = vsyncpa [#allocation5], 1
    %s2520 = scalar_lea.sflag [#allocation5], 1
    %2521 = vsyncpa %s2520, 1
    %2522 = vsyncpa [#allocation6], 1
    %s2523 = scalar_lea.sflag [#allocation6], 1
    %2524 = vsyncpa %s2523, 1

</llo_original>
